<compile_context>
chip_gen: v7x
topology: tpu7x:2x2x1
jax: 0.10.0
libtpu: 0.0.40
codegen_flags: <defaults>
</compile_context>

<pallas_src>
import numpy as np

import jax
import jax.numpy as jnp
from jax import lax
from jax.experimental import pallas as pl
from jax.experimental.pallas import tpu as pltpu

KH = KW = 5     # conv_kernel_size
PAD = 2         # padding
POOL = 2        # pool_kernel_size


# ----------------------------------------------------------------------------
# Single fused kernel: pad + conv1 + pool + pad + conv2 + pool + flatten + FCs.
# ----------------------------------------------------------------------------
def build_fused_forward(N, H, W, conv_channels, linear_shapes, linear_relu,
                        out_dtype=jnp.float32, matmul_dtype=jnp.float32):
    n_conv = len(conv_channels) - 1
    n_lin = len(linear_shapes) - 1
    assert len(linear_relu) == n_lin

    # Per-conv-layer static dims (Hin, Win, Cin, Cout); stride 1, same padding.
    conv_dims = []
    h, w = H, W
    for i in range(n_conv):
        conv_dims.append((h, w, conv_channels[i], conv_channels[i + 1]))
        h //= POOL
        w //= POOL
    Hf, Wf, Cf = h, w, conv_channels[-1]
    assert linear_shapes[0] == Hf * Wf * Cf, (linear_shapes[0], Hf, Wf, Cf)

    # Small VMEM scratch per conv layer:
    #   xpad : row-padded input slab  (N, H+2*PAD, W*Cin)   lane-dense, no W halo
    #   wpool: W-pooled activations   (N, H, (W//2)*Cout)   for strided H-pool
    scratch_shapes = []
    for (hh, ww, cin, cout) in conv_dims:
        scratch_shapes += [
            pltpu.VMEM((N, hh + 2 * PAD, ww * cin), jnp.float32),
            pltpu.VMEM((N, hh, (ww // POOL) * cout), jnp.float32),
        ]

    n_in = 1 + 2 * n_conv + 2 * n_lin
    hi_prec = lax.Precision.HIGHEST

    def kernel(*refs):
        x_ref = refs[0]
        conv_p = [(refs[1 + 2 * i], refs[2 + 2 * i]) for i in range(n_conv)]
        loff = 1 + 2 * n_conv
        lin_p = [(refs[loff + 2 * i], refs[loff + 1 + 2 * i])
                 for i in range(n_lin)]
        o_ref = refs[loff + 2 * n_lin]
        soff = loff + 2 * n_lin + 1

        cur = x_ref[...].astype(jnp.float32)      # (N, H, W*C0) lane-dense slab
        flat = None
        for li, (hh, ww, cin, cout) in enumerate(conv_dims):
            xpad = refs[soff + 2 * li]
            wpool = refs[soff + 2 * li + 1]
            t_ref, b_ref = conv_p[li]
            wc = ww * cin
            half = (ww // POOL) * cout

            # ---- row-pad: zero ONLY the top/bottom PAD-row halo ------------
            zrow = jnp.zeros((N, PAD, wc), jnp.float32)
            xpad[:, 0:PAD, :] = zrow
            xpad[:, PAD + hh:PAD + hh + PAD, :] = zrow
            xpad[:, PAD:PAD + hh, :] = cur

            # ---- im2col: KH wide sublane-shifted slabs, lane-concat --------
            a = jnp.concatenate(
                [xpad[:, kh:kh + hh, :] for kh in range(KH)], axis=2)
            a = a.reshape(N * hh, KH * wc).astype(matmul_dtype)

            # ---- conv == ONE matmul vs block-Toeplitz weight ---------------
            #      (kw selection + W zero padding + pool column permutation
            #       folded into the packed weight); bias + ReLU fused.
            y = jnp.dot(a, t_ref[...], preferred_element_type=jnp.float32,
                        precision=hi_prec)
            y = jnp.maximum(y + b_ref[...], 0.0)   # (N*hh, ww*cout) lane-dense

            # ---- W-pool: columns packed (w%2, w//2, c) -> half-vs-half max -
            wpool[...] = jnp.maximum(y[:, :half], y[:, half:]).reshape(
                N, hh, half)

            if li + 1 < n_conv:
                # ---- H-pool: strided sublane reads -> next layer's slab ----
                cur = jnp.maximum(wpool[:, pl.ds(0, hh // POOL, POOL), :],
                                  wpool[:, pl.ds(1, hh // POOL, POOL), :])
            else:
                # ---- last layer: fuse H-pool with the (h, w, c) flatten ----
                #      (fc1 rows were pre-permuted to match at pack time)
                flat = jnp.concatenate(
                    [jnp.maximum(wpool[:, POOL * hp, :],
                                 wpool[:, POOL * hp + 1, :])
                     for hp in range(hh // POOL)], axis=-1)   # (N, Hf*Wf*Cf)

        cur = flat
        for li in range(n_lin):
            w_ref, b_ref = lin_p[li]
            cur = jnp.dot(cur.astype(matmul_dtype), w_ref[...],
                          preferred_element_type=jnp.float32,
                          precision=hi_prec) + b_ref[...]
            if linear_relu[li]:
                cur = jnp.maximum(cur, 0.0)
        o_ref[...] = cur.astype(o_ref.dtype)

    # Advisory cost hints for the XLA scheduler.
    wbytes = np.dtype(matmul_dtype).itemsize
    flops = 0
    bytes_accessed = 4 * (N * H * W * conv_channels[0] + N * linear_shapes[-1])
    for (hh, ww, cin, cout) in conv_dims:
        flops += 2 * (N * hh) * (KH * ww * cin) * (ww * cout)
        bytes_accessed += wbytes * (KH * ww * cin) * (ww * cout) + 4 * ww * cout
    for fin, fout in zip(linear_shapes[:-1], linear_shapes[1:]):
        flops += 2 * N * fin * fout
        bytes_accessed += wbytes * fin * fout + 4 * fout

    return pl.pallas_call(
        kernel,
        out_shape=jax.ShapeDtypeStruct((N, linear_shapes[-1]), out_dtype),
        in_specs=[pl.BlockSpec(memory_space=pltpu.MemorySpace.VMEM)] * n_in,
        out_specs=pl.BlockSpec(memory_space=pltpu.MemorySpace.VMEM),
        scratch_shapes=scratch_shapes,
        cost_estimate=pl.CostEstimate(flops=flops, transcendentals=0,
                                      bytes_accessed=bytes_accessed),
    )


# ----------------------------------------------------------------------------
# One-time parameter packing (PyTorch layouts -> kernel layouts).
# ----------------------------------------------------------------------------
def _conv_toeplitz(w_oihw, b, w_in):
    """(Cout,Cin,KH,KW) conv weight -> block-Toeplitz (KH*W*Cin, W*Cout) matrix.

    Rows   : (kh, i_w, cin) -- matches the kernel's A = lane-concat of the KH
             sublane-shifted (N*H, W*Cin) slabs.  Out-of-range kw windows are
             simply absent -> implicit zero padding along W.
    Columns: (w%2, w//2, cout) -- pool-parity-major so the 2x W-max-pool is a
             contiguous half-vs-half lane max inside the kernel.
    """
    cout, cin, khn, kwn = w_oihw.shape
    assert khn == KH and kwn == KW
    half = (w_in // POOL) * cout
    t = np.zeros((KH * w_in * cin, w_in * cout), np.float32)
    for w_out in range(w_in):
        col0 = (w_out % POOL) * half + (w_out // POOL) * cout
        for kw in range(KW):
            i_w = w_out + kw - PAD
            if i_w < 0 or i_w >= w_in:
                continue
            for kh in range(KH):
                row0 = (kh * w_in + i_w) * cin
                t[row0:row0 + cin, col0:col0 + cout] = w_oihw[:, :, kh, kw].T
    bias = np.tile(np.asarray(b, np.float32), w_in).reshape(1, w_in * cout)
    return t, bias


def pack_params(torch_params, conv_channels, H, W, matmul_dtype=jnp.float32):
    n_conv = len(conv_channels) - 1
    Hf, Wf = H // (POOL ** n_conv), W // (POOL ** n_conv)
    Cf = conv_channels[-1]
    packed = []
    w_in = W
    for wgt, b in torch_params["convs"]:
        t, bias = _conv_toeplitz(np.asarray(wgt), np.asarray(b), w_in)
        packed += [jnp.asarray(t, matmul_dtype), jnp.asarray(bias, jnp.float32)]
        w_in //= POOL
    for i, (wgt, b, _) in enumerate(torch_params["linears"]):
        wt = np.asarray(wgt).T                                  # (Fin, Fout)
        if i == 0:
            # Fold NCHW flatten into fc1: reorder rows (c, h, w) -> (h, w, c).
            wt = wt.reshape(Cf, Hf, Wf, -1).transpose(1, 2, 0, 3)
            wt = wt.reshape(Hf * Wf * Cf, -1)
        packed += [jnp.asarray(wt, matmul_dtype),
                   jnp.asarray(np.asarray(b, np.float32).reshape(1, -1))]
    return packed


# ----------------------------------------------------------------------------
# Pure-JAX reference (mirrors the PyTorch forward in eval mode).
# ----------------------------------------------------------------------------
def reference_forward(torch_params, x_nchw):
    x = x_nchw
    for w_oihw, b in torch_params["convs"]:
        x = lax.conv_general_dilated(
            x, w_oihw, (1, 1), ((PAD, PAD), (PAD, PAD)),
            dimension_numbers=("NCHW", "OIHW", "NCHW"),
            precision=lax.Precision.HIGHEST)
        x = jnp.maximum(x + b[None, :, None, None], 0.0)
        x = lax.reduce_window(x, -jnp.inf, lax.max,
                              (1, 1, POOL, POOL), (1, 1, POOL, POOL), "VALID")
    x = x.reshape(x.shape[0], -1)
    for w_oi, b, apply_relu in torch_params["linears"]:
        x = jnp.dot(x, w_oi.T, precision=lax.Precision.HIGHEST) + b
        if apply_relu:
            x = jnp.maximum(x, 0.0)
    return x


if __name__ == "__main__":
    # layer_cfg equivalent
    conv_channels = [4, 8, 16]                # channels: 4 -> 8 -> 16
    linear_shapes = [16 * 4 * 4, 64, 10]
    non_linears = [1, 0]                      # ReLU after first linear only
    # conv/linear dropouts: identity at inference (see TODO above)

    N, H, W = 2, 16, 16

    key = jax.random.PRNGKey(0)
    keys = iter(jax.random.split(key, 16))

    # PyTorch-style parameter shapes (Conv2d: (Cout,Cin,KH,KW); Linear: (out,in))
    torch_params = {"convs": [], "linears": []}
    for cin, cout in zip(conv_channels[:-1], conv_channels[1:]):
        w = 0.05 * jax.random.normal(next(keys), (cout, cin, KH, KW), jnp.float32)
        b = 0.05 * jax.random.normal(next(keys), (cout,), jnp.float32)
        torch_params["convs"].append((w, b))
    for fin, fout, nl in zip(linear_shapes[:-1], linear_shapes[1:], non_linears):
        w = 0.05 * jax.random.normal(next(keys), (fout, fin), jnp.float32)
        b = 0.05 * jax.random.normal(next(keys), (fout,), jnp.float32)
        torch_params["linears"].append((w, b, nl == 1))

    packed = pack_params(torch_params, conv_channels, H, W)
    fused = build_fused_forward(N, H, W, conv_channels, linear_shapes,
                                [nl == 1 for nl in non_linears])

    @jax.jit
    def cnn_forward(x_nchw, *params):
        n, c, h, w = x_nchw.shape
        # One-time layout plumbing: NCHW -> lane-dense (N, H, W*C) slab.
        x_slab = jnp.transpose(x_nchw, (0, 2, 3, 1)).reshape(n, h, w * c)
        return fused(x_slab, *params)

    # Deterministic input, NCHW as in the PyTorch module.
    x = jax.random.normal(jax.random.PRNGKey(0), (N, conv_channels[0], H, W),
                          jnp.float32)

    out = jax.block_until_ready(cnn_forward(x, *packed))
    ref = jax.block_until_ready(reference_forward(torch_params, x))

    assert out.shape == (N, linear_shapes[-1]), out.shape
    assert jnp.allclose(out, ref, rtol=1e-5, atol=1e-5), (
        f"max abs diff {jnp.max(jnp.abs(out - ref))}")
    print("KERNEL_OK")
</pallas_src>

<mosaic_0001>
module attributes {stable_mosaic.version = 11 : i64} {
  func.func @kernel(%arg0: memref<2x16x64xf32, #tpu.memory_space<vmem>>, %arg1: memref<320x128xf32, #tpu.memory_space<vmem>>, %arg2: memref<1x128xf32, #tpu.memory_space<vmem>>, %arg3: memref<320x128xf32, #tpu.memory_space<vmem>>, %arg4: memref<1x128xf32, #tpu.memory_space<vmem>>, %arg5: memref<256x64xf32, #tpu.memory_space<vmem>>, %arg6: memref<1x64xf32, #tpu.memory_space<vmem>>, %arg7: memref<64x10xf32, #tpu.memory_space<vmem>>, %arg8: memref<1x10xf32, #tpu.memory_space<vmem>>, %arg9: memref<2x10xf32, #tpu.memory_space<vmem>>, %arg10: memref<2x20x64xf32, #tpu.memory_space<vmem>>, %arg11: memref<2x16x64xf32, #tpu.memory_space<vmem>>, %arg12: memref<2x12x64xf32, #tpu.memory_space<vmem>>, %arg13: memref<2x8x64xf32, #tpu.memory_space<vmem>>) attributes {dimension_semantics = [], scalar_prefetch = 0 : i64, scratch_operands = 4 : i64, tpu.core_type = #tpu.core_type<tc>} {
    %c0 = arith.constant 0 : index
    %c0_0 = arith.constant 0 : index
    %c0_1 = arith.constant 0 : index
    %0 = vector.load %arg0[%c0, %c0_0, %c0_1] : memref<2x16x64xf32, #tpu.memory_space<vmem>>, vector<2x16x64xf32>
    %cst = arith.constant 0.000000e+00 : f32
    %1 = vector.broadcast %cst : f32 to vector<2x2x64xf32>
    %c0_2 = arith.constant 0 : index
    %c0_3 = arith.constant 0 : index
    %c0_4 = arith.constant 0 : index
    %2 = vector.load %arg10[%c0_2, %c0_3, %c0_4] : memref<2x20x64xf32, #tpu.memory_space<vmem>>, vector<2x2x64xf32>
    tpu.vector_store %arg10[%c0_2, %c0_3, %c0_4], %1 {strides = array<i32>} : memref<2x20x64xf32, #tpu.memory_space<vmem>>, vector<2x2x64xf32>,
    %c0_5 = arith.constant 0 : index
    %c18 = arith.constant 18 : index
    %c0_6 = arith.constant 0 : index
    %3 = vector.load %arg10[%c0_5, %c18, %c0_6] : memref<2x20x64xf32, #tpu.memory_space<vmem>>, vector<2x2x64xf32>
    tpu.vector_store %arg10[%c0_5, %c18, %c0_6], %1 {strides = array<i32>} : memref<2x20x64xf32, #tpu.memory_space<vmem>>, vector<2x2x64xf32>,
    %c0_7 = arith.constant 0 : index
    %c2 = arith.constant 2 : index
    %c0_8 = arith.constant 0 : index
    %4 = vector.load %arg10[%c0_7, %c2, %c0_8] : memref<2x20x64xf32, #tpu.memory_space<vmem>>, vector<2x16x64xf32>
    tpu.vector_store %arg10[%c0_7, %c2, %c0_8], %0 {strides = array<i32>} : memref<2x20x64xf32, #tpu.memory_space<vmem>>, vector<2x16x64xf32>,
    %c0_9 = arith.constant 0 : index
    %c0_10 = arith.constant 0 : index
    %c0_11 = arith.constant 0 : index
    %5 = vector.load %arg10[%c0_9, %c0_10, %c0_11] : memref<2x20x64xf32, #tpu.memory_space<vmem>>, vector<2x16x64xf32>
    %c0_12 = arith.constant 0 : index
    %c1 = arith.constant 1 : index
    %c0_13 = arith.constant 0 : index
    %6 = vector.load %arg10[%c0_12, %c1, %c0_13] : memref<2x20x64xf32, #tpu.memory_space<vmem>>, vector<2x16x64xf32>
    %c0_14 = arith.constant 0 : index
    %c2_15 = arith.constant 2 : index
    %c0_16 = arith.constant 0 : index
    %7 = vector.load %arg10[%c0_14, %c2_15, %c0_16] : memref<2x20x64xf32, #tpu.memory_space<vmem>>, vector<2x16x64xf32>
    %c0_17 = arith.constant 0 : index
    %c3 = arith.constant 3 : index
    %c0_18 = arith.constant 0 : index
    %8 = vector.load %arg10[%c0_17, %c3, %c0_18] : memref<2x20x64xf32, #tpu.memory_space<vmem>>, vector<2x16x64xf32>
    %c0_19 = arith.constant 0 : index
    %c4 = arith.constant 4 : index
    %c0_20 = arith.constant 0 : index
    %9 = vector.load %arg10[%c0_19, %c4, %c0_20] : memref<2x20x64xf32, #tpu.memory_space<vmem>>, vector<2x16x64xf32>
    %10 = tpu.concatenate %5, %6, %7, %8, %9 in 2 : vector<2x16x64xf32>, vector<2x16x64xf32>, vector<2x16x64xf32>, vector<2x16x64xf32>, vector<2x16x64xf32> -> vector<2x16x320xf32>
    %11 = vector.shape_cast %10 : vector<2x16x320xf32> to vector<32x320xf32>
    %c0_21 = arith.constant 0 : index
    %c0_22 = arith.constant 0 : index
    %12 = vector.load %arg1[%c0_21, %c0_22] : memref<320x128xf32, #tpu.memory_space<vmem>>, vector<320x128xf32>
    %cst_23 = arith.constant dense<0.000000e+00> : vector<32x128xf32>
    %13 = tpu.matmul %11, %12, %cst_23 {dimension_numbers = #tpu.dot_dimension_numbers<[1], [0], [0], [1], [0, 0, 1, 1], [], []>, precision = #tpu.contract_precision<fp32>} : vector<32x320xf32>, vector<320x128xf32>, vector<32x128xf32> -> vector<32x128xf32>
    %c0_24 = arith.constant 0 : index
    %c0_25 = arith.constant 0 : index
    %14 = vector.load %arg2[%c0_24, %c0_25] : memref<1x128xf32, #tpu.memory_space<vmem>>, vector<1x128xf32>
    %15 = vector.broadcast %14 : vector<1x128xf32> to vector<32x128xf32>
    %16 = arith.addf %13, %15 : vector<32x128xf32>
    %cst_26 = arith.constant 0.000000e+00 : f32
    %17 = vector.broadcast %cst_26 : f32 to vector<32x128xf32>
    %18 = arith.maximumf %16, %17 : vector<32x128xf32>
    %19 = vector.extract_strided_slice %18 {offsets = [0, 0], sizes = [32, 64], strides = [1, 1]} : vector<32x128xf32> to vector<32x64xf32>
    %20 = vector.extract_strided_slice %18 {offsets = [0, 64], sizes = [32, 64], strides = [1, 1]} : vector<32x128xf32> to vector<32x64xf32>
    %21 = arith.maximumf %19, %20 : vector<32x64xf32>
    %22 = vector.shape_cast %21 : vector<32x64xf32> to vector<2x16x64xf32>
    %c0_27 = arith.constant 0 : index
    %c0_28 = arith.constant 0 : index
    %c0_29 = arith.constant 0 : index
    %23 = vector.load %arg11[%c0_27, %c0_28, %c0_29] : memref<2x16x64xf32, #tpu.memory_space<vmem>>, vector<2x16x64xf32>
    tpu.vector_store %arg11[%c0_27, %c0_28, %c0_29], %22 {strides = array<i32>} : memref<2x16x64xf32, #tpu.memory_space<vmem>>, vector<2x16x64xf32>,
    %c0_30 = arith.constant 0 : index
    %c0_31 = arith.constant 0 : index
    %c0_32 = arith.constant 0 : index
    %24 = tpu.strided_load %arg11[%c0_30, %c0_31, %c0_32] {strides = array<i32: 1, 2, 1>} : memref<2x16x64xf32, #tpu.memory_space<vmem>>, vector<2x8x64xf32>
    %c0_33 = arith.constant 0 : index
    %c1_34 = arith.constant 1 : index
    %c0_35 = arith.constant 0 : index
    %25 = tpu.strided_load %arg11[%c0_33, %c1_34, %c0_35] {strides = array<i32: 1, 2, 1>} : memref<2x16x64xf32, #tpu.memory_space<vmem>>, vector<2x8x64xf32>
    %26 = arith.maximumf %24, %25 : vector<2x8x64xf32>
    %cst_36 = arith.constant 0.000000e+00 : f32
    %27 = vector.broadcast %cst_36 : f32 to vector<2x2x64xf32>
    %c0_37 = arith.constant 0 : index
    %c0_38 = arith.constant 0 : index
    %c0_39 = arith.constant 0 : index
    %28 = vector.load %arg12[%c0_37, %c0_38, %c0_39] : memref<2x12x64xf32, #tpu.memory_space<vmem>>, vector<2x2x64xf32>
    tpu.vector_store %arg12[%c0_37, %c0_38, %c0_39], %27 {strides = array<i32>} : memref<2x12x64xf32, #tpu.memory_space<vmem>>, vector<2x2x64xf32>,
    %c0_40 = arith.constant 0 : index
    %c10 = arith.constant 10 : index
    %c0_41 = arith.constant 0 : index
    %29 = vector.load %arg12[%c0_40, %c10, %c0_41] : memref<2x12x64xf32, #tpu.memory_space<vmem>>, vector<2x2x64xf32>
    tpu.vector_store %arg12[%c0_40, %c10, %c0_41], %27 {strides = array<i32>} : memref<2x12x64xf32, #tpu.memory_space<vmem>>, vector<2x2x64xf32>,
    %c0_42 = arith.constant 0 : index
    %c2_43 = arith.constant 2 : index
    %c0_44 = arith.constant 0 : index
    %30 = vector.load %arg12[%c0_42, %c2_43, %c0_44] : memref<2x12x64xf32, #tpu.memory_space<vmem>>, vector<2x8x64xf32>
    tpu.vector_store %arg12[%c0_42, %c2_43, %c0_44], %26 {strides = array<i32>} : memref<2x12x64xf32, #tpu.memory_space<vmem>>, vector<2x8x64xf32>,
    %c0_45 = arith.constant 0 : index
    %c0_46 = arith.constant 0 : index
    %c0_47 = arith.constant 0 : index
    %31 = vector.load %arg12[%c0_45, %c0_46, %c0_47] : memref<2x12x64xf32, #tpu.memory_space<vmem>>, vector<2x8x64xf32>
    %c0_48 = arith.constant 0 : index
    %c1_49 = arith.constant 1 : index
    %c0_50 = arith.constant 0 : index
    %32 = vector.load %arg12[%c0_48, %c1_49, %c0_50] : memref<2x12x64xf32, #tpu.memory_space<vmem>>, vector<2x8x64xf32>
    %c0_51 = arith.constant 0 : index
    %c2_52 = arith.constant 2 : index
    %c0_53 = arith.constant 0 : index
    %33 = vector.load %arg12[%c0_51, %c2_52, %c0_53] : memref<2x12x64xf32, #tpu.memory_space<vmem>>, vector<2x8x64xf32>
    %c0_54 = arith.constant 0 : index
    %c3_55 = arith.constant 3 : index
    %c0_56 = arith.constant 0 : index
    %34 = vector.load %arg12[%c0_54, %c3_55, %c0_56] : memref<2x12x64xf32, #tpu.memory_space<vmem>>, vector<2x8x64xf32>
    %c0_57 = arith.constant 0 : index
    %c4_58 = arith.constant 4 : index
    %c0_59 = arith.constant 0 : index
    %35 = vector.load %arg12[%c0_57, %c4_58, %c0_59] : memref<2x12x64xf32, #tpu.memory_space<vmem>>, vector<2x8x64xf32>
    %36 = tpu.concatenate %31, %32, %33, %34, %35 in 2 : vector<2x8x64xf32>, vector<2x8x64xf32>, vector<2x8x64xf32>, vector<2x8x64xf32>, vector<2x8x64xf32> -> vector<2x8x320xf32>
    %37 = vector.shape_cast %36 : vector<2x8x320xf32> to vector<16x320xf32>
    %c0_60 = arith.constant 0 : index
    %c0_61 = arith.constant 0 : index
    %38 = vector.load %arg3[%c0_60, %c0_61] : memref<320x128xf32, #tpu.memory_space<vmem>>, vector<320x128xf32>
    %cst_62 = arith.constant dense<0.000000e+00> : vector<16x128xf32>
    %39 = tpu.matmul %37, %38, %cst_62 {dimension_numbers = #tpu.dot_dimension_numbers<[1], [0], [0], [1], [0, 0, 1, 1], [], []>, precision = #tpu.contract_precision<fp32>} : vector<16x320xf32>, vector<320x128xf32>, vector<16x128xf32> -> vector<16x128xf32>
    %c0_63 = arith.constant 0 : index
    %c0_64 = arith.constant 0 : index
    %40 = vector.load %arg4[%c0_63, %c0_64] : memref<1x128xf32, #tpu.memory_space<vmem>>, vector<1x128xf32>
    %41 = vector.broadcast %40 : vector<1x128xf32> to vector<16x128xf32>
    %42 = arith.addf %39, %41 : vector<16x128xf32>
    %cst_65 = arith.constant 0.000000e+00 : f32
    %43 = vector.broadcast %cst_65 : f32 to vector<16x128xf32>
    %44 = arith.maximumf %42, %43 : vector<16x128xf32>
    %45 = vector.extract_strided_slice %44 {offsets = [0, 0], sizes = [16, 64], strides = [1, 1]} : vector<16x128xf32> to vector<16x64xf32>
    %46 = vector.extract_strided_slice %44 {offsets = [0, 64], sizes = [16, 64], strides = [1, 1]} : vector<16x128xf32> to vector<16x64xf32>
    %47 = arith.maximumf %45, %46 : vector<16x64xf32>
    %48 = vector.shape_cast %47 : vector<16x64xf32> to vector<2x8x64xf32>
    %c0_66 = arith.constant 0 : index
    %c0_67 = arith.constant 0 : index
    %c0_68 = arith.constant 0 : index
    %49 = vector.load %arg13[%c0_66, %c0_67, %c0_68] : memref<2x8x64xf32, #tpu.memory_space<vmem>>, vector<2x8x64xf32>
    tpu.vector_store %arg13[%c0_66, %c0_67, %c0_68], %48 {strides = array<i32>} : memref<2x8x64xf32, #tpu.memory_space<vmem>>, vector<2x8x64xf32>,
    %c0_69 = arith.constant 0 : index
    %c0_70 = arith.constant 0 : index
    %c0_71 = arith.constant 0 : index
    %50 = vector.load %arg13[%c0_69, %c0_70, %c0_71] : memref<2x8x64xf32, #tpu.memory_space<vmem>>, vector<2x1x64xf32>
    %51 = vector.shape_cast %50 : vector<2x1x64xf32> to vector<2x64xf32>
    %c0_72 = arith.constant 0 : index
    %c1_73 = arith.constant 1 : index
    %c0_74 = arith.constant 0 : index
    %52 = vector.load %arg13[%c0_72, %c1_73, %c0_74] : memref<2x8x64xf32, #tpu.memory_space<vmem>>, vector<2x1x64xf32>
    %53 = vector.shape_cast %52 : vector<2x1x64xf32> to vector<2x64xf32>
    %54 = arith.maximumf %51, %53 : vector<2x64xf32>
    %c0_75 = arith.constant 0 : index
    %c2_76 = arith.constant 2 : index
    %c0_77 = arith.constant 0 : index
    %55 = vector.load %arg13[%c0_75, %c2_76, %c0_77] : memref<2x8x64xf32, #tpu.memory_space<vmem>>, vector<2x1x64xf32>
    %56 = vector.shape_cast %55 : vector<2x1x64xf32> to vector<2x64xf32>
    %c0_78 = arith.constant 0 : index
    %c3_79 = arith.constant 3 : index
    %c0_80 = arith.constant 0 : index
    %57 = vector.load %arg13[%c0_78, %c3_79, %c0_80] : memref<2x8x64xf32, #tpu.memory_space<vmem>>, vector<2x1x64xf32>
    %58 = vector.shape_cast %57 : vector<2x1x64xf32> to vector<2x64xf32>
    %59 = arith.maximumf %56, %58 : vector<2x64xf32>
    %c0_81 = arith.constant 0 : index
    %c4_82 = arith.constant 4 : index
    %c0_83 = arith.constant 0 : index
    %60 = vector.load %arg13[%c0_81, %c4_82, %c0_83] : memref<2x8x64xf32, #tpu.memory_space<vmem>>, vector<2x1x64xf32>
    %61 = vector.shape_cast %60 : vector<2x1x64xf32> to vector<2x64xf32>
    %c0_84 = arith.constant 0 : index
    %c5 = arith.constant 5 : index
    %c0_85 = arith.constant 0 : index
    %62 = vector.load %arg13[%c0_84, %c5, %c0_85] : memref<2x8x64xf32, #tpu.memory_space<vmem>>, vector<2x1x64xf32>
    %63 = vector.shape_cast %62 : vector<2x1x64xf32> to vector<2x64xf32>
    %64 = arith.maximumf %61, %63 : vector<2x64xf32>
    %c0_86 = arith.constant 0 : index
    %c6 = arith.constant 6 : index
    %c0_87 = arith.constant 0 : index
    %65 = vector.load %arg13[%c0_86, %c6, %c0_87] : memref<2x8x64xf32, #tpu.memory_space<vmem>>, vector<2x1x64xf32>
    %66 = vector.shape_cast %65 : vector<2x1x64xf32> to vector<2x64xf32>
    %c0_88 = arith.constant 0 : index
    %c7 = arith.constant 7 : index
    %c0_89 = arith.constant 0 : index
    %67 = vector.load %arg13[%c0_88, %c7, %c0_89] : memref<2x8x64xf32, #tpu.memory_space<vmem>>, vector<2x1x64xf32>
    %68 = vector.shape_cast %67 : vector<2x1x64xf32> to vector<2x64xf32>
    %69 = arith.maximumf %66, %68 : vector<2x64xf32>
    %70 = tpu.concatenate %54, %59, %64, %69 in 1 : vector<2x64xf32>, vector<2x64xf32>, vector<2x64xf32>, vector<2x64xf32> -> vector<2x256xf32>
    %c0_90 = arith.constant 0 : index
    %c0_91 = arith.constant 0 : index
    %71 = vector.load %arg5[%c0_90, %c0_91] : memref<256x64xf32, #tpu.memory_space<vmem>>, vector<256x64xf32>
    %cst_92 = arith.constant dense<0.000000e+00> : vector<2x64xf32>
    %72 = tpu.matmul %70, %71, %cst_92 {dimension_numbers = #tpu.dot_dimension_numbers<[1], [0], [0], [1], [0, 0, 1, 1], [], []>, precision = #tpu.contract_precision<fp32>} : vector<2x256xf32>, vector<256x64xf32>, vector<2x64xf32> -> vector<2x64xf32>
    %c0_93 = arith.constant 0 : index
    %c0_94 = arith.constant 0 : index
    %73 = vector.load %arg6[%c0_93, %c0_94] : memref<1x64xf32, #tpu.memory_space<vmem>>, vector<1x64xf32>
    %74 = vector.broadcast %73 : vector<1x64xf32> to vector<2x64xf32>
    %75 = arith.addf %72, %74 : vector<2x64xf32>
    %cst_95 = arith.constant 0.000000e+00 : f32
    %76 = vector.broadcast %cst_95 : f32 to vector<2x64xf32>
    %77 = arith.maximumf %75, %76 : vector<2x64xf32>
    %c0_96 = arith.constant 0 : index
    %c0_97 = arith.constant 0 : index
    %78 = vector.load %arg7[%c0_96, %c0_97] : memref<64x10xf32, #tpu.memory_space<vmem>>, vector<64x10xf32>
    %cst_98 = arith.constant dense<0.000000e+00> : vector<2x10xf32>
    %79 = tpu.matmul %77, %78, %cst_98 {dimension_numbers = #tpu.dot_dimension_numbers<[1], [0], [0], [1], [0, 0, 1, 1], [], []>, precision = #tpu.contract_precision<fp32>} : vector<2x64xf32>, vector<64x10xf32>, vector<2x10xf32> -> vector<2x10xf32>
    %c0_99 = arith.constant 0 : index
    %c0_100 = arith.constant 0 : index
    %80 = vector.load %arg8[%c0_99, %c0_100] : memref<1x10xf32, #tpu.memory_space<vmem>>, vector<1x10xf32>
    %81 = vector.broadcast %80 : vector<1x10xf32> to vector<2x10xf32>
    %82 = arith.addf %79, %81 : vector<2x10xf32>
    %c0_101 = arith.constant 0 : index
    %c0_102 = arith.constant 0 : index
    %83 = vector.load %arg9[%c0_101, %c0_102] : memref<2x10xf32, #tpu.memory_space<vmem>>, vector<2x10xf32>
    tpu.vector_store %arg9[%c0_101, %c0_102], %82 {strides = array<i32>} : memref<2x10xf32, #tpu.memory_space<vmem>>, vector<2x10xf32>,
    return
  }
}

</mosaic_0001>

<llo_original>
// kernel: cnn_forward.1
$region0: #{cnn_forward.1}
  #allocation0 [shape = 'u32[]', space=smem, size = 0x4, offset = 0x4, fixed_abs, tag = 'smem constant byte address 0x4 - core index']
  #allocation1 [shape = 'u32[144,128]{1,0:T(1,128)}', space=vmem, size = 0x12000, scoped, tag = 'internal scratch']
  #allocation2 [shape = 'f32[2,20,64]{2,1,0:T(8,128)}', space=vmem, size = 0x6000, scoped, tag = 'scratch operand']
  #allocation3 [shape = 'f32[2,16,64]{2,1,0:T(8,128)}', space=vmem, size = 0x4000, scoped, tag = 'scratch operand']
  #allocation4 [shape = 'f32[2,12,64]{2,1,0:T(8,128)}', space=vmem, size = 0x4000, scoped, tag = 'scratch operand']
  #allocation5 [shape = 'f32[2,8,64]{2,1,0:T(8,128)}', space=vmem, size = 0x2000, scoped, tag = 'scratch operand']
  %s0 = inlined_call_operand.vmem [shape: f32[2,16,64], index: 0, kind: input, shape index: {}]
  %s1 = inlined_call_operand.vmem [shape: f32[320,128], index: 1, kind: input, shape index: {}]
  %s2 = inlined_call_operand.vmem [shape: f32[1,128], index: 2, kind: input, shape index: {}]
  %s3 = inlined_call_operand.vmem [shape: f32[320,128], index: 3, kind: input, shape index: {}]
  %s4 = inlined_call_operand.vmem [shape: f32[1,128], index: 4, kind: input, shape index: {}]
  %s5 = inlined_call_operand.vmem [shape: f32[256,64], index: 5, kind: input, shape index: {}]
  %s6 = inlined_call_operand.vmem [shape: f32[1,64], index: 6, kind: input, shape index: {}]
  %s7 = inlined_call_operand.vmem [shape: f32[64,10], index: 7, kind: input, shape index: {}]
  %s8 = inlined_call_operand.vmem [shape: f32[1,10], index: 8, kind: input, shape index: {}]
  %s9 = inlined_call_operand.hbm [shape: f32[2,10], index: 9, kind: output, shape index: {}]
  %s10 = sld [smem:[#allocation0]]
  $region46: #{cnn_forward.1} parent=0
    _
  %s12 = ssub.s32 1, %s10
  %s13 = scalar_select 0, %s12, %s10
  $region1: #{cnn_forward.1} parent=0
    #allocation6 [shape = 'u8[1024]{0}', space=vmem, size = 0x400, scoped, tag = 'output window, operand 0, single buffered']
    #allocation7 [shape = 's32[1]{0}', space=sflag, size = 0x4, scoped, tag = 'scoped memory for cnn_forward.1']
    %14 = vsyncpa [#allocation7], 0
    // Predicated region
    $region2: #{cnn_forward.1} parent=1 // pred_check
      _
    $region3: #{cnn_forward.1} parent=1 // pred_check_branch
      %16 = sbr.rel (0) target = $region5
    $region4: #{cnn_forward.1} parent=1 // pred_region
      _
    $region5: #{cnn_forward.1} parent=1 // pred_fallthru
      _
    // Predicated region
    $region6: #{cnn_forward.1} parent=1 // pred_check
      _
    $region7: #{cnn_forward.1} parent=1 // pred_check_branch
      %18 = sbr.rel (0) target = $region9
    $region8: #{cnn_forward.1} parent=1 // pred_region
      _
    $region9: #{cnn_forward.1} parent=1 // pred_fallthru
      _
    // Predicated region
    $region10: #{cnn_forward.1} parent=1 // pred_check
      _
    $region11: #{cnn_forward.1} parent=1 // pred_check_branch
      %20 = sbr.rel (0) target = $region13
    $region12: #{cnn_forward.1} parent=1 // pred_region
      _
    $region13: #{cnn_forward.1} parent=1 // pred_fallthru
      _
    // Predicated region
    $region14: #{cnn_forward.1} parent=1 // pred_check
      _
    $region15: #{cnn_forward.1} parent=1 // pred_check_branch
      %22 = sbr.rel (0) target = $region17
    $region16: #{cnn_forward.1} parent=1 // pred_region
      _
    $region17: #{cnn_forward.1} parent=1 // pred_fallthru
      _
    // Predicated region
    $region18: #{cnn_forward.1} parent=1 // pred_check
      _
    $region19: #{cnn_forward.1} parent=1 // pred_check_branch
      %24 = sbr.rel (0) target = $region21
    $region20: #{cnn_forward.1} parent=1 // pred_region
      _
    $region21: #{cnn_forward.1} parent=1 // pred_fallthru
      _
    // Predicated region
    $region22: #{cnn_forward.1} parent=1 // pred_check
      _
    $region23: #{cnn_forward.1} parent=1 // pred_check_branch
      %26 = sbr.rel (0) target = $region25
    $region24: #{cnn_forward.1} parent=1 // pred_region
      _
    $region25: #{cnn_forward.1} parent=1 // pred_fallthru
      _
    // Predicated region
    $region26: #{cnn_forward.1} parent=1 // pred_check
      _
    $region27: #{cnn_forward.1} parent=1 // pred_check_branch
      %28 = sbr.rel (0) target = $region29
    $region28: #{cnn_forward.1} parent=1 // pred_region
      _
    $region29: #{cnn_forward.1} parent=1 // pred_fallthru
      _
    // Predicated region
    $region30: #{cnn_forward.1} parent=1 // pred_check
      _
    $region31: #{cnn_forward.1} parent=1 // pred_check_branch
      %30 = sbr.rel (0) target = $region33
    $region32: #{cnn_forward.1} parent=1 // pred_region
      _
    $region33: #{cnn_forward.1} parent=1 // pred_fallthru
      _
    // Predicated region
    $region34: #{cnn_forward.1} parent=1 // pred_check
      _
    $region35: #{cnn_forward.1} parent=1 // pred_check_branch
      %32 = sbr.rel (0) target = $region37
    $region36: #{cnn_forward.1} parent=1 // pred_region
      _
    $region37: #{cnn_forward.1} parent=1 // pred_fallthru
      _
    %v33 = vld [vmem:[%s0] sm:$0xff]
    %v34 = vld [vmem:[%s0 + $0x8] sm:$0xff]
    %v35 = vld [vmem:[%s0 + $0x10] sm:$0xff]
    %v36 = vld [vmem:[%s0 + $0x18] sm:$0xff]
    %vm37 = vcmask 517120
    %38 = vst.msk [vmem:[#allocation2] sm:$0x3] %vm37, 0.0
    %39 = vst.msk [vmem:[#allocation2 + $0x18] sm:$0x3] %vm37, 0.0
    %40 = vst.msk [vmem:[#allocation2 + $0x12] sm:$0x3] %vm37, 0.0
    %41 = vst.msk [vmem:[#allocation2 + $0x2a] sm:$0x3] %vm37, 0.0
    %vm42 = vcmask 523264
    %43 = vst.msk [vmem:[#allocation2 + $0x2] sm:$0xff] %vm42, %v33
    %44 = vst.msk [vmem:[#allocation2 + $0xa] sm:$0xff] %vm42, %v34
    %45 = vst.msk [vmem:[#allocation2 + $0x1a] sm:$0xff] %vm42, %v35
    %46 = vst.msk [vmem:[#allocation2 + $0x22] sm:$0xff] %vm42, %v36
    %v47 = vld [vmem:[#allocation2] sm:$0xff]
    %v48 = vld [vmem:[#allocation2 + $0x8] sm:$0xff]
    %v49 = vld [vmem:[#allocation2 + $0x18] sm:$0xff]
    %v50 = vld [vmem:[#allocation2 + $0x20] sm:$0xff]
    %v51 = vld [vmem:[#allocation2 + $0x1] sm:$0xff]
    %v52 = vld [vmem:[#allocation2 + $0x9] sm:$0xff]
    %v53 = vld [vmem:[#allocation2 + $0x19] sm:$0xff]
    %v54 = vld [vmem:[#allocation2 + $0x21] sm:$0xff]
    %v55 = vld [vmem:[#allocation2 + $0x2] sm:$0xff]
    %v56 = vld [vmem:[#allocation2 + $0xa] sm:$0xff]
    %v57 = vld [vmem:[#allocation2 + $0x1a] sm:$0xff]
    %v58 = vld [vmem:[#allocation2 + $0x22] sm:$0xff]
    %v59 = vld [vmem:[#allocation2 + $0x3] sm:$0xff]
    %v60 = vld [vmem:[#allocation2 + $0xb] sm:$0xff]
    %v61 = vld [vmem:[#allocation2 + $0x1b] sm:$0xff]
    %v62 = vld [vmem:[#allocation2 + $0x23] sm:$0xff]
    %v63 = vld [vmem:[#allocation2 + $0x4] sm:$0xff]
    %v64 = vld [vmem:[#allocation2 + $0xc] sm:$0xff]
    %v65 = vld [vmem:[#allocation2 + $0x1c] sm:$0xff]
    %v66 = vld [vmem:[#allocation2 + $0x24] sm:$0xff]
    %71 = vrot.lane.b32.xlu0 %v51, 64
    %v72 = vpop.permute.xlu0 %71
    %73 = vrot.lane.b32.xlu0 %v52, 64
    %v74 = vpop.permute.xlu0 %73
    %75 = vrot.lane.b32.xlu0 %v53, 64
    %v76 = vpop.permute.xlu0 %75
    %77 = vrot.lane.b32.xlu0 %v54, 64
    %v78 = vpop.permute.xlu0 %77
    %87 = vrot.lane.b32.xlu0 %v59, 64
    %v88 = vpop.permute.xlu0 %87
    %89 = vrot.lane.b32.xlu0 %v60, 64
    %v90 = vpop.permute.xlu0 %89
    %91 = vrot.lane.b32.xlu0 %v61, 64
    %v92 = vpop.permute.xlu0 %91
    %93 = vrot.lane.b32.xlu0 %v62, 64
    %v94 = vpop.permute.xlu0 %93
    %v99 = vsel %vm42, %v47, %v72
    %v100 = vsel %vm42, %v48, %v74
    %v101 = vsel %vm42, %v49, %v76
    %v102 = vsel %vm42, %v50, %v78
    %v103 = vsel %vm42, %v55, %v88
    %v104 = vsel %vm42, %v56, %v90
    %v105 = vsel %vm42, %v57, %v92
    %v106 = vsel %vm42, %v58, %v94
    %v107 = vld [vmem:[%s1] sm:$0xff]
    %v108 = vld [vmem:[%s1 + $0x8] sm:$0xff]
    %v109 = vld [vmem:[%s1 + $0x10] sm:$0xff]
    %v110 = vld [vmem:[%s1 + $0x18] sm:$0xff]
    %v111 = vld [vmem:[%s1 + $0x20] sm:$0xff]
    %v112 = vld [vmem:[%s1 + $0x28] sm:$0xff]
    %v113 = vld [vmem:[%s1 + $0x30] sm:$0xff]
    %v114 = vld [vmem:[%s1 + $0x38] sm:$0xff]
    %v115 = vld [vmem:[%s1 + $0x40] sm:$0xff]
    %v116 = vld [vmem:[%s1 + $0x48] sm:$0xff]
    %v117 = vld [vmem:[%s1 + $0x50] sm:$0xff]
    %v118 = vld [vmem:[%s1 + $0x58] sm:$0xff]
    %v119 = vld [vmem:[%s1 + $0x60] sm:$0xff]
    %v120 = vld [vmem:[%s1 + $0x68] sm:$0xff]
    %v121 = vld [vmem:[%s1 + $0x70] sm:$0xff]
    %v122 = vld [vmem:[%s1 + $0x78] sm:$0xff]
    %v123 = vld [vmem:[%s1 + $0x80] sm:$0xff]
    %v124 = vld [vmem:[%s1 + $0x88] sm:$0xff]
    %v125 = vld [vmem:[%s1 + $0x90] sm:$0xff]
    %v126 = vld [vmem:[%s1 + $0x98] sm:$0xff]
    %v127 = vld [vmem:[%s1 + $0xa0] sm:$0xff]
    %v128 = vld [vmem:[%s1 + $0xa8] sm:$0xff]
    %v129 = vld [vmem:[%s1 + $0xb0] sm:$0xff]
    %v130 = vld [vmem:[%s1 + $0xb8] sm:$0xff]
    %v131 = vld [vmem:[%s1 + $0xc0] sm:$0xff]
    %v132 = vld [vmem:[%s1 + $0xc8] sm:$0xff]
    %v133 = vld [vmem:[%s1 + $0xd0] sm:$0xff]
    %v134 = vld [vmem:[%s1 + $0xd8] sm:$0xff]
    %v135 = vld [vmem:[%s1 + $0xe0] sm:$0xff]
    %v136 = vld [vmem:[%s1 + $0xe8] sm:$0xff]
    %v137 = vld [vmem:[%s1 + $0xf0] sm:$0xff]
    %v138 = vld [vmem:[%s1 + $0xf8] sm:$0xff]
    %v139 = vld [vmem:[%s1 + $0x100] sm:$0xff]
    %v140 = vld [vmem:[%s1 + $0x108] sm:$0xff]
    %v141 = vld [vmem:[%s1 + $0x110] sm:$0xff]
    %v142 = vld [vmem:[%s1 + $0x118] sm:$0xff]
    %v143 = vld [vmem:[%s1 + $0x120] sm:$0xff]
    %v144 = vld [vmem:[%s1 + $0x128] sm:$0xff]
    %v145 = vld [vmem:[%s1 + $0x130] sm:$0xff]
    %v146 = vld [vmem:[%s1 + $0x138] sm:$0xff]
    %v147 = vld [vmem:[%s2] sm:$0x1]
    %v149 = vlaneseq
    %v150 = vshrl.u32 %v149, 7
    %v151 = vsub.s32 0, %v150
    %v152 = vrot.slane %v147, %v151
    %v155 = vsel %vm42, %v63, 0
    %v158 = vsel %vm42, %v64, 0
    %v161 = vsel %vm42, %v65, 0
    %v164 = vsel %vm42, %v66, 0
    %166 = vmatprep.subr.mxu0 0.0
    %v167 = vand.u32 %v107, 4294901760
    %168 = vmatpush1.msra.mxu0 %v167
    %169 = vmatprep.subr.mxu0 0.0
    %v170 = vand.u32 %v108, 4294901760
    %171 = vmatpush1.msra.mxu0 %v170
    %172 = vmatprep.subr.mxu0 0.0
    %v173 = vand.u32 %v109, 4294901760
    %174 = vmatpush1.msra.mxu0 %v173
    %175 = vmatprep.subr.mxu0 0.0
    %v176 = vand.u32 %v110, 4294901760
    %177 = vmatpush1.msra.mxu0 %v176
    %178 = vmatprep.subr.mxu0 0.0
    %v179 = vand.u32 %v111, 4294901760
    %180 = vmatpush1.msra.mxu0 %v179
    %181 = vmatprep.subr.mxu0 0.0
    %v182 = vand.u32 %v112, 4294901760
    %183 = vmatpush1.msra.mxu0 %v182
    %184 = vmatprep.subr.mxu0 0.0
    %v185 = vand.u32 %v113, 4294901760
    %186 = vmatpush1.msra.mxu0 %v185
    %187 = vmatprep.subr.mxu0 0.0
    %v188 = vand.u32 %v114, 4294901760
    %189 = vmatpush1.msra.mxu0 %v188
    %190 = vmatprep.subr.mxu0 0.0
    %v191 = vand.u32 %v115, 4294901760
    %192 = vmatpush1.msra.mxu0 %v191
    %193 = vmatprep.subr.mxu0 0.0
    %v194 = vand.u32 %v116, 4294901760
    %195 = vmatpush1.msra.mxu0 %v194
    %196 = vmatprep.subr.mxu0 0.0
    %v197 = vand.u32 %v117, 4294901760
    %198 = vmatpush1.msra.mxu0 %v197
    %199 = vmatprep.subr.mxu0 0.0
    %v200 = vand.u32 %v118, 4294901760
    %201 = vmatpush1.msra.mxu0 %v200
    %202 = vmatprep.subr.mxu0 0.0
    %v203 = vand.u32 %v119, 4294901760
    %204 = vmatpush1.msra.mxu0 %v203
    %205 = vmatprep.subr.mxu0 0.0
    %v206 = vand.u32 %v120, 4294901760
    %207 = vmatpush1.msra.mxu0 %v206
    %208 = vmatprep.subr.mxu0 0.0
    %v209 = vand.u32 %v121, 4294901760
    %210 = vmatpush1.msra.mxu0 %v209
    %211 = vmatprep.subr.mxu0 0.0
    %v212 = vand.u32 %v122, 4294901760
    %213 = vmatpush1.msra.mxu0 %v212
    %214 = vmatprep.subr.mxu0 0.0
    %v215 = vand.u32 %v123, 4294901760
    %216 = vmatpush1.msra.mxu0 %v215
    %217 = vmatprep.subr.mxu0 0.0
    %v218 = vand.u32 %v124, 4294901760
    %219 = vmatpush1.msra.mxu0 %v218
    %220 = vmatprep.subr.mxu0 0.0
    %v221 = vand.u32 %v125, 4294901760
    %222 = vmatpush1.msra.mxu0 %v221
    %223 = vmatprep.subr.mxu0 0.0
    %v224 = vand.u32 %v126, 4294901760
    %225 = vmatpush1.msra.mxu0 %v224
    %226 = vmatprep.subr.mxu0 0.0
    %v227 = vand.u32 %v127, 4294901760
    %228 = vmatpush1.msra.mxu0 %v227
    %229 = vmatprep.subr.mxu0 0.0
    %v230 = vand.u32 %v128, 4294901760
    %231 = vmatpush1.msra.mxu0 %v230
    %232 = vmatprep.subr.mxu0 0.0
    %v233 = vand.u32 %v129, 4294901760
    %234 = vmatpush1.msra.mxu0 %v233
    %235 = vmatprep.subr.mxu0 0.0
    %v236 = vand.u32 %v130, 4294901760
    %237 = vmatpush1.msra.mxu0 %v236
    %238 = vmatprep.subr.mxu0 0.0
    %v239 = vand.u32 %v131, 4294901760
    %240 = vmatpush1.msra.mxu0 %v239
    %241 = vmatprep.subr.mxu0 0.0
    %v242 = vand.u32 %v132, 4294901760
    %243 = vmatpush1.msra.mxu0 %v242
    %244 = vmatprep.subr.mxu0 0.0
    %v245 = vand.u32 %v133, 4294901760
    %246 = vmatpush1.msra.mxu0 %v245
    %247 = vmatprep.subr.mxu0 0.0
    %v248 = vand.u32 %v134, 4294901760
    %249 = vmatpush1.msra.mxu0 %v248
    %250 = vmatprep.subr.mxu0 0.0
    %v251 = vand.u32 %v135, 4294901760
    %252 = vmatpush1.msra.mxu0 %v251
    %253 = vmatprep.subr.mxu0 0.0
    %v254 = vand.u32 %v136, 4294901760
    %255 = vmatpush1.msra.mxu0 %v254
    %256 = vmatprep.subr.mxu0 0.0
    %v257 = vand.u32 %v137, 4294901760
    %258 = vmatpush1.msra.mxu0 %v257
    %259 = vmatprep.subr.mxu0 0.0
    %v260 = vand.u32 %v138, 4294901760
    %261 = vmatpush1.msra.mxu0 %v260
    %v262 = vand.u32 %v103, 4294901760
    %v263 = vsub.f32 %v103, %v262
    %v264 = vand.u32 %v263, 4294901760
    %v265 = vsub.f32 %v263, %v264
    %v266 = vand.u32 %v265, 4294901760
    %267 = vmatprep.mubr.f32.mxu0 %v266
    %v268 = vand.u32 %v99, 4294901760
    %v269 = vsub.f32 %v99, %v268
    %v270 = vand.u32 %v269, 4294901760
    %v271 = vsub.f32 %v269, %v270
    %v272 = vand.u32 %v271, 4294901760
    %273 = vmatmul.mubr.f32.gmra.mrb[0].mxu0 %v272
    %v274 = vpop.f32.mrb[0].mxu0
    %v275 = vadd.f32 %v152, %v274
    %v276 = vpop.f32.mrb[0].mxu0
    %v277 = vand.u32 %v104, 4294901760
    %v278 = vsub.f32 %v104, %v277
    %v279 = vand.u32 %v278, 4294901760
    %v280 = vsub.f32 %v278, %v279
    %v281 = vand.u32 %v280, 4294901760
    %282 = vmatprep.mubr.f32.mxu0 %v281
    %v283 = vand.u32 %v100, 4294901760
    %v284 = vsub.f32 %v100, %v283
    %v285 = vand.u32 %v284, 4294901760
    %v286 = vsub.f32 %v284, %v285
    %v287 = vand.u32 %v286, 4294901760
    %288 = vmatmul.mubr.f32.gmra.mrb[0].mxu0 %v287
    %v289 = vpop.f32.mrb[0].mxu0
    %v290 = vadd.f32 %v152, %v289
    %v291 = vpop.f32.mrb[0].mxu0
    %v292 = vand.u32 %v105, 4294901760
    %v293 = vsub.f32 %v105, %v292
    %v294 = vand.u32 %v293, 4294901760
    %v295 = vsub.f32 %v293, %v294
    %v296 = vand.u32 %v295, 4294901760
    %297 = vmatprep.mubr.f32.mxu0 %v296
    %v298 = vand.u32 %v101, 4294901760
    %v299 = vsub.f32 %v101, %v298
    %v300 = vand.u32 %v299, 4294901760
    %v301 = vsub.f32 %v299, %v300
    %v302 = vand.u32 %v301, 4294901760
    %303 = vmatmul.mubr.f32.gmra.mrb[0].mxu0 %v302
    %v304 = vpop.f32.mrb[0].mxu0
    %v305 = vadd.f32 %v152, %v304
    %v306 = vpop.f32.mrb[0].mxu0
    %v307 = vand.u32 %v106, 4294901760
    %v308 = vsub.f32 %v106, %v307
    %v309 = vand.u32 %v308, 4294901760
    %v310 = vsub.f32 %v308, %v309
    %v311 = vand.u32 %v310, 4294901760
    %312 = vmatprep.mubr.f32.mxu0 %v311
    %v313 = vand.u32 %v102, 4294901760
    %v314 = vsub.f32 %v102, %v313
    %v315 = vand.u32 %v314, 4294901760
    %v316 = vsub.f32 %v314, %v315
    %v317 = vand.u32 %v316, 4294901760
    %318 = vmatmul.mubr.f32.gmra.mrb[0].mxu0 %v317
    %v319 = vpop.f32.mrb[0].mxu0
    %v320 = vadd.f32 %v152, %v319
    %v321 = vpop.f32.mrb[0].mxu0
    %322 = vdwg.mxu0
    %323 = vmatprep.subr.mxu0 0.0
    %v324 = vand.u32 %v107, 4294901760
    %v325 = vsub.f32 %v107, %v324
    %v326 = vand.u32 %v325, 4294901760
    %v327 = vsub.f32 %v325, %v326
    %v328 = vand.u32 %v327, 4294901760
    %329 = vmatpush1.msra.mxu0 %v328
    %330 = vmatprep.subr.mxu0 0.0
    %v331 = vand.u32 %v108, 4294901760
    %v332 = vsub.f32 %v108, %v331
    %v333 = vand.u32 %v332, 4294901760
    %v334 = vsub.f32 %v332, %v333
    %v335 = vand.u32 %v334, 4294901760
    %336 = vmatpush1.msra.mxu0 %v335
    %337 = vmatprep.subr.mxu0 0.0
    %v338 = vand.u32 %v109, 4294901760
    %v339 = vsub.f32 %v109, %v338
    %v340 = vand.u32 %v339, 4294901760
    %v341 = vsub.f32 %v339, %v340
    %v342 = vand.u32 %v341, 4294901760
    %343 = vmatpush1.msra.mxu0 %v342
    %344 = vmatprep.subr.mxu0 0.0
    %v345 = vand.u32 %v110, 4294901760
    %v346 = vsub.f32 %v110, %v345
    %v347 = vand.u32 %v346, 4294901760
    %v348 = vsub.f32 %v346, %v347
    %v349 = vand.u32 %v348, 4294901760
    %350 = vmatpush1.msra.mxu0 %v349
    %351 = vmatprep.subr.mxu0 0.0
    %v352 = vand.u32 %v111, 4294901760
    %v353 = vsub.f32 %v111, %v352
    %v354 = vand.u32 %v353, 4294901760
    %v355 = vsub.f32 %v353, %v354
    %v356 = vand.u32 %v355, 4294901760
    %357 = vmatpush1.msra.mxu0 %v356
    %358 = vmatprep.subr.mxu0 0.0
    %v359 = vand.u32 %v112, 4294901760
    %v360 = vsub.f32 %v112, %v359
    %v361 = vand.u32 %v360, 4294901760
    %v362 = vsub.f32 %v360, %v361
    %v363 = vand.u32 %v362, 4294901760
    %364 = vmatpush1.msra.mxu0 %v363
    %365 = vmatprep.subr.mxu0 0.0
    %v366 = vand.u32 %v113, 4294901760
    %v367 = vsub.f32 %v113, %v366
    %v368 = vand.u32 %v367, 4294901760
    %v369 = vsub.f32 %v367, %v368
    %v370 = vand.u32 %v369, 4294901760
    %371 = vmatpush1.msra.mxu0 %v370
    %372 = vmatprep.subr.mxu0 0.0
    %v373 = vand.u32 %v114, 4294901760
    %v374 = vsub.f32 %v114, %v373
    %v375 = vand.u32 %v374, 4294901760
    %v376 = vsub.f32 %v374, %v375
    %v377 = vand.u32 %v376, 4294901760
    %378 = vmatpush1.msra.mxu0 %v377
    %379 = vmatprep.subr.mxu0 0.0
    %v380 = vand.u32 %v115, 4294901760
    %v381 = vsub.f32 %v115, %v380
    %v382 = vand.u32 %v381, 4294901760
    %v383 = vsub.f32 %v381, %v382
    %v384 = vand.u32 %v383, 4294901760
    %385 = vmatpush1.msra.mxu0 %v384
    %386 = vmatprep.subr.mxu0 0.0
    %v387 = vand.u32 %v116, 4294901760
    %v388 = vsub.f32 %v116, %v387
    %v389 = vand.u32 %v388, 4294901760
    %v390 = vsub.f32 %v388, %v389
    %v391 = vand.u32 %v390, 4294901760
    %392 = vmatpush1.msra.mxu0 %v391
    %393 = vmatprep.subr.mxu0 0.0
    %v394 = vand.u32 %v117, 4294901760
    %v395 = vsub.f32 %v117, %v394
    %v396 = vand.u32 %v395, 4294901760
    %v397 = vsub.f32 %v395, %v396
    %v398 = vand.u32 %v397, 4294901760
    %399 = vmatpush1.msra.mxu0 %v398
    %400 = vmatprep.subr.mxu0 0.0
    %v401 = vand.u32 %v118, 4294901760
    %v402 = vsub.f32 %v118, %v401
    %v403 = vand.u32 %v402, 4294901760
    %v404 = vsub.f32 %v402, %v403
    %v405 = vand.u32 %v404, 4294901760
    %406 = vmatpush1.msra.mxu0 %v405
    %407 = vmatprep.subr.mxu0 0.0
    %v408 = vand.u32 %v119, 4294901760
    %v409 = vsub.f32 %v119, %v408
    %v410 = vand.u32 %v409, 4294901760
    %v411 = vsub.f32 %v409, %v410
    %v412 = vand.u32 %v411, 4294901760
    %413 = vmatpush1.msra.mxu0 %v412
    %414 = vmatprep.subr.mxu0 0.0
    %v415 = vand.u32 %v120, 4294901760
    %v416 = vsub.f32 %v120, %v415
    %v417 = vand.u32 %v416, 4294901760
    %v418 = vsub.f32 %v416, %v417
    %v419 = vand.u32 %v418, 4294901760
    %420 = vmatpush1.msra.mxu0 %v419
    %421 = vmatprep.subr.mxu0 0.0
    %v422 = vand.u32 %v121, 4294901760
    %v423 = vsub.f32 %v121, %v422
    %v424 = vand.u32 %v423, 4294901760
    %v425 = vsub.f32 %v423, %v424
    %v426 = vand.u32 %v425, 4294901760
    %427 = vmatpush1.msra.mxu0 %v426
    %428 = vmatprep.subr.mxu0 0.0
    %v429 = vand.u32 %v122, 4294901760
    %v430 = vsub.f32 %v122, %v429
    %v431 = vand.u32 %v430, 4294901760
    %v432 = vsub.f32 %v430, %v431
    %v433 = vand.u32 %v432, 4294901760
    %434 = vmatpush1.msra.mxu0 %v433
    %435 = vmatprep.subr.mxu0 0.0
    %v436 = vand.u32 %v123, 4294901760
    %v437 = vsub.f32 %v123, %v436
    %v438 = vand.u32 %v437, 4294901760
    %v439 = vsub.f32 %v437, %v438
    %v440 = vand.u32 %v439, 4294901760
    %441 = vmatpush1.msra.mxu0 %v440
    %442 = vmatprep.subr.mxu0 0.0
    %v443 = vand.u32 %v124, 4294901760
    %v444 = vsub.f32 %v124, %v443
    %v445 = vand.u32 %v444, 4294901760
    %v446 = vsub.f32 %v444, %v445
    %v447 = vand.u32 %v446, 4294901760
    %448 = vmatpush1.msra.mxu0 %v447
    %449 = vmatprep.subr.mxu0 0.0
    %v450 = vand.u32 %v125, 4294901760
    %v451 = vsub.f32 %v125, %v450
    %v452 = vand.u32 %v451, 4294901760
    %v453 = vsub.f32 %v451, %v452
    %v454 = vand.u32 %v453, 4294901760
    %455 = vmatpush1.msra.mxu0 %v454
    %456 = vmatprep.subr.mxu0 0.0
    %v457 = vand.u32 %v126, 4294901760
    %v458 = vsub.f32 %v126, %v457
    %v459 = vand.u32 %v458, 4294901760
    %v460 = vsub.f32 %v458, %v459
    %v461 = vand.u32 %v460, 4294901760
    %462 = vmatpush1.msra.mxu0 %v461
    %463 = vmatprep.subr.mxu0 0.0
    %v464 = vand.u32 %v127, 4294901760
    %v465 = vsub.f32 %v127, %v464
    %v466 = vand.u32 %v465, 4294901760
    %v467 = vsub.f32 %v465, %v466
    %v468 = vand.u32 %v467, 4294901760
    %469 = vmatpush1.msra.mxu0 %v468
    %470 = vmatprep.subr.mxu0 0.0
    %v471 = vand.u32 %v128, 4294901760
    %v472 = vsub.f32 %v128, %v471
    %v473 = vand.u32 %v472, 4294901760
    %v474 = vsub.f32 %v472, %v473
    %v475 = vand.u32 %v474, 4294901760
    %476 = vmatpush1.msra.mxu0 %v475
    %477 = vmatprep.subr.mxu0 0.0
    %v478 = vand.u32 %v129, 4294901760
    %v479 = vsub.f32 %v129, %v478
    %v480 = vand.u32 %v479, 4294901760
    %v481 = vsub.f32 %v479, %v480
    %v482 = vand.u32 %v481, 4294901760
    %483 = vmatpush1.msra.mxu0 %v482
    %484 = vmatprep.subr.mxu0 0.0
    %v485 = vand.u32 %v130, 4294901760
    %v486 = vsub.f32 %v130, %v485
    %v487 = vand.u32 %v486, 4294901760
    %v488 = vsub.f32 %v486, %v487
    %v489 = vand.u32 %v488, 4294901760
    %490 = vmatpush1.msra.mxu0 %v489
    %491 = vmatprep.subr.mxu0 0.0
    %v492 = vand.u32 %v131, 4294901760
    %v493 = vsub.f32 %v131, %v492
    %v494 = vand.u32 %v493, 4294901760
    %v495 = vsub.f32 %v493, %v494
    %v496 = vand.u32 %v495, 4294901760
    %497 = vmatpush1.msra.mxu0 %v496
    %498 = vmatprep.subr.mxu0 0.0
    %v499 = vand.u32 %v132, 4294901760
    %v500 = vsub.f32 %v132, %v499
    %v501 = vand.u32 %v500, 4294901760
    %v502 = vsub.f32 %v500, %v501
    %v503 = vand.u32 %v502, 4294901760
    %504 = vmatpush1.msra.mxu0 %v503
    %505 = vmatprep.subr.mxu0 0.0
    %v506 = vand.u32 %v133, 4294901760
    %v507 = vsub.f32 %v133, %v506
    %v508 = vand.u32 %v507, 4294901760
    %v509 = vsub.f32 %v507, %v508
    %v510 = vand.u32 %v509, 4294901760
    %511 = vmatpush1.msra.mxu0 %v510
    %512 = vmatprep.subr.mxu0 0.0
    %v513 = vand.u32 %v134, 4294901760
    %v514 = vsub.f32 %v134, %v513
    %v515 = vand.u32 %v514, 4294901760
    %v516 = vsub.f32 %v514, %v515
    %v517 = vand.u32 %v516, 4294901760
    %518 = vmatpush1.msra.mxu0 %v517
    %519 = vmatprep.subr.mxu0 0.0
    %v520 = vand.u32 %v135, 4294901760
    %v521 = vsub.f32 %v135, %v520
    %v522 = vand.u32 %v521, 4294901760
    %v523 = vsub.f32 %v521, %v522
    %v524 = vand.u32 %v523, 4294901760
    %525 = vmatpush1.msra.mxu0 %v524
    %526 = vmatprep.subr.mxu0 0.0
    %v527 = vand.u32 %v136, 4294901760
    %v528 = vsub.f32 %v136, %v527
    %v529 = vand.u32 %v528, 4294901760
    %v530 = vsub.f32 %v528, %v529
    %v531 = vand.u32 %v530, 4294901760
    %532 = vmatpush1.msra.mxu0 %v531
    %533 = vmatprep.subr.mxu0 0.0
    %v534 = vand.u32 %v137, 4294901760
    %v535 = vsub.f32 %v137, %v534
    %v536 = vand.u32 %v535, 4294901760
    %v537 = vsub.f32 %v535, %v536
    %v538 = vand.u32 %v537, 4294901760
    %539 = vmatpush1.msra.mxu0 %v538
    %540 = vmatprep.subr.mxu0 0.0
    %v541 = vand.u32 %v138, 4294901760
    %v542 = vsub.f32 %v138, %v541
    %v543 = vand.u32 %v542, 4294901760
    %v544 = vsub.f32 %v542, %v543
    %v545 = vand.u32 %v544, 4294901760
    %546 = vmatpush1.msra.mxu0 %v545
    %v547 = vand.u32 %v103, 4294901760
    %548 = vmatprep.mubr.f32.mxu0 %v547
    %v549 = vand.u32 %v99, 4294901760
    %550 = vmatmul.mubr.f32.gmra.mrb[0].mxu0 %v549
    %v551 = vpop.f32.mrb[0].mxu0
    %v552 = vadd.f32 %v275, %v551
    %v553 = vpop.f32.mrb[0].mxu0
    %v554 = vand.u32 %v104, 4294901760
    %555 = vmatprep.mubr.f32.mxu0 %v554
    %v556 = vand.u32 %v100, 4294901760
    %557 = vmatmul.mubr.f32.gmra.mrb[0].mxu0 %v556
    %v558 = vpop.f32.mrb[0].mxu0
    %v559 = vadd.f32 %v290, %v558
    %v560 = vpop.f32.mrb[0].mxu0
    %v561 = vand.u32 %v105, 4294901760
    %562 = vmatprep.mubr.f32.mxu0 %v561
    %v563 = vand.u32 %v101, 4294901760
    %564 = vmatmul.mubr.f32.gmra.mrb[0].mxu0 %v563
    %v565 = vpop.f32.mrb[0].mxu0
    %v566 = vadd.f32 %v305, %v565
    %v567 = vpop.f32.mrb[0].mxu0
    %v568 = vand.u32 %v106, 4294901760
    %569 = vmatprep.mubr.f32.mxu0 %v568
    %v570 = vand.u32 %v102, 4294901760
    %571 = vmatmul.mubr.f32.gmra.mrb[0].mxu0 %v570
    %v572 = vpop.f32.mrb[0].mxu0
    %v573 = vadd.f32 %v320, %v572
    %v574 = vpop.f32.mrb[0].mxu0
    %575 = vdwg.mxu0
    %576 = vmatprep.subr.mxu0 0.0
    %v577 = vand.u32 %v107, 4294901760
    %v578 = vsub.f32 %v107, %v577
    %579 = vmatpush1.msra.mxu0 %v578
    %580 = vmatprep.subr.mxu0 0.0
    %v581 = vand.u32 %v108, 4294901760
    %v582 = vsub.f32 %v108, %v581
    %583 = vmatpush1.msra.mxu0 %v582
    %584 = vmatprep.subr.mxu0 0.0
    %v585 = vand.u32 %v109, 4294901760
    %v586 = vsub.f32 %v109, %v585
    %587 = vmatpush1.msra.mxu0 %v586
    %588 = vmatprep.subr.mxu0 0.0
    %v589 = vand.u32 %v110, 4294901760
    %v590 = vsub.f32 %v110, %v589
    %591 = vmatpush1.msra.mxu0 %v590
    %592 = vmatprep.subr.mxu0 0.0
    %v593 = vand.u32 %v111, 4294901760
    %v594 = vsub.f32 %v111, %v593
    %595 = vmatpush1.msra.mxu0 %v594
    %596 = vmatprep.subr.mxu0 0.0
    %v597 = vand.u32 %v112, 4294901760
    %v598 = vsub.f32 %v112, %v597
    %599 = vmatpush1.msra.mxu0 %v598
    %600 = vmatprep.subr.mxu0 0.0
    %v601 = vand.u32 %v113, 4294901760
    %v602 = vsub.f32 %v113, %v601
    %603 = vmatpush1.msra.mxu0 %v602
    %604 = vmatprep.subr.mxu0 0.0
    %v605 = vand.u32 %v114, 4294901760
    %v606 = vsub.f32 %v114, %v605
    %607 = vmatpush1.msra.mxu0 %v606
    %608 = vmatprep.subr.mxu0 0.0
    %v609 = vand.u32 %v115, 4294901760
    %v610 = vsub.f32 %v115, %v609
    %611 = vmatpush1.msra.mxu0 %v610
    %612 = vmatprep.subr.mxu0 0.0
    %v613 = vand.u32 %v116, 4294901760
    %v614 = vsub.f32 %v116, %v613
    %615 = vmatpush1.msra.mxu0 %v614
    %616 = vmatprep.subr.mxu0 0.0
    %v617 = vand.u32 %v117, 4294901760
    %v618 = vsub.f32 %v117, %v617
    %619 = vmatpush1.msra.mxu0 %v618
    %620 = vmatprep.subr.mxu0 0.0
    %v621 = vand.u32 %v118, 4294901760
    %v622 = vsub.f32 %v118, %v621
    %623 = vmatpush1.msra.mxu0 %v622
    %624 = vmatprep.subr.mxu0 0.0
    %v625 = vand.u32 %v119, 4294901760
    %v626 = vsub.f32 %v119, %v625
    %627 = vmatpush1.msra.mxu0 %v626
    %628 = vmatprep.subr.mxu0 0.0
    %v629 = vand.u32 %v120, 4294901760
    %v630 = vsub.f32 %v120, %v629
    %631 = vmatpush1.msra.mxu0 %v630
    %632 = vmatprep.subr.mxu0 0.0
    %v633 = vand.u32 %v121, 4294901760
    %v634 = vsub.f32 %v121, %v633
    %635 = vmatpush1.msra.mxu0 %v634
    %636 = vmatprep.subr.mxu0 0.0
    %v637 = vand.u32 %v122, 4294901760
    %v638 = vsub.f32 %v122, %v637
    %639 = vmatpush1.msra.mxu0 %v638
    %640 = vmatprep.subr.mxu0 0.0
    %v641 = vand.u32 %v123, 4294901760
    %v642 = vsub.f32 %v123, %v641
    %643 = vmatpush1.msra.mxu0 %v642
    %644 = vmatprep.subr.mxu0 0.0
    %v645 = vand.u32 %v124, 4294901760
    %v646 = vsub.f32 %v124, %v645
    %647 = vmatpush1.msra.mxu0 %v646
    %648 = vmatprep.subr.mxu0 0.0
    %v649 = vand.u32 %v125, 4294901760
    %v650 = vsub.f32 %v125, %v649
    %651 = vmatpush1.msra.mxu0 %v650
    %652 = vmatprep.subr.mxu0 0.0
    %v653 = vand.u32 %v126, 4294901760
    %v654 = vsub.f32 %v126, %v653
    %655 = vmatpush1.msra.mxu0 %v654
    %656 = vmatprep.subr.mxu0 0.0
    %v657 = vand.u32 %v127, 4294901760
    %v658 = vsub.f32 %v127, %v657
    %659 = vmatpush1.msra.mxu0 %v658
    %660 = vmatprep.subr.mxu0 0.0
    %v661 = vand.u32 %v128, 4294901760
    %v662 = vsub.f32 %v128, %v661
    %663 = vmatpush1.msra.mxu0 %v662
    %664 = vmatprep.subr.mxu0 0.0
    %v665 = vand.u32 %v129, 4294901760
    %v666 = vsub.f32 %v129, %v665
    %667 = vmatpush1.msra.mxu0 %v666
    %668 = vmatprep.subr.mxu0 0.0
    %v669 = vand.u32 %v130, 4294901760
    %v670 = vsub.f32 %v130, %v669
    %671 = vmatpush1.msra.mxu0 %v670
    %672 = vmatprep.subr.mxu0 0.0
    %v673 = vand.u32 %v131, 4294901760
    %v674 = vsub.f32 %v131, %v673
    %675 = vmatpush1.msra.mxu0 %v674
    %676 = vmatprep.subr.mxu0 0.0
    %v677 = vand.u32 %v132, 4294901760
    %v678 = vsub.f32 %v132, %v677
    %679 = vmatpush1.msra.mxu0 %v678
    %680 = vmatprep.subr.mxu0 0.0
    %v681 = vand.u32 %v133, 4294901760
    %v682 = vsub.f32 %v133, %v681
    %683 = vmatpush1.msra.mxu0 %v682
    %684 = vmatprep.subr.mxu0 0.0
    %v685 = vand.u32 %v134, 4294901760
    %v686 = vsub.f32 %v134, %v685
    %687 = vmatpush1.msra.mxu0 %v686
    %688 = vmatprep.subr.mxu0 0.0
    %v689 = vand.u32 %v135, 4294901760
    %v690 = vsub.f32 %v135, %v689
    %691 = vmatpush1.msra.mxu0 %v690
    %692 = vmatprep.subr.mxu0 0.0
    %v693 = vand.u32 %v136, 4294901760
    %v694 = vsub.f32 %v136, %v693
    %695 = vmatpush1.msra.mxu0 %v694
    %696 = vmatprep.subr.mxu0 0.0
    %v697 = vand.u32 %v137, 4294901760
    %v698 = vsub.f32 %v137, %v697
    %699 = vmatpush1.msra.mxu0 %v698
    %700 = vmatprep.subr.mxu0 0.0
    %v701 = vand.u32 %v138, 4294901760
    %v702 = vsub.f32 %v138, %v701
    %703 = vmatpush1.msra.mxu0 %v702
    %v704 = vand.u32 %v103, 4294901760
    %v705 = vsub.f32 %v103, %v704
    %706 = vmatprep.mubr.f32.mxu0 %v705
    %v707 = vand.u32 %v99, 4294901760
    %v708 = vsub.f32 %v99, %v707
    %709 = vmatmul.mubr.f32.gmra.mrb[0].mxu0 %v708
    %v710 = vpop.f32.mrb[0].mxu0
    %v711 = vadd.f32 %v552, %v710
    %v712 = vpop.f32.mrb[0].mxu0
    %v713 = vand.u32 %v104, 4294901760
    %v714 = vsub.f32 %v104, %v713
    %715 = vmatprep.mubr.f32.mxu0 %v714
    %v716 = vand.u32 %v100, 4294901760
    %v717 = vsub.f32 %v100, %v716
    %718 = vmatmul.mubr.f32.gmra.mrb[0].mxu0 %v717
    %v719 = vpop.f32.mrb[0].mxu0
    %v720 = vadd.f32 %v559, %v719
    %v721 = vpop.f32.mrb[0].mxu0
    %v722 = vand.u32 %v105, 4294901760
    %v723 = vsub.f32 %v105, %v722
    %724 = vmatprep.mubr.f32.mxu0 %v723
    %v725 = vand.u32 %v101, 4294901760
    %v726 = vsub.f32 %v101, %v725
    %727 = vmatmul.mubr.f32.gmra.mrb[0].mxu0 %v726
    %v728 = vpop.f32.mrb[0].mxu0
    %v729 = vadd.f32 %v566, %v728
    %v730 = vpop.f32.mrb[0].mxu0
    %v731 = vand.u32 %v106, 4294901760
    %v732 = vsub.f32 %v106, %v731
    %733 = vmatprep.mubr.f32.mxu0 %v732
    %v734 = vand.u32 %v102, 4294901760
    %v735 = vsub.f32 %v102, %v734
    %736 = vmatmul.mubr.f32.gmra.mrb[0].mxu0 %v735
    %v737 = vpop.f32.mrb[0].mxu0
    %v738 = vadd.f32 %v573, %v737
    %v739 = vpop.f32.mrb[0].mxu0
    %740 = vdwg.mxu0
    %741 = vmatprep.subr.mxu0 0.0
    %v742 = vand.u32 %v107, 4294901760
    %743 = vmatpush1.msra.mxu0 %v742
    %744 = vmatprep.subr.mxu0 0.0
    %v745 = vand.u32 %v108, 4294901760
    %746 = vmatpush1.msra.mxu0 %v745
    %747 = vmatprep.subr.mxu0 0.0
    %v748 = vand.u32 %v109, 4294901760
    %749 = vmatpush1.msra.mxu0 %v748
    %750 = vmatprep.subr.mxu0 0.0
    %v751 = vand.u32 %v110, 4294901760
    %752 = vmatpush1.msra.mxu0 %v751
    %753 = vmatprep.subr.mxu0 0.0
    %v754 = vand.u32 %v111, 4294901760
    %755 = vmatpush1.msra.mxu0 %v754
    %756 = vmatprep.subr.mxu0 0.0
    %v757 = vand.u32 %v112, 4294901760
    %758 = vmatpush1.msra.mxu0 %v757
    %759 = vmatprep.subr.mxu0 0.0
    %v760 = vand.u32 %v113, 4294901760
    %761 = vmatpush1.msra.mxu0 %v760
    %762 = vmatprep.subr.mxu0 0.0
    %v763 = vand.u32 %v114, 4294901760
    %764 = vmatpush1.msra.mxu0 %v763
    %765 = vmatprep.subr.mxu0 0.0
    %v766 = vand.u32 %v115, 4294901760
    %767 = vmatpush1.msra.mxu0 %v766
    %768 = vmatprep.subr.mxu0 0.0
    %v769 = vand.u32 %v116, 4294901760
    %770 = vmatpush1.msra.mxu0 %v769
    %771 = vmatprep.subr.mxu0 0.0
    %v772 = vand.u32 %v117, 4294901760
    %773 = vmatpush1.msra.mxu0 %v772
    %774 = vmatprep.subr.mxu0 0.0
    %v775 = vand.u32 %v118, 4294901760
    %776 = vmatpush1.msra.mxu0 %v775
    %777 = vmatprep.subr.mxu0 0.0
    %v778 = vand.u32 %v119, 4294901760
    %779 = vmatpush1.msra.mxu0 %v778
    %780 = vmatprep.subr.mxu0 0.0
    %v781 = vand.u32 %v120, 4294901760
    %782 = vmatpush1.msra.mxu0 %v781
    %783 = vmatprep.subr.mxu0 0.0
    %v784 = vand.u32 %v121, 4294901760
    %785 = vmatpush1.msra.mxu0 %v784
    %786 = vmatprep.subr.mxu0 0.0
    %v787 = vand.u32 %v122, 4294901760
    %788 = vmatpush1.msra.mxu0 %v787
    %789 = vmatprep.subr.mxu0 0.0
    %v790 = vand.u32 %v123, 4294901760
    %791 = vmatpush1.msra.mxu0 %v790
    %792 = vmatprep.subr.mxu0 0.0
    %v793 = vand.u32 %v124, 4294901760
    %794 = vmatpush1.msra.mxu0 %v793
    %795 = vmatprep.subr.mxu0 0.0
    %v796 = vand.u32 %v125, 4294901760
    %797 = vmatpush1.msra.mxu0 %v796
    %798 = vmatprep.subr.mxu0 0.0
    %v799 = vand.u32 %v126, 4294901760
    %800 = vmatpush1.msra.mxu0 %v799
    %801 = vmatprep.subr.mxu0 0.0
    %v802 = vand.u32 %v127, 4294901760
    %803 = vmatpush1.msra.mxu0 %v802
    %804 = vmatprep.subr.mxu0 0.0
    %v805 = vand.u32 %v128, 4294901760
    %806 = vmatpush1.msra.mxu0 %v805
    %807 = vmatprep.subr.mxu0 0.0
    %v808 = vand.u32 %v129, 4294901760
    %809 = vmatpush1.msra.mxu0 %v808
    %810 = vmatprep.subr.mxu0 0.0
    %v811 = vand.u32 %v130, 4294901760
    %812 = vmatpush1.msra.mxu0 %v811
    %813 = vmatprep.subr.mxu0 0.0
    %v814 = vand.u32 %v131, 4294901760
    %815 = vmatpush1.msra.mxu0 %v814
    %816 = vmatprep.subr.mxu0 0.0
    %v817 = vand.u32 %v132, 4294901760
    %818 = vmatpush1.msra.mxu0 %v817
    %819 = vmatprep.subr.mxu0 0.0
    %v820 = vand.u32 %v133, 4294901760
    %821 = vmatpush1.msra.mxu0 %v820
    %822 = vmatprep.subr.mxu0 0.0
    %v823 = vand.u32 %v134, 4294901760
    %824 = vmatpush1.msra.mxu0 %v823
    %825 = vmatprep.subr.mxu0 0.0
    %v826 = vand.u32 %v135, 4294901760
    %827 = vmatpush1.msra.mxu0 %v826
    %828 = vmatprep.subr.mxu0 0.0
    %v829 = vand.u32 %v136, 4294901760
    %830 = vmatpush1.msra.mxu0 %v829
    %831 = vmatprep.subr.mxu0 0.0
    %v832 = vand.u32 %v137, 4294901760
    %833 = vmatpush1.msra.mxu0 %v832
    %834 = vmatprep.subr.mxu0 0.0
    %v835 = vand.u32 %v138, 4294901760
    %836 = vmatpush1.msra.mxu0 %v835
    %v837 = vand.u32 %v103, 4294901760
    %v838 = vsub.f32 %v103, %v837
    %v839 = vand.u32 %v838, 4294901760
    %840 = vmatprep.mubr.f32.mxu0 %v839
    %v841 = vand.u32 %v99, 4294901760
    %v842 = vsub.f32 %v99, %v841
    %v843 = vand.u32 %v842, 4294901760
    %844 = vmatmul.mubr.f32.gmra.mrb[0].mxu0 %v843
    %v845 = vpop.f32.mrb[0].mxu0
    %v846 = vadd.f32 %v711, %v845
    %v847 = vpop.f32.mrb[0].mxu0
    %v848 = vand.u32 %v104, 4294901760
    %v849 = vsub.f32 %v104, %v848
    %v850 = vand.u32 %v849, 4294901760
    %851 = vmatprep.mubr.f32.mxu0 %v850
    %v852 = vand.u32 %v100, 4294901760
    %v853 = vsub.f32 %v100, %v852
    %v854 = vand.u32 %v853, 4294901760
    %855 = vmatmul.mubr.f32.gmra.mrb[0].mxu0 %v854
    %v856 = vpop.f32.mrb[0].mxu0
    %v857 = vadd.f32 %v720, %v856
    %v858 = vpop.f32.mrb[0].mxu0
    %v859 = vand.u32 %v105, 4294901760
    %v860 = vsub.f32 %v105, %v859
    %v861 = vand.u32 %v860, 4294901760
    %862 = vmatprep.mubr.f32.mxu0 %v861
    %v863 = vand.u32 %v101, 4294901760
    %v864 = vsub.f32 %v101, %v863
    %v865 = vand.u32 %v864, 4294901760
    %866 = vmatmul.mubr.f32.gmra.mrb[0].mxu0 %v865
    %v867 = vpop.f32.mrb[0].mxu0
    %v868 = vadd.f32 %v729, %v867
    %v869 = vpop.f32.mrb[0].mxu0
    %v870 = vand.u32 %v106, 4294901760
    %v871 = vsub.f32 %v106, %v870
    %v872 = vand.u32 %v871, 4294901760
    %873 = vmatprep.mubr.f32.mxu0 %v872
    %v874 = vand.u32 %v102, 4294901760
    %v875 = vsub.f32 %v102, %v874
    %v876 = vand.u32 %v875, 4294901760
    %877 = vmatmul.mubr.f32.gmra.mrb[0].mxu0 %v876
    %v878 = vpop.f32.mrb[0].mxu0
    %v879 = vadd.f32 %v738, %v878
    %v880 = vpop.f32.mrb[0].mxu0
    %881 = vdwg.mxu0
    %882 = vmatprep.subr.mxu0 0.0
    %v883 = vand.u32 %v107, 4294901760
    %v884 = vsub.f32 %v107, %v883
    %v885 = vand.u32 %v884, 4294901760
    %886 = vmatpush1.msra.mxu0 %v885
    %887 = vmatprep.subr.mxu0 0.0
    %v888 = vand.u32 %v108, 4294901760
    %v889 = vsub.f32 %v108, %v888
    %v890 = vand.u32 %v889, 4294901760
    %891 = vmatpush1.msra.mxu0 %v890
    %892 = vmatprep.subr.mxu0 0.0
    %v893 = vand.u32 %v109, 4294901760
    %v894 = vsub.f32 %v109, %v893
    %v895 = vand.u32 %v894, 4294901760
    %896 = vmatpush1.msra.mxu0 %v895
    %897 = vmatprep.subr.mxu0 0.0
    %v898 = vand.u32 %v110, 4294901760
    %v899 = vsub.f32 %v110, %v898
    %v900 = vand.u32 %v899, 4294901760
    %901 = vmatpush1.msra.mxu0 %v900
    %902 = vmatprep.subr.mxu0 0.0
    %v903 = vand.u32 %v111, 4294901760
    %v904 = vsub.f32 %v111, %v903
    %v905 = vand.u32 %v904, 4294901760
    %906 = vmatpush1.msra.mxu0 %v905
    %907 = vmatprep.subr.mxu0 0.0
    %v908 = vand.u32 %v112, 4294901760
    %v909 = vsub.f32 %v112, %v908
    %v910 = vand.u32 %v909, 4294901760
    %911 = vmatpush1.msra.mxu0 %v910
    %912 = vmatprep.subr.mxu0 0.0
    %v913 = vand.u32 %v113, 4294901760
    %v914 = vsub.f32 %v113, %v913
    %v915 = vand.u32 %v914, 4294901760
    %916 = vmatpush1.msra.mxu0 %v915
    %917 = vmatprep.subr.mxu0 0.0
    %v918 = vand.u32 %v114, 4294901760
    %v919 = vsub.f32 %v114, %v918
    %v920 = vand.u32 %v919, 4294901760
    %921 = vmatpush1.msra.mxu0 %v920
    %922 = vmatprep.subr.mxu0 0.0
    %v923 = vand.u32 %v115, 4294901760
    %v924 = vsub.f32 %v115, %v923
    %v925 = vand.u32 %v924, 4294901760
    %926 = vmatpush1.msra.mxu0 %v925
    %927 = vmatprep.subr.mxu0 0.0
    %v928 = vand.u32 %v116, 4294901760
    %v929 = vsub.f32 %v116, %v928
    %v930 = vand.u32 %v929, 4294901760
    %931 = vmatpush1.msra.mxu0 %v930
    %932 = vmatprep.subr.mxu0 0.0
    %v933 = vand.u32 %v117, 4294901760
    %v934 = vsub.f32 %v117, %v933
    %v935 = vand.u32 %v934, 4294901760
    %936 = vmatpush1.msra.mxu0 %v935
    %937 = vmatprep.subr.mxu0 0.0
    %v938 = vand.u32 %v118, 4294901760
    %v939 = vsub.f32 %v118, %v938
    %v940 = vand.u32 %v939, 4294901760
    %941 = vmatpush1.msra.mxu0 %v940
    %942 = vmatprep.subr.mxu0 0.0
    %v943 = vand.u32 %v119, 4294901760
    %v944 = vsub.f32 %v119, %v943
    %v945 = vand.u32 %v944, 4294901760
    %946 = vmatpush1.msra.mxu0 %v945
    %947 = vmatprep.subr.mxu0 0.0
    %v948 = vand.u32 %v120, 4294901760
    %v949 = vsub.f32 %v120, %v948
    %v950 = vand.u32 %v949, 4294901760
    %951 = vmatpush1.msra.mxu0 %v950
    %952 = vmatprep.subr.mxu0 0.0
    %v953 = vand.u32 %v121, 4294901760
    %v954 = vsub.f32 %v121, %v953
    %v955 = vand.u32 %v954, 4294901760
    %956 = vmatpush1.msra.mxu0 %v955
    %957 = vmatprep.subr.mxu0 0.0
    %v958 = vand.u32 %v122, 4294901760
    %v959 = vsub.f32 %v122, %v958
    %v960 = vand.u32 %v959, 4294901760
    %961 = vmatpush1.msra.mxu0 %v960
    %962 = vmatprep.subr.mxu0 0.0
    %v963 = vand.u32 %v123, 4294901760
    %v964 = vsub.f32 %v123, %v963
    %v965 = vand.u32 %v964, 4294901760
    %966 = vmatpush1.msra.mxu0 %v965
    %967 = vmatprep.subr.mxu0 0.0
    %v968 = vand.u32 %v124, 4294901760
    %v969 = vsub.f32 %v124, %v968
    %v970 = vand.u32 %v969, 4294901760
    %971 = vmatpush1.msra.mxu0 %v970
    %972 = vmatprep.subr.mxu0 0.0
    %v973 = vand.u32 %v125, 4294901760
    %v974 = vsub.f32 %v125, %v973
    %v975 = vand.u32 %v974, 4294901760
    %976 = vmatpush1.msra.mxu0 %v975
    %977 = vmatprep.subr.mxu0 0.0
    %v978 = vand.u32 %v126, 4294901760
    %v979 = vsub.f32 %v126, %v978
    %v980 = vand.u32 %v979, 4294901760
    %981 = vmatpush1.msra.mxu0 %v980
    %982 = vmatprep.subr.mxu0 0.0
    %v983 = vand.u32 %v127, 4294901760
    %v984 = vsub.f32 %v127, %v983
    %v985 = vand.u32 %v984, 4294901760
    %986 = vmatpush1.msra.mxu0 %v985
    %987 = vmatprep.subr.mxu0 0.0
    %v988 = vand.u32 %v128, 4294901760
    %v989 = vsub.f32 %v128, %v988
    %v990 = vand.u32 %v989, 4294901760
    %991 = vmatpush1.msra.mxu0 %v990
    %992 = vmatprep.subr.mxu0 0.0
    %v993 = vand.u32 %v129, 4294901760
    %v994 = vsub.f32 %v129, %v993
    %v995 = vand.u32 %v994, 4294901760
    %996 = vmatpush1.msra.mxu0 %v995
    %997 = vmatprep.subr.mxu0 0.0
    %v998 = vand.u32 %v130, 4294901760
    %v999 = vsub.f32 %v130, %v998
    %v1000 = vand.u32 %v999, 4294901760
    %1001 = vmatpush1.msra.mxu0 %v1000
    %1002 = vmatprep.subr.mxu0 0.0
    %v1003 = vand.u32 %v131, 4294901760
    %v1004 = vsub.f32 %v131, %v1003
    %v1005 = vand.u32 %v1004, 4294901760
    %1006 = vmatpush1.msra.mxu0 %v1005
    %1007 = vmatprep.subr.mxu0 0.0
    %v1008 = vand.u32 %v132, 4294901760
    %v1009 = vsub.f32 %v132, %v1008
    %v1010 = vand.u32 %v1009, 4294901760
    %1011 = vmatpush1.msra.mxu0 %v1010
    %1012 = vmatprep.subr.mxu0 0.0
    %v1013 = vand.u32 %v133, 4294901760
    %v1014 = vsub.f32 %v133, %v1013
    %v1015 = vand.u32 %v1014, 4294901760
    %1016 = vmatpush1.msra.mxu0 %v1015
    %1017 = vmatprep.subr.mxu0 0.0
    %v1018 = vand.u32 %v134, 4294901760
    %v1019 = vsub.f32 %v134, %v1018
    %v1020 = vand.u32 %v1019, 4294901760
    %1021 = vmatpush1.msra.mxu0 %v1020
    %1022 = vmatprep.subr.mxu0 0.0
    %v1023 = vand.u32 %v135, 4294901760
    %v1024 = vsub.f32 %v135, %v1023
    %v1025 = vand.u32 %v1024, 4294901760
    %1026 = vmatpush1.msra.mxu0 %v1025
    %1027 = vmatprep.subr.mxu0 0.0
    %v1028 = vand.u32 %v136, 4294901760
    %v1029 = vsub.f32 %v136, %v1028
    %v1030 = vand.u32 %v1029, 4294901760
    %1031 = vmatpush1.msra.mxu0 %v1030
    %1032 = vmatprep.subr.mxu0 0.0
    %v1033 = vand.u32 %v137, 4294901760
    %v1034 = vsub.f32 %v137, %v1033
    %v1035 = vand.u32 %v1034, 4294901760
    %1036 = vmatpush1.msra.mxu0 %v1035
    %1037 = vmatprep.subr.mxu0 0.0
    %v1038 = vand.u32 %v138, 4294901760
    %v1039 = vsub.f32 %v138, %v1038
    %v1040 = vand.u32 %v1039, 4294901760
    %1041 = vmatpush1.msra.mxu0 %v1040
    %v1042 = vand.u32 %v103, 4294901760
    %1043 = vmatprep.mubr.f32.mxu0 %v1042
    %v1044 = vand.u32 %v99, 4294901760
    %1045 = vmatmul.mubr.f32.gmra.mrb[0].mxu0 %v1044
    %v1046 = vpop.f32.mrb[0].mxu0
    %v1047 = vadd.f32 %v846, %v1046
    %v1048 = vpop.f32.mrb[0].mxu0
    %v1049 = vand.u32 %v104, 4294901760
    %1050 = vmatprep.mubr.f32.mxu0 %v1049
    %v1051 = vand.u32 %v100, 4294901760
    %1052 = vmatmul.mubr.f32.gmra.mrb[0].mxu0 %v1051
    %v1053 = vpop.f32.mrb[0].mxu0
    %v1054 = vadd.f32 %v857, %v1053
    %v1055 = vpop.f32.mrb[0].mxu0
    %v1056 = vand.u32 %v105, 4294901760
    %1057 = vmatprep.mubr.f32.mxu0 %v1056
    %v1058 = vand.u32 %v101, 4294901760
    %1059 = vmatmul.mubr.f32.gmra.mrb[0].mxu0 %v1058
    %v1060 = vpop.f32.mrb[0].mxu0
    %v1061 = vadd.f32 %v868, %v1060
    %v1062 = vpop.f32.mrb[0].mxu0
    %v1063 = vand.u32 %v106, 4294901760
    %1064 = vmatprep.mubr.f32.mxu0 %v1063
    %v1065 = vand.u32 %v102, 4294901760
    %1066 = vmatmul.mubr.f32.gmra.mrb[0].mxu0 %v1065
    %v1067 = vpop.f32.mrb[0].mxu0
    %v1068 = vadd.f32 %v879, %v1067
    %v1069 = vpop.f32.mrb[0].mxu0
    %1070 = vdwg.mxu0
    %1071 = vmatprep.subr.mxu0 0.0
    %v1072 = vand.u32 %v107, 4294901760
    %1073 = vmatpush1.msra.mxu0 %v1072
    %1074 = vmatprep.subr.mxu0 0.0
    %v1075 = vand.u32 %v108, 4294901760
    %1076 = vmatpush1.msra.mxu0 %v1075
    %1077 = vmatprep.subr.mxu0 0.0
    %v1078 = vand.u32 %v109, 4294901760
    %1079 = vmatpush1.msra.mxu0 %v1078
    %1080 = vmatprep.subr.mxu0 0.0
    %v1081 = vand.u32 %v110, 4294901760
    %1082 = vmatpush1.msra.mxu0 %v1081
    %1083 = vmatprep.subr.mxu0 0.0
    %v1084 = vand.u32 %v111, 4294901760
    %1085 = vmatpush1.msra.mxu0 %v1084
    %1086 = vmatprep.subr.mxu0 0.0
    %v1087 = vand.u32 %v112, 4294901760
    %1088 = vmatpush1.msra.mxu0 %v1087
    %1089 = vmatprep.subr.mxu0 0.0
    %v1090 = vand.u32 %v113, 4294901760
    %1091 = vmatpush1.msra.mxu0 %v1090
    %1092 = vmatprep.subr.mxu0 0.0
    %v1093 = vand.u32 %v114, 4294901760
    %1094 = vmatpush1.msra.mxu0 %v1093
    %1095 = vmatprep.subr.mxu0 0.0
    %v1096 = vand.u32 %v115, 4294901760
    %1097 = vmatpush1.msra.mxu0 %v1096
    %1098 = vmatprep.subr.mxu0 0.0
    %v1099 = vand.u32 %v116, 4294901760
    %1100 = vmatpush1.msra.mxu0 %v1099
    %1101 = vmatprep.subr.mxu0 0.0
    %v1102 = vand.u32 %v117, 4294901760
    %1103 = vmatpush1.msra.mxu0 %v1102
    %1104 = vmatprep.subr.mxu0 0.0
    %v1105 = vand.u32 %v118, 4294901760
    %1106 = vmatpush1.msra.mxu0 %v1105
    %1107 = vmatprep.subr.mxu0 0.0
    %v1108 = vand.u32 %v119, 4294901760
    %1109 = vmatpush1.msra.mxu0 %v1108
    %1110 = vmatprep.subr.mxu0 0.0
    %v1111 = vand.u32 %v120, 4294901760
    %1112 = vmatpush1.msra.mxu0 %v1111
    %1113 = vmatprep.subr.mxu0 0.0
    %v1114 = vand.u32 %v121, 4294901760
    %1115 = vmatpush1.msra.mxu0 %v1114
    %1116 = vmatprep.subr.mxu0 0.0
    %v1117 = vand.u32 %v122, 4294901760
    %1118 = vmatpush1.msra.mxu0 %v1117
    %1119 = vmatprep.subr.mxu0 0.0
    %v1120 = vand.u32 %v123, 4294901760
    %1121 = vmatpush1.msra.mxu0 %v1120
    %1122 = vmatprep.subr.mxu0 0.0
    %v1123 = vand.u32 %v124, 4294901760
    %1124 = vmatpush1.msra.mxu0 %v1123
    %1125 = vmatprep.subr.mxu0 0.0
    %v1126 = vand.u32 %v125, 4294901760
    %1127 = vmatpush1.msra.mxu0 %v1126
    %1128 = vmatprep.subr.mxu0 0.0
    %v1129 = vand.u32 %v126, 4294901760
    %1130 = vmatpush1.msra.mxu0 %v1129
    %1131 = vmatprep.subr.mxu0 0.0
    %v1132 = vand.u32 %v127, 4294901760
    %1133 = vmatpush1.msra.mxu0 %v1132
    %1134 = vmatprep.subr.mxu0 0.0
    %v1135 = vand.u32 %v128, 4294901760
    %1136 = vmatpush1.msra.mxu0 %v1135
    %1137 = vmatprep.subr.mxu0 0.0
    %v1138 = vand.u32 %v129, 4294901760
    %1139 = vmatpush1.msra.mxu0 %v1138
    %1140 = vmatprep.subr.mxu0 0.0
    %v1141 = vand.u32 %v130, 4294901760
    %1142 = vmatpush1.msra.mxu0 %v1141
    %1143 = vmatprep.subr.mxu0 0.0
    %v1144 = vand.u32 %v131, 4294901760
    %1145 = vmatpush1.msra.mxu0 %v1144
    %1146 = vmatprep.subr.mxu0 0.0
    %v1147 = vand.u32 %v132, 4294901760
    %1148 = vmatpush1.msra.mxu0 %v1147
    %1149 = vmatprep.subr.mxu0 0.0
    %v1150 = vand.u32 %v133, 4294901760
    %1151 = vmatpush1.msra.mxu0 %v1150
    %1152 = vmatprep.subr.mxu0 0.0
    %v1153 = vand.u32 %v134, 4294901760
    %1154 = vmatpush1.msra.mxu0 %v1153
    %1155 = vmatprep.subr.mxu0 0.0
    %v1156 = vand.u32 %v135, 4294901760
    %1157 = vmatpush1.msra.mxu0 %v1156
    %1158 = vmatprep.subr.mxu0 0.0
    %v1159 = vand.u32 %v136, 4294901760
    %1160 = vmatpush1.msra.mxu0 %v1159
    %1161 = vmatprep.subr.mxu0 0.0
    %v1162 = vand.u32 %v137, 4294901760
    %1163 = vmatpush1.msra.mxu0 %v1162
    %1164 = vmatprep.subr.mxu0 0.0
    %v1165 = vand.u32 %v138, 4294901760
    %1166 = vmatpush1.msra.mxu0 %v1165
    %v1167 = vand.u32 %v103, 4294901760
    %1168 = vmatprep.mubr.f32.mxu0 %v1167
    %v1169 = vand.u32 %v99, 4294901760
    %1170 = vmatmul.mubr.f32.gmra.mrb[0].mxu0 %v1169
    %v1171 = vpop.f32.mrb[0].mxu0
    %v1172 = vadd.f32 %v1047, %v1171
    %v1173 = vpop.f32.mrb[0].mxu0
    %v1174 = vand.u32 %v104, 4294901760
    %1175 = vmatprep.mubr.f32.mxu0 %v1174
    %v1176 = vand.u32 %v100, 4294901760
    %1177 = vmatmul.mubr.f32.gmra.mrb[0].mxu0 %v1176
    %v1178 = vpop.f32.mrb[0].mxu0
    %v1179 = vadd.f32 %v1054, %v1178
    %v1180 = vpop.f32.mrb[0].mxu0
    %v1181 = vand.u32 %v105, 4294901760
    %1182 = vmatprep.mubr.f32.mxu0 %v1181
    %v1183 = vand.u32 %v101, 4294901760
    %1184 = vmatmul.mubr.f32.gmra.mrb[0].mxu0 %v1183
    %v1185 = vpop.f32.mrb[0].mxu0
    %v1186 = vadd.f32 %v1061, %v1185
    %v1187 = vpop.f32.mrb[0].mxu0
    %v1188 = vand.u32 %v106, 4294901760
    %1189 = vmatprep.mubr.f32.mxu0 %v1188
    %v1190 = vand.u32 %v102, 4294901760
    %1191 = vmatmul.mubr.f32.gmra.mrb[0].mxu0 %v1190
    %v1192 = vpop.f32.mrb[0].mxu0
    %v1193 = vadd.f32 %v1068, %v1192
    %v1194 = vpop.f32.mrb[0].mxu0
    %1195 = vdwg.mxu0
    %1196 = vmatprep.subr.mxu0 0.0
    %v1197 = vand.u32 %v139, 4294901760
    %1198 = vmatpush1.msra.mxu0 %v1197
    %1199 = vmatprep.subr.mxu0 0.0
    %v1200 = vand.u32 %v140, 4294901760
    %1201 = vmatpush1.msra.mxu0 %v1200
    %1202 = vmatprep.subr.mxu0 0.0
    %v1203 = vand.u32 %v141, 4294901760
    %1204 = vmatpush1.msra.mxu0 %v1203
    %1205 = vmatprep.subr.mxu0 0.0
    %v1206 = vand.u32 %v142, 4294901760
    %1207 = vmatpush1.msra.mxu0 %v1206
    %1208 = vmatprep.subr.mxu0 0.0
    %v1209 = vand.u32 %v143, 4294901760
    %1210 = vmatpush1.msra.mxu0 %v1209
    %1211 = vmatprep.subr.mxu0 0.0
    %v1212 = vand.u32 %v144, 4294901760
    %1213 = vmatpush1.msra.mxu0 %v1212
    %1214 = vmatprep.subr.mxu0 0.0
    %v1215 = vand.u32 %v145, 4294901760
    %1216 = vmatpush1.msra.mxu0 %v1215
    %1217 = vmatprep.subr.mxu0 0.0
    %v1218 = vand.u32 %v146, 4294901760
    %1219 = vmatpush1.msra.mxu0 %v1218
    %1220 = vmatprep.subr.mxu0 0.0
    %1221 = vmatpush1.msra.mxu0 0.0
    %1222 = vmatprep.subr.mxu0 0.0
    %1223 = vmatpush1.msra.mxu0 0.0
    %1224 = vmatprep.subr.mxu0 0.0
    %1225 = vmatpush1.msra.mxu0 0.0
    %1226 = vmatprep.subr.mxu0 0.0
    %1227 = vmatpush1.msra.mxu0 0.0
    %1228 = vmatprep.subr.mxu0 0.0
    %1229 = vmatpush1.msra.mxu0 0.0
    %1230 = vmatprep.subr.mxu0 0.0
    %1231 = vmatpush1.msra.mxu0 0.0
    %1232 = vmatprep.subr.mxu0 0.0
    %1233 = vmatpush1.msra.mxu0 0.0
    %1234 = vmatprep.subr.mxu0 0.0
    %1235 = vmatpush1.msra.mxu0 0.0
    %1236 = vmatprep.subr.mxu0 0.0
    %1237 = vmatpush1.msra.mxu0 0.0
    %1238 = vmatprep.subr.mxu0 0.0
    %1239 = vmatpush1.msra.mxu0 0.0
    %1240 = vmatprep.subr.mxu0 0.0
    %1241 = vmatpush1.msra.mxu0 0.0
    %1242 = vmatprep.subr.mxu0 0.0
    %1243 = vmatpush1.msra.mxu0 0.0
    %1244 = vmatprep.subr.mxu0 0.0
    %1245 = vmatpush1.msra.mxu0 0.0
    %1246 = vmatprep.subr.mxu0 0.0
    %1247 = vmatpush1.msra.mxu0 0.0
    %1248 = vmatprep.subr.mxu0 0.0
    %1249 = vmatpush1.msra.mxu0 0.0
    %1250 = vmatprep.subr.mxu0 0.0
    %1251 = vmatpush1.msra.mxu0 0.0
    %1252 = vmatprep.subr.mxu0 0.0
    %1253 = vmatpush1.msra.mxu0 0.0
    %1254 = vmatprep.subr.mxu0 0.0
    %1255 = vmatpush1.msra.mxu0 0.0
    %1256 = vmatprep.subr.mxu0 0.0
    %1257 = vmatpush1.msra.mxu0 0.0
    %1258 = vmatprep.subr.mxu0 0.0
    %1259 = vmatpush1.msra.mxu0 0.0
    %1260 = vmatprep.subr.mxu0 0.0
    %1261 = vmatpush1.msra.mxu0 0.0
    %1262 = vmatprep.subr.mxu0 0.0
    %1263 = vmatpush1.msra.mxu0 0.0
    %1264 = vmatprep.subr.mxu0 0.0
    %1265 = vmatpush1.msra.mxu0 0.0
    %1266 = vmatprep.subr.mxu0 0.0
    %1267 = vmatpush1.msra.mxu0 0.0
    %1268 = vmatprep.mubr.f32.mxu0 0.0
    %v1269 = vand.u32 %v155, 4294901760
    %v1270 = vsub.f32 %v155, %v1269
    %v1271 = vand.u32 %v1270, 4294901760
    %v1272 = vsub.f32 %v1270, %v1271
    %v1273 = vand.u32 %v1272, 4294901760
    %1274 = vmatmul.mubr.f32.gmra.mrb[0].mxu0 %v1273
    %v1275 = vpop.f32.mrb[0].mxu0
    %v1276 = vadd.f32 %v1172, %v1275
    %v1277 = vpop.f32.mrb[0].mxu0
    %1278 = vmatprep.mubr.f32.mxu0 0.0
    %v1279 = vand.u32 %v158, 4294901760
    %v1280 = vsub.f32 %v158, %v1279
    %v1281 = vand.u32 %v1280, 4294901760
    %v1282 = vsub.f32 %v1280, %v1281
    %v1283 = vand.u32 %v1282, 4294901760
    %1284 = vmatmul.mubr.f32.gmra.mrb[0].mxu0 %v1283
    %v1285 = vpop.f32.mrb[0].mxu0
    %v1286 = vadd.f32 %v1179, %v1285
    %v1287 = vpop.f32.mrb[0].mxu0
    %1288 = vmatprep.mubr.f32.mxu0 0.0
    %v1289 = vand.u32 %v161, 4294901760
    %v1290 = vsub.f32 %v161, %v1289
    %v1291 = vand.u32 %v1290, 4294901760
    %v1292 = vsub.f32 %v1290, %v1291
    %v1293 = vand.u32 %v1292, 4294901760
    %1294 = vmatmul.mubr.f32.gmra.mrb[0].mxu0 %v1293
    %v1295 = vpop.f32.mrb[0].mxu0
    %v1296 = vadd.f32 %v1186, %v1295
    %v1297 = vpop.f32.mrb[0].mxu0
    %1298 = vmatprep.mubr.f32.mxu0 0.0
    %v1299 = vand.u32 %v164, 4294901760
    %v1300 = vsub.f32 %v164, %v1299
    %v1301 = vand.u32 %v1300, 4294901760
    %v1302 = vsub.f32 %v1300, %v1301
    %v1303 = vand.u32 %v1302, 4294901760
    %1304 = vmatmul.mubr.f32.gmra.mrb[0].mxu0 %v1303
    %v1305 = vpop.f32.mrb[0].mxu0
    %v1306 = vadd.f32 %v1193, %v1305
    %v1307 = vpop.f32.mrb[0].mxu0
    %1308 = vdwg.mxu0
    %1309 = vmatprep.subr.mxu0 0.0
    %v1310 = vand.u32 %v139, 4294901760
    %v1311 = vsub.f32 %v139, %v1310
    %v1312 = vand.u32 %v1311, 4294901760
    %v1313 = vsub.f32 %v1311, %v1312
    %v1314 = vand.u32 %v1313, 4294901760
    %1315 = vmatpush1.msra.mxu0 %v1314
    %1316 = vmatprep.subr.mxu0 0.0
    %v1317 = vand.u32 %v140, 4294901760
    %v1318 = vsub.f32 %v140, %v1317
    %v1319 = vand.u32 %v1318, 4294901760
    %v1320 = vsub.f32 %v1318, %v1319
    %v1321 = vand.u32 %v1320, 4294901760
    %1322 = vmatpush1.msra.mxu0 %v1321
    %1323 = vmatprep.subr.mxu0 0.0
    %v1324 = vand.u32 %v141, 4294901760
    %v1325 = vsub.f32 %v141, %v1324
    %v1326 = vand.u32 %v1325, 4294901760
    %v1327 = vsub.f32 %v1325, %v1326
    %v1328 = vand.u32 %v1327, 4294901760
    %1329 = vmatpush1.msra.mxu0 %v1328
    %1330 = vmatprep.subr.mxu0 0.0
    %v1331 = vand.u32 %v142, 4294901760
    %v1332 = vsub.f32 %v142, %v1331
    %v1333 = vand.u32 %v1332, 4294901760
    %v1334 = vsub.f32 %v1332, %v1333
    %v1335 = vand.u32 %v1334, 4294901760
    %1336 = vmatpush1.msra.mxu0 %v1335
    %1337 = vmatprep.subr.mxu0 0.0
    %v1338 = vand.u32 %v143, 4294901760
    %v1339 = vsub.f32 %v143, %v1338
    %v1340 = vand.u32 %v1339, 4294901760
    %v1341 = vsub.f32 %v1339, %v1340
    %v1342 = vand.u32 %v1341, 4294901760
    %1343 = vmatpush1.msra.mxu0 %v1342
    %1344 = vmatprep.subr.mxu0 0.0
    %v1345 = vand.u32 %v144, 4294901760
    %v1346 = vsub.f32 %v144, %v1345
    %v1347 = vand.u32 %v1346, 4294901760
    %v1348 = vsub.f32 %v1346, %v1347
    %v1349 = vand.u32 %v1348, 4294901760
    %1350 = vmatpush1.msra.mxu0 %v1349
    %1351 = vmatprep.subr.mxu0 0.0
    %v1352 = vand.u32 %v145, 4294901760
    %v1353 = vsub.f32 %v145, %v1352
    %v1354 = vand.u32 %v1353, 4294901760
    %v1355 = vsub.f32 %v1353, %v1354
    %v1356 = vand.u32 %v1355, 4294901760
    %1357 = vmatpush1.msra.mxu0 %v1356
    %1358 = vmatprep.subr.mxu0 0.0
    %v1359 = vand.u32 %v146, 4294901760
    %v1360 = vsub.f32 %v146, %v1359
    %v1361 = vand.u32 %v1360, 4294901760
    %v1362 = vsub.f32 %v1360, %v1361
    %v1363 = vand.u32 %v1362, 4294901760
    %1364 = vmatpush1.msra.mxu0 %v1363
    %1365 = vmatprep.subr.mxu0 0.0
    %1366 = vmatpush1.msra.mxu0 0.0
    %1367 = vmatprep.subr.mxu0 0.0
    %1368 = vmatpush1.msra.mxu0 0.0
    %1369 = vmatprep.subr.mxu0 0.0
    %1370 = vmatpush1.msra.mxu0 0.0
    %1371 = vmatprep.subr.mxu0 0.0
    %1372 = vmatpush1.msra.mxu0 0.0
    %1373 = vmatprep.subr.mxu0 0.0
    %1374 = vmatpush1.msra.mxu0 0.0
    %1375 = vmatprep.subr.mxu0 0.0
    %1376 = vmatpush1.msra.mxu0 0.0
    %1377 = vmatprep.subr.mxu0 0.0
    %1378 = vmatpush1.msra.mxu0 0.0
    %1379 = vmatprep.subr.mxu0 0.0
    %1380 = vmatpush1.msra.mxu0 0.0
    %1381 = vmatprep.subr.mxu0 0.0
    %1382 = vmatpush1.msra.mxu0 0.0
    %1383 = vmatprep.subr.mxu0 0.0
    %1384 = vmatpush1.msra.mxu0 0.0
    %1385 = vmatprep.subr.mxu0 0.0
    %1386 = vmatpush1.msra.mxu0 0.0
    %1387 = vmatprep.subr.mxu0 0.0
    %1388 = vmatpush1.msra.mxu0 0.0
    %1389 = vmatprep.subr.mxu0 0.0
    %1390 = vmatpush1.msra.mxu0 0.0
    %1391 = vmatprep.subr.mxu0 0.0
    %1392 = vmatpush1.msra.mxu0 0.0
    %1393 = vmatprep.subr.mxu0 0.0
    %1394 = vmatpush1.msra.mxu0 0.0
    %1395 = vmatprep.subr.mxu0 0.0
    %1396 = vmatpush1.msra.mxu0 0.0
    %1397 = vmatprep.subr.mxu0 0.0
    %1398 = vmatpush1.msra.mxu0 0.0
    %1399 = vmatprep.subr.mxu0 0.0
    %1400 = vmatpush1.msra.mxu0 0.0
    %1401 = vmatprep.subr.mxu0 0.0
    %1402 = vmatpush1.msra.mxu0 0.0
    %1403 = vmatprep.subr.mxu0 0.0
    %1404 = vmatpush1.msra.mxu0 0.0
    %1405 = vmatprep.subr.mxu0 0.0
    %1406 = vmatpush1.msra.mxu0 0.0
    %1407 = vmatprep.subr.mxu0 0.0
    %1408 = vmatpush1.msra.mxu0 0.0
    %1409 = vmatprep.subr.mxu0 0.0
    %1410 = vmatpush1.msra.mxu0 0.0
    %1411 = vmatprep.subr.mxu0 0.0
    %1412 = vmatpush1.msra.mxu0 0.0
    %1413 = vmatprep.mubr.f32.mxu0 0.0
    %v1414 = vand.u32 %v155, 4294901760
    %1415 = vmatmul.mubr.f32.gmra.mrb[0].mxu0 %v1414
    %v1416 = vpop.f32.mrb[0].mxu0
    %v1417 = vadd.f32 %v1276, %v1416
    %v1418 = vpop.f32.mrb[0].mxu0
    %1419 = vmatprep.mubr.f32.mxu0 0.0
    %v1420 = vand.u32 %v158, 4294901760
    %1421 = vmatmul.mubr.f32.gmra.mrb[0].mxu0 %v1420
    %v1422 = vpop.f32.mrb[0].mxu0
    %v1423 = vadd.f32 %v1286, %v1422
    %v1424 = vpop.f32.mrb[0].mxu0
    %1425 = vmatprep.mubr.f32.mxu0 0.0
    %v1426 = vand.u32 %v161, 4294901760
    %1427 = vmatmul.mubr.f32.gmra.mrb[0].mxu0 %v1426
    %v1428 = vpop.f32.mrb[0].mxu0
    %v1429 = vadd.f32 %v1296, %v1428
    %v1430 = vpop.f32.mrb[0].mxu0
    %1431 = vmatprep.mubr.f32.mxu0 0.0
    %v1432 = vand.u32 %v164, 4294901760
    %1433 = vmatmul.mubr.f32.gmra.mrb[0].mxu0 %v1432
    %v1434 = vpop.f32.mrb[0].mxu0
    %v1435 = vadd.f32 %v1306, %v1434
    %v1436 = vpop.f32.mrb[0].mxu0
    %1437 = vdwg.mxu0
    %1438 = vmatprep.subr.mxu0 0.0
    %v1439 = vand.u32 %v139, 4294901760
    %v1440 = vsub.f32 %v139, %v1439
    %1441 = vmatpush1.msra.mxu0 %v1440
    %1442 = vmatprep.subr.mxu0 0.0
    %v1443 = vand.u32 %v140, 4294901760
    %v1444 = vsub.f32 %v140, %v1443
    %1445 = vmatpush1.msra.mxu0 %v1444
    %1446 = vmatprep.subr.mxu0 0.0
    %v1447 = vand.u32 %v141, 4294901760
    %v1448 = vsub.f32 %v141, %v1447
    %1449 = vmatpush1.msra.mxu0 %v1448
    %1450 = vmatprep.subr.mxu0 0.0
    %v1451 = vand.u32 %v142, 4294901760
    %v1452 = vsub.f32 %v142, %v1451
    %1453 = vmatpush1.msra.mxu0 %v1452
    %1454 = vmatprep.subr.mxu0 0.0
    %v1455 = vand.u32 %v143, 4294901760
    %v1456 = vsub.f32 %v143, %v1455
    %1457 = vmatpush1.msra.mxu0 %v1456
    %1458 = vmatprep.subr.mxu0 0.0
    %v1459 = vand.u32 %v144, 4294901760
    %v1460 = vsub.f32 %v144, %v1459
    %1461 = vmatpush1.msra.mxu0 %v1460
    %1462 = vmatprep.subr.mxu0 0.0
    %v1463 = vand.u32 %v145, 4294901760
    %v1464 = vsub.f32 %v145, %v1463
    %1465 = vmatpush1.msra.mxu0 %v1464
    %1466 = vmatprep.subr.mxu0 0.0
    %v1467 = vand.u32 %v146, 4294901760
    %v1468 = vsub.f32 %v146, %v1467
    %1469 = vmatpush1.msra.mxu0 %v1468
    %1470 = vmatprep.subr.mxu0 0.0
    %1471 = vmatpush1.msra.mxu0 0.0
    %1472 = vmatprep.subr.mxu0 0.0
    %1473 = vmatpush1.msra.mxu0 0.0
    %1474 = vmatprep.subr.mxu0 0.0
    %1475 = vmatpush1.msra.mxu0 0.0
    %1476 = vmatprep.subr.mxu0 0.0
    %1477 = vmatpush1.msra.mxu0 0.0
    %1478 = vmatprep.subr.mxu0 0.0
    %1479 = vmatpush1.msra.mxu0 0.0
    %1480 = vmatprep.subr.mxu0 0.0
    %1481 = vmatpush1.msra.mxu0 0.0
    %1482 = vmatprep.subr.mxu0 0.0
    %1483 = vmatpush1.msra.mxu0 0.0
    %1484 = vmatprep.subr.mxu0 0.0
    %1485 = vmatpush1.msra.mxu0 0.0
    %1486 = vmatprep.subr.mxu0 0.0
    %1487 = vmatpush1.msra.mxu0 0.0
    %1488 = vmatprep.subr.mxu0 0.0
    %1489 = vmatpush1.msra.mxu0 0.0
    %1490 = vmatprep.subr.mxu0 0.0
    %1491 = vmatpush1.msra.mxu0 0.0
    %1492 = vmatprep.subr.mxu0 0.0
    %1493 = vmatpush1.msra.mxu0 0.0
    %1494 = vmatprep.subr.mxu0 0.0
    %1495 = vmatpush1.msra.mxu0 0.0
    %1496 = vmatprep.subr.mxu0 0.0
    %1497 = vmatpush1.msra.mxu0 0.0
    %1498 = vmatprep.subr.mxu0 0.0
    %1499 = vmatpush1.msra.mxu0 0.0
    %1500 = vmatprep.subr.mxu0 0.0
    %1501 = vmatpush1.msra.mxu0 0.0
    %1502 = vmatprep.subr.mxu0 0.0
    %1503 = vmatpush1.msra.mxu0 0.0
    %1504 = vmatprep.subr.mxu0 0.0
    %1505 = vmatpush1.msra.mxu0 0.0
    %1506 = vmatprep.subr.mxu0 0.0
    %1507 = vmatpush1.msra.mxu0 0.0
    %1508 = vmatprep.subr.mxu0 0.0
    %1509 = vmatpush1.msra.mxu0 0.0
    %1510 = vmatprep.subr.mxu0 0.0
    %1511 = vmatpush1.msra.mxu0 0.0
    %1512 = vmatprep.subr.mxu0 0.0
    %1513 = vmatpush1.msra.mxu0 0.0
    %1514 = vmatprep.subr.mxu0 0.0
    %1515 = vmatpush1.msra.mxu0 0.0
    %1516 = vmatprep.subr.mxu0 0.0
    %1517 = vmatpush1.msra.mxu0 0.0
    %1518 = vmatprep.mubr.f32.mxu0 0.0
    %v1519 = vand.u32 %v155, 4294901760
    %v1520 = vsub.f32 %v155, %v1519
    %1521 = vmatmul.mubr.f32.gmra.mrb[0].mxu0 %v1520
    %v1522 = vpop.f32.mrb[0].mxu0
    %v1523 = vadd.f32 %v1417, %v1522
    %v1524 = vpop.f32.mrb[0].mxu0
    %1525 = vmatprep.mubr.f32.mxu0 0.0
    %v1526 = vand.u32 %v158, 4294901760
    %v1527 = vsub.f32 %v158, %v1526
    %1528 = vmatmul.mubr.f32.gmra.mrb[0].mxu0 %v1527
    %v1529 = vpop.f32.mrb[0].mxu0
    %v1530 = vadd.f32 %v1423, %v1529
    %v1531 = vpop.f32.mrb[0].mxu0
    %1532 = vmatprep.mubr.f32.mxu0 0.0
    %v1533 = vand.u32 %v161, 4294901760
    %v1534 = vsub.f32 %v161, %v1533
    %1535 = vmatmul.mubr.f32.gmra.mrb[0].mxu0 %v1534
    %v1536 = vpop.f32.mrb[0].mxu0
    %v1537 = vadd.f32 %v1429, %v1536
    %v1538 = vpop.f32.mrb[0].mxu0
    %1539 = vmatprep.mubr.f32.mxu0 0.0
    %v1540 = vand.u32 %v164, 4294901760
    %v1541 = vsub.f32 %v164, %v1540
    %1542 = vmatmul.mubr.f32.gmra.mrb[0].mxu0 %v1541
    %v1543 = vpop.f32.mrb[0].mxu0
    %v1544 = vadd.f32 %v1435, %v1543
    %v1545 = vpop.f32.mrb[0].mxu0
    %1546 = vdwg.mxu0
    %1547 = vmatprep.subr.mxu0 0.0
    %v1548 = vand.u32 %v139, 4294901760
    %1549 = vmatpush1.msra.mxu0 %v1548
    %1550 = vmatprep.subr.mxu0 0.0
    %v1551 = vand.u32 %v140, 4294901760
    %1552 = vmatpush1.msra.mxu0 %v1551
    %1553 = vmatprep.subr.mxu0 0.0
    %v1554 = vand.u32 %v141, 4294901760
    %1555 = vmatpush1.msra.mxu0 %v1554
    %1556 = vmatprep.subr.mxu0 0.0
    %v1557 = vand.u32 %v142, 4294901760
    %1558 = vmatpush1.msra.mxu0 %v1557
    %1559 = vmatprep.subr.mxu0 0.0
    %v1560 = vand.u32 %v143, 4294901760
    %1561 = vmatpush1.msra.mxu0 %v1560
    %1562 = vmatprep.subr.mxu0 0.0
    %v1563 = vand.u32 %v144, 4294901760
    %1564 = vmatpush1.msra.mxu0 %v1563
    %1565 = vmatprep.subr.mxu0 0.0
    %v1566 = vand.u32 %v145, 4294901760
    %1567 = vmatpush1.msra.mxu0 %v1566
    %1568 = vmatprep.subr.mxu0 0.0
    %v1569 = vand.u32 %v146, 4294901760
    %1570 = vmatpush1.msra.mxu0 %v1569
    %1571 = vmatprep.subr.mxu0 0.0
    %1572 = vmatpush1.msra.mxu0 0.0
    %1573 = vmatprep.subr.mxu0 0.0
    %1574 = vmatpush1.msra.mxu0 0.0
    %1575 = vmatprep.subr.mxu0 0.0
    %1576 = vmatpush1.msra.mxu0 0.0
    %1577 = vmatprep.subr.mxu0 0.0
    %1578 = vmatpush1.msra.mxu0 0.0
    %1579 = vmatprep.subr.mxu0 0.0
    %1580 = vmatpush1.msra.mxu0 0.0
    %1581 = vmatprep.subr.mxu0 0.0
    %1582 = vmatpush1.msra.mxu0 0.0
    %1583 = vmatprep.subr.mxu0 0.0
    %1584 = vmatpush1.msra.mxu0 0.0
    %1585 = vmatprep.subr.mxu0 0.0
    %1586 = vmatpush1.msra.mxu0 0.0
    %1587 = vmatprep.subr.mxu0 0.0
    %1588 = vmatpush1.msra.mxu0 0.0
    %1589 = vmatprep.subr.mxu0 0.0
    %1590 = vmatpush1.msra.mxu0 0.0
    %1591 = vmatprep.subr.mxu0 0.0
    %1592 = vmatpush1.msra.mxu0 0.0
    %1593 = vmatprep.subr.mxu0 0.0
    %1594 = vmatpush1.msra.mxu0 0.0
    %1595 = vmatprep.subr.mxu0 0.0
    %1596 = vmatpush1.msra.mxu0 0.0
    %1597 = vmatprep.subr.mxu0 0.0
    %1598 = vmatpush1.msra.mxu0 0.0
    %1599 = vmatprep.subr.mxu0 0.0
    %1600 = vmatpush1.msra.mxu0 0.0
    %1601 = vmatprep.subr.mxu0 0.0
    %1602 = vmatpush1.msra.mxu0 0.0
    %1603 = vmatprep.subr.mxu0 0.0
    %1604 = vmatpush1.msra.mxu0 0.0
    %1605 = vmatprep.subr.mxu0 0.0
    %1606 = vmatpush1.msra.mxu0 0.0
    %1607 = vmatprep.subr.mxu0 0.0
    %1608 = vmatpush1.msra.mxu0 0.0
    %1609 = vmatprep.subr.mxu0 0.0
    %1610 = vmatpush1.msra.mxu0 0.0
    %1611 = vmatprep.subr.mxu0 0.0
    %1612 = vmatpush1.msra.mxu0 0.0
    %1613 = vmatprep.subr.mxu0 0.0
    %1614 = vmatpush1.msra.mxu0 0.0
    %1615 = vmatprep.subr.mxu0 0.0
    %1616 = vmatpush1.msra.mxu0 0.0
    %1617 = vmatprep.subr.mxu0 0.0
    %1618 = vmatpush1.msra.mxu0 0.0
    %1619 = vmatprep.mubr.f32.mxu0 0.0
    %v1620 = vand.u32 %v155, 4294901760
    %v1621 = vsub.f32 %v155, %v1620
    %v1622 = vand.u32 %v1621, 4294901760
    %1623 = vmatmul.mubr.f32.gmra.mrb[0].mxu0 %v1622
    %v1624 = vpop.f32.mrb[0].mxu0
    %v1625 = vadd.f32 %v1523, %v1624
    %v1626 = vpop.f32.mrb[0].mxu0
    %1627 = vmatprep.mubr.f32.mxu0 0.0
    %v1628 = vand.u32 %v158, 4294901760
    %v1629 = vsub.f32 %v158, %v1628
    %v1630 = vand.u32 %v1629, 4294901760
    %1631 = vmatmul.mubr.f32.gmra.mrb[0].mxu0 %v1630
    %v1632 = vpop.f32.mrb[0].mxu0
    %v1633 = vadd.f32 %v1530, %v1632
    %v1634 = vpop.f32.mrb[0].mxu0
    %1635 = vmatprep.mubr.f32.mxu0 0.0
    %v1636 = vand.u32 %v161, 4294901760
    %v1637 = vsub.f32 %v161, %v1636
    %v1638 = vand.u32 %v1637, 4294901760
    %1639 = vmatmul.mubr.f32.gmra.mrb[0].mxu0 %v1638
    %v1640 = vpop.f32.mrb[0].mxu0
    %v1641 = vadd.f32 %v1537, %v1640
    %v1642 = vpop.f32.mrb[0].mxu0
    %1643 = vmatprep.mubr.f32.mxu0 0.0
    %v1644 = vand.u32 %v164, 4294901760
    %v1645 = vsub.f32 %v164, %v1644
    %v1646 = vand.u32 %v1645, 4294901760
    %1647 = vmatmul.mubr.f32.gmra.mrb[0].mxu0 %v1646
    %v1648 = vpop.f32.mrb[0].mxu0
    %v1649 = vadd.f32 %v1544, %v1648
    %v1650 = vpop.f32.mrb[0].mxu0
    %1651 = vdwg.mxu0
    %1652 = vmatprep.subr.mxu0 0.0
    %v1653 = vand.u32 %v139, 4294901760
    %v1654 = vsub.f32 %v139, %v1653
    %v1655 = vand.u32 %v1654, 4294901760
    %1656 = vmatpush1.msra.mxu0 %v1655
    %1657 = vmatprep.subr.mxu0 0.0
    %v1658 = vand.u32 %v140, 4294901760
    %v1659 = vsub.f32 %v140, %v1658
    %v1660 = vand.u32 %v1659, 4294901760
    %1661 = vmatpush1.msra.mxu0 %v1660
    %1662 = vmatprep.subr.mxu0 0.0
    %v1663 = vand.u32 %v141, 4294901760
    %v1664 = vsub.f32 %v141, %v1663
    %v1665 = vand.u32 %v1664, 4294901760
    %1666 = vmatpush1.msra.mxu0 %v1665
    %1667 = vmatprep.subr.mxu0 0.0
    %v1668 = vand.u32 %v142, 4294901760
    %v1669 = vsub.f32 %v142, %v1668
    %v1670 = vand.u32 %v1669, 4294901760
    %1671 = vmatpush1.msra.mxu0 %v1670
    %1672 = vmatprep.subr.mxu0 0.0
    %v1673 = vand.u32 %v143, 4294901760
    %v1674 = vsub.f32 %v143, %v1673
    %v1675 = vand.u32 %v1674, 4294901760
    %1676 = vmatpush1.msra.mxu0 %v1675
    %1677 = vmatprep.subr.mxu0 0.0
    %v1678 = vand.u32 %v144, 4294901760
    %v1679 = vsub.f32 %v144, %v1678
    %v1680 = vand.u32 %v1679, 4294901760
    %1681 = vmatpush1.msra.mxu0 %v1680
    %1682 = vmatprep.subr.mxu0 0.0
    %v1683 = vand.u32 %v145, 4294901760
    %v1684 = vsub.f32 %v145, %v1683
    %v1685 = vand.u32 %v1684, 4294901760
    %1686 = vmatpush1.msra.mxu0 %v1685
    %1687 = vmatprep.subr.mxu0 0.0
    %v1688 = vand.u32 %v146, 4294901760
    %v1689 = vsub.f32 %v146, %v1688
    %v1690 = vand.u32 %v1689, 4294901760
    %1691 = vmatpush1.msra.mxu0 %v1690
    %1692 = vmatprep.subr.mxu0 0.0
    %1693 = vmatpush1.msra.mxu0 0.0
    %1694 = vmatprep.subr.mxu0 0.0
    %1695 = vmatpush1.msra.mxu0 0.0
    %1696 = vmatprep.subr.mxu0 0.0
    %1697 = vmatpush1.msra.mxu0 0.0
    %1698 = vmatprep.subr.mxu0 0.0
    %1699 = vmatpush1.msra.mxu0 0.0
    %1700 = vmatprep.subr.mxu0 0.0
    %1701 = vmatpush1.msra.mxu0 0.0
    %1702 = vmatprep.subr.mxu0 0.0
    %1703 = vmatpush1.msra.mxu0 0.0
    %1704 = vmatprep.subr.mxu0 0.0
    %1705 = vmatpush1.msra.mxu0 0.0
    %1706 = vmatprep.subr.mxu0 0.0
    %1707 = vmatpush1.msra.mxu0 0.0
    %1708 = vmatprep.subr.mxu0 0.0
    %1709 = vmatpush1.msra.mxu0 0.0
    %1710 = vmatprep.subr.mxu0 0.0
    %1711 = vmatpush1.msra.mxu0 0.0
    %1712 = vmatprep.subr.mxu0 0.0
    %1713 = vmatpush1.msra.mxu0 0.0
    %1714 = vmatprep.subr.mxu0 0.0
    %1715 = vmatpush1.msra.mxu0 0.0
    %1716 = vmatprep.subr.mxu0 0.0
    %1717 = vmatpush1.msra.mxu0 0.0
    %1718 = vmatprep.subr.mxu0 0.0
    %1719 = vmatpush1.msra.mxu0 0.0
    %1720 = vmatprep.subr.mxu0 0.0
    %1721 = vmatpush1.msra.mxu0 0.0
    %1722 = vmatprep.subr.mxu0 0.0
    %1723 = vmatpush1.msra.mxu0 0.0
    %1724 = vmatprep.subr.mxu0 0.0
    %1725 = vmatpush1.msra.mxu0 0.0
    %1726 = vmatprep.subr.mxu0 0.0
    %1727 = vmatpush1.msra.mxu0 0.0
    %1728 = vmatprep.subr.mxu0 0.0
    %1729 = vmatpush1.msra.mxu0 0.0
    %1730 = vmatprep.subr.mxu0 0.0
    %1731 = vmatpush1.msra.mxu0 0.0
    %1732 = vmatprep.subr.mxu0 0.0
    %1733 = vmatpush1.msra.mxu0 0.0
    %1734 = vmatprep.subr.mxu0 0.0
    %1735 = vmatpush1.msra.mxu0 0.0
    %1736 = vmatprep.subr.mxu0 0.0
    %1737 = vmatpush1.msra.mxu0 0.0
    %1738 = vmatprep.subr.mxu0 0.0
    %1739 = vmatpush1.msra.mxu0 0.0
    %1740 = vmatprep.mubr.f32.mxu0 0.0
    %v1741 = vand.u32 %v155, 4294901760
    %1742 = vmatmul.mubr.f32.gmra.mrb[0].mxu0 %v1741
    %v1743 = vpop.f32.mrb[0].mxu0
    %v1744 = vadd.f32 %v1625, %v1743
    %v1745 = vpop.f32.mrb[0].mxu0
    %1746 = vmatprep.mubr.f32.mxu0 0.0
    %v1747 = vand.u32 %v158, 4294901760
    %1748 = vmatmul.mubr.f32.gmra.mrb[0].mxu0 %v1747
    %v1749 = vpop.f32.mrb[0].mxu0
    %v1750 = vadd.f32 %v1633, %v1749
    %v1751 = vpop.f32.mrb[0].mxu0
    %1752 = vmatprep.mubr.f32.mxu0 0.0
    %v1753 = vand.u32 %v161, 4294901760
    %1754 = vmatmul.mubr.f32.gmra.mrb[0].mxu0 %v1753
    %v1755 = vpop.f32.mrb[0].mxu0
    %v1756 = vadd.f32 %v1641, %v1755
    %v1757 = vpop.f32.mrb[0].mxu0
    %1758 = vmatprep.mubr.f32.mxu0 0.0
    %v1759 = vand.u32 %v164, 4294901760
    %1760 = vmatmul.mubr.f32.gmra.mrb[0].mxu0 %v1759
    %v1761 = vpop.f32.mrb[0].mxu0
    %v1762 = vadd.f32 %v1649, %v1761
    %v1763 = vpop.f32.mrb[0].mxu0
    %1764 = vdwg.mxu0
    %1765 = vmatprep.subr.mxu0 0.0
    %v1766 = vand.u32 %v139, 4294901760
    %1767 = vmatpush1.msra.mxu0 %v1766
    %1768 = vmatprep.subr.mxu0 0.0
    %v1769 = vand.u32 %v140, 4294901760
    %1770 = vmatpush1.msra.mxu0 %v1769
    %1771 = vmatprep.subr.mxu0 0.0
    %v1772 = vand.u32 %v141, 4294901760
    %1773 = vmatpush1.msra.mxu0 %v1772
    %1774 = vmatprep.subr.mxu0 0.0
    %v1775 = vand.u32 %v142, 4294901760
    %1776 = vmatpush1.msra.mxu0 %v1775
    %1777 = vmatprep.subr.mxu0 0.0
    %v1778 = vand.u32 %v143, 4294901760
    %1779 = vmatpush1.msra.mxu0 %v1778
    %1780 = vmatprep.subr.mxu0 0.0
    %v1781 = vand.u32 %v144, 4294901760
    %1782 = vmatpush1.msra.mxu0 %v1781
    %1783 = vmatprep.subr.mxu0 0.0
    %v1784 = vand.u32 %v145, 4294901760
    %1785 = vmatpush1.msra.mxu0 %v1784
    %1786 = vmatprep.subr.mxu0 0.0
    %v1787 = vand.u32 %v146, 4294901760
    %1788 = vmatpush1.msra.mxu0 %v1787
    %1789 = vmatprep.subr.mxu0 0.0
    %1790 = vmatpush1.msra.mxu0 0.0
    %1791 = vmatprep.subr.mxu0 0.0
    %1792 = vmatpush1.msra.mxu0 0.0
    %1793 = vmatprep.subr.mxu0 0.0
    %1794 = vmatpush1.msra.mxu0 0.0
    %1795 = vmatprep.subr.mxu0 0.0
    %1796 = vmatpush1.msra.mxu0 0.0
    %1797 = vmatprep.subr.mxu0 0.0
    %1798 = vmatpush1.msra.mxu0 0.0
    %1799 = vmatprep.subr.mxu0 0.0
    %1800 = vmatpush1.msra.mxu0 0.0
    %1801 = vmatprep.subr.mxu0 0.0
    %1802 = vmatpush1.msra.mxu0 0.0
    %1803 = vmatprep.subr.mxu0 0.0
    %1804 = vmatpush1.msra.mxu0 0.0
    %1805 = vmatprep.subr.mxu0 0.0
    %1806 = vmatpush1.msra.mxu0 0.0
    %1807 = vmatprep.subr.mxu0 0.0
    %1808 = vmatpush1.msra.mxu0 0.0
    %1809 = vmatprep.subr.mxu0 0.0
    %1810 = vmatpush1.msra.mxu0 0.0
    %1811 = vmatprep.subr.mxu0 0.0
    %1812 = vmatpush1.msra.mxu0 0.0
    %1813 = vmatprep.subr.mxu0 0.0
    %1814 = vmatpush1.msra.mxu0 0.0
    %1815 = vmatprep.subr.mxu0 0.0
    %1816 = vmatpush1.msra.mxu0 0.0
    %1817 = vmatprep.subr.mxu0 0.0
    %1818 = vmatpush1.msra.mxu0 0.0
    %1819 = vmatprep.subr.mxu0 0.0
    %1820 = vmatpush1.msra.mxu0 0.0
    %1821 = vmatprep.subr.mxu0 0.0
    %1822 = vmatpush1.msra.mxu0 0.0
    %1823 = vmatprep.subr.mxu0 0.0
    %1824 = vmatpush1.msra.mxu0 0.0
    %1825 = vmatprep.subr.mxu0 0.0
    %1826 = vmatpush1.msra.mxu0 0.0
    %1827 = vmatprep.subr.mxu0 0.0
    %1828 = vmatpush1.msra.mxu0 0.0
    %1829 = vmatprep.subr.mxu0 0.0
    %1830 = vmatpush1.msra.mxu0 0.0
    %1831 = vmatprep.subr.mxu0 0.0
    %1832 = vmatpush1.msra.mxu0 0.0
    %1833 = vmatprep.subr.mxu0 0.0
    %1834 = vmatpush1.msra.mxu0 0.0
    %1835 = vmatprep.subr.mxu0 0.0
    %1836 = vmatpush1.msra.mxu0 0.0
    %1837 = vmatprep.mubr.f32.mxu0 0.0
    %v1838 = vand.u32 %v155, 4294901760
    %1839 = vmatmul.mubr.f32.gmra.mrb[0].mxu0 %v1838
    %v1840 = vpop.f32.mrb[0].mxu0
    %v1841 = vadd.f32 %v1744, %v1840
    %v1842 = vpop.f32.mrb[0].mxu0
    %1843 = vmatprep.mubr.f32.mxu0 0.0
    %v1844 = vand.u32 %v158, 4294901760
    %1845 = vmatmul.mubr.f32.gmra.mrb[0].mxu0 %v1844
    %v1846 = vpop.f32.mrb[0].mxu0
    %v1847 = vadd.f32 %v1750, %v1846
    %v1848 = vpop.f32.mrb[0].mxu0
    %1849 = vmatprep.mubr.f32.mxu0 0.0
    %v1850 = vand.u32 %v161, 4294901760
    %1851 = vmatmul.mubr.f32.gmra.mrb[0].mxu0 %v1850
    %v1852 = vpop.f32.mrb[0].mxu0
    %v1853 = vadd.f32 %v1756, %v1852
    %v1854 = vpop.f32.mrb[0].mxu0
    %1855 = vmatprep.mubr.f32.mxu0 0.0
    %v1856 = vand.u32 %v164, 4294901760
    %1857 = vmatmul.mubr.f32.gmra.mrb[0].mxu0 %v1856
    %v1858 = vpop.f32.mrb[0].mxu0
    %v1859 = vadd.f32 %v1762, %v1858
    %v1860 = vpop.f32.mrb[0].mxu0
    %1861 = vdwg.mxu0
    %v1862 = vmax.f32 %v1841, 0.0
    %v1863 = vmax.f32 %v1847, 0.0
    %v1864 = vmax.f32 %v1853, 0.0
    %v1865 = vmax.f32 %v1859, 0.0
    %1870 = vrot.lane.b32.xlu0 %v1862, 64
    %v1871 = vpop.permute.xlu0 %1870
    %1872 = vrot.lane.b32.xlu0 %v1863, 64
    %v1873 = vpop.permute.xlu0 %1872
    %1874 = vrot.lane.b32.xlu0 %v1864, 64
    %v1875 = vpop.permute.xlu0 %1874
    %1876 = vrot.lane.b32.xlu0 %v1865, 64
    %v1877 = vpop.permute.xlu0 %1876
    %v1882 = vmax.f32 %v1862, %v1871
    %v1883 = vmax.f32 %v1863, %v1873
    %v1884 = vmax.f32 %v1864, %v1875
    %v1885 = vmax.f32 %v1865, %v1877
    %1886 = vst.msk [vmem:[#allocation3] sm:$0xff] %vm42, %v1882
    %1887 = vst.msk [vmem:[#allocation3 + $0x8] sm:$0xff] %vm42, %v1883
    %1888 = vst.msk [vmem:[#allocation3 + $0x10] sm:$0xff] %vm42, %v1884
    %1889 = vst.msk [vmem:[#allocation3 + $0x18] sm:$0xff] %vm42, %v1885
    %v1890 = vld [vmem:[#allocation3] ss:$2 sm:$0xff]
    %s1891 = scalar_lea.vmem [#allocation3], 16
    %v1892 = vld [vmem:[%s1891] ss:$2 sm:$0xff]
    %s1893 = scalar_lea.vmem [#allocation3], 1
    %v1894 = vld [vmem:[%s1893] ss:$2 sm:$0xff]
    %s1895 = scalar_lea.vmem [#allocation3], 17
    %v1896 = vld [vmem:[%s1895] ss:$2 sm:$0xff]
    %v1897 = vmax.f32 %v1890, %v1894
    %v1898 = vmax.f32 %v1892, %v1896
    %1899 = vst.msk [vmem:[#allocation4] sm:$0x3] %vm37, 0.0
    %1900 = vst.msk [vmem:[#allocation4 + $0x10] sm:$0x3] %vm37, 0.0
    %1901 = vst.msk [vmem:[#allocation4 + $0xa] sm:$0x3] %vm37, 0.0
    %1902 = vst.msk [vmem:[#allocation4 + $0x1a] sm:$0x3] %vm37, 0.0
    %1903 = vst.msk [vmem:[#allocation4 + $0x2] sm:$0xff] %vm42, %v1897
    %1904 = vst.msk [vmem:[#allocation4 + $0x12] sm:$0xff] %vm42, %v1898
    %v1905 = vld [vmem:[#allocation4] sm:$0xff]
    %v1906 = vld [vmem:[#allocation4 + $0x10] sm:$0xff]
    %v1907 = vld [vmem:[#allocation4 + $0x1] sm:$0xff]
    %v1908 = vld [vmem:[#allocation4 + $0x11] sm:$0xff]
    %v1909 = vld [vmem:[#allocation4 + $0x2] sm:$0xff]
    %v1910 = vld [vmem:[#allocation4 + $0x12] sm:$0xff]
    %v1911 = vld [vmem:[#allocation4 + $0x3] sm:$0xff]
    %v1912 = vld [vmem:[#allocation4 + $0x13] sm:$0xff]
    %v1913 = vld [vmem:[#allocation4 + $0x4] sm:$0xff]
    %v1914 = vld [vmem:[#allocation4 + $0x14] sm:$0xff]
    %1917 = vrot.lane.b32.xlu0 %v1907, 64
    %v1918 = vpop.permute.xlu0 %1917
    %1919 = vrot.lane.b32.xlu0 %v1908, 64
    %v1920 = vpop.permute.xlu0 %1919
    %1925 = vrot.lane.b32.xlu0 %v1911, 64
    %v1926 = vpop.permute.xlu0 %1925
    %1927 = vrot.lane.b32.xlu0 %v1912, 64
    %v1928 = vpop.permute.xlu0 %1927
    %v1931 = vsel %vm42, %v1905, %v1918
    %v1932 = vsel %vm42, %v1906, %v1920
    %v1933 = vsel %vm42, %v1909, %v1926
    %v1934 = vsel %vm42, %v1910, %v1928
    %v1935 = vld [vmem:[%s3] sm:$0xff]
    %v1936 = vld [vmem:[%s3 + $0x8] sm:$0xff]
    %v1937 = vld [vmem:[%s3 + $0x10] sm:$0xff]
    %v1938 = vld [vmem:[%s3 + $0x18] sm:$0xff]
    %v1939 = vld [vmem:[%s3 + $0x20] sm:$0xff]
    %v1940 = vld [vmem:[%s3 + $0x28] sm:$0xff]
    %v1941 = vld [vmem:[%s3 + $0x30] sm:$0xff]
    %v1942 = vld [vmem:[%s3 + $0x38] sm:$0xff]
    %v1943 = vld [vmem:[%s3 + $0x40] sm:$0xff]
    %v1944 = vld [vmem:[%s3 + $0x48] sm:$0xff]
    %v1945 = vld [vmem:[%s3 + $0x50] sm:$0xff]
    %v1946 = vld [vmem:[%s3 + $0x58] sm:$0xff]
    %v1947 = vld [vmem:[%s3 + $0x60] sm:$0xff]
    %v1948 = vld [vmem:[%s3 + $0x68] sm:$0xff]
    %v1949 = vld [vmem:[%s3 + $0x70] sm:$0xff]
    %v1950 = vld [vmem:[%s3 + $0x78] sm:$0xff]
    %v1951 = vld [vmem:[%s3 + $0x80] sm:$0xff]
    %v1952 = vld [vmem:[%s3 + $0x88] sm:$0xff]
    %v1953 = vld [vmem:[%s3 + $0x90] sm:$0xff]
    %v1954 = vld [vmem:[%s3 + $0x98] sm:$0xff]
    %v1955 = vld [vmem:[%s3 + $0xa0] sm:$0xff]
    %v1956 = vld [vmem:[%s3 + $0xa8] sm:$0xff]
    %v1957 = vld [vmem:[%s3 + $0xb0] sm:$0xff]
    %v1958 = vld [vmem:[%s3 + $0xb8] sm:$0xff]
    %v1959 = vld [vmem:[%s3 + $0xc0] sm:$0xff]
    %v1960 = vld [vmem:[%s3 + $0xc8] sm:$0xff]
    %v1961 = vld [vmem:[%s3 + $0xd0] sm:$0xff]
    %v1962 = vld [vmem:[%s3 + $0xd8] sm:$0xff]
    %v1963 = vld [vmem:[%s3 + $0xe0] sm:$0xff]
    %v1964 = vld [vmem:[%s3 + $0xe8] sm:$0xff]
    %v1965 = vld [vmem:[%s3 + $0xf0] sm:$0xff]
    %v1966 = vld [vmem:[%s3 + $0xf8] sm:$0xff]
    %v1967 = vld [vmem:[%s3 + $0x100] sm:$0xff]
    %v1968 = vld [vmem:[%s3 + $0x108] sm:$0xff]
    %v1969 = vld [vmem:[%s3 + $0x110] sm:$0xff]
    %v1970 = vld [vmem:[%s3 + $0x118] sm:$0xff]
    %v1971 = vld [vmem:[%s3 + $0x120] sm:$0xff]
    %v1972 = vld [vmem:[%s3 + $0x128] sm:$0xff]
    %v1973 = vld [vmem:[%s3 + $0x130] sm:$0xff]
    %v1974 = vld [vmem:[%s3 + $0x138] sm:$0xff]
    %v1975 = vld [vmem:[%s4] sm:$0x1]
    %v1977 = vlaneseq
    %v1978 = vshrl.u32 %v1977, 7
    %v1979 = vsub.s32 0, %v1978
    %v1980 = vrot.slane %v1975, %v1979
    %v1983 = vsel %vm42, %v1913, 0
    %v1986 = vsel %vm42, %v1914, 0
    %1988 = vmatprep.subr.mxu0 0.0
    %v1989 = vand.u32 %v1935, 4294901760
    %1990 = vmatpush1.msra.mxu0 %v1989
    %1991 = vmatprep.subr.mxu0 0.0
    %v1992 = vand.u32 %v1936, 4294901760
    %1993 = vmatpush1.msra.mxu0 %v1992
    %1994 = vmatprep.subr.mxu0 0.0
    %v1995 = vand.u32 %v1937, 4294901760
    %1996 = vmatpush1.msra.mxu0 %v1995
    %1997 = vmatprep.subr.mxu0 0.0
    %v1998 = vand.u32 %v1938, 4294901760
    %1999 = vmatpush1.msra.mxu0 %v1998
    %2000 = vmatprep.subr.mxu0 0.0
    %v2001 = vand.u32 %v1939, 4294901760
    %2002 = vmatpush1.msra.mxu0 %v2001
    %2003 = vmatprep.subr.mxu0 0.0
    %v2004 = vand.u32 %v1940, 4294901760
    %2005 = vmatpush1.msra.mxu0 %v2004
    %2006 = vmatprep.subr.mxu0 0.0
    %v2007 = vand.u32 %v1941, 4294901760
    %2008 = vmatpush1.msra.mxu0 %v2007
    %2009 = vmatprep.subr.mxu0 0.0
    %v2010 = vand.u32 %v1942, 4294901760
    %2011 = vmatpush1.msra.mxu0 %v2010
    %2012 = vmatprep.subr.mxu0 0.0
    %v2013 = vand.u32 %v1943, 4294901760
    %2014 = vmatpush1.msra.mxu0 %v2013
    %2015 = vmatprep.subr.mxu0 0.0
    %v2016 = vand.u32 %v1944, 4294901760
    %2017 = vmatpush1.msra.mxu0 %v2016
    %2018 = vmatprep.subr.mxu0 0.0
    %v2019 = vand.u32 %v1945, 4294901760
    %2020 = vmatpush1.msra.mxu0 %v2019
    %2021 = vmatprep.subr.mxu0 0.0
    %v2022 = vand.u32 %v1946, 4294901760
    %2023 = vmatpush1.msra.mxu0 %v2022
    %2024 = vmatprep.subr.mxu0 0.0
    %v2025 = vand.u32 %v1947, 4294901760
    %2026 = vmatpush1.msra.mxu0 %v2025
    %2027 = vmatprep.subr.mxu0 0.0
    %v2028 = vand.u32 %v1948, 4294901760
    %2029 = vmatpush1.msra.mxu0 %v2028
    %2030 = vmatprep.subr.mxu0 0.0
    %v2031 = vand.u32 %v1949, 4294901760
    %2032 = vmatpush1.msra.mxu0 %v2031
    %2033 = vmatprep.subr.mxu0 0.0
    %v2034 = vand.u32 %v1950, 4294901760
    %2035 = vmatpush1.msra.mxu0 %v2034
    %2036 = vmatprep.subr.mxu0 0.0
    %v2037 = vand.u32 %v1951, 4294901760
    %2038 = vmatpush1.msra.mxu0 %v2037
    %2039 = vmatprep.subr.mxu0 0.0
    %v2040 = vand.u32 %v1952, 4294901760
    %2041 = vmatpush1.msra.mxu0 %v2040
    %2042 = vmatprep.subr.mxu0 0.0
    %v2043 = vand.u32 %v1953, 4294901760
    %2044 = vmatpush1.msra.mxu0 %v2043
    %2045 = vmatprep.subr.mxu0 0.0
    %v2046 = vand.u32 %v1954, 4294901760
    %2047 = vmatpush1.msra.mxu0 %v2046
    %2048 = vmatprep.subr.mxu0 0.0
    %v2049 = vand.u32 %v1955, 4294901760
    %2050 = vmatpush1.msra.mxu0 %v2049
    %2051 = vmatprep.subr.mxu0 0.0
    %v2052 = vand.u32 %v1956, 4294901760
    %2053 = vmatpush1.msra.mxu0 %v2052
    %2054 = vmatprep.subr.mxu0 0.0
    %v2055 = vand.u32 %v1957, 4294901760
    %2056 = vmatpush1.msra.mxu0 %v2055
    %2057 = vmatprep.subr.mxu0 0.0
    %v2058 = vand.u32 %v1958, 4294901760
    %2059 = vmatpush1.msra.mxu0 %v2058
    %2060 = vmatprep.subr.mxu0 0.0
    %v2061 = vand.u32 %v1959, 4294901760
    %2062 = vmatpush1.msra.mxu0 %v2061
    %2063 = vmatprep.subr.mxu0 0.0
    %v2064 = vand.u32 %v1960, 4294901760
    %2065 = vmatpush1.msra.mxu0 %v2064
    %2066 = vmatprep.subr.mxu0 0.0
    %v2067 = vand.u32 %v1961, 4294901760
    %2068 = vmatpush1.msra.mxu0 %v2067
    %2069 = vmatprep.subr.mxu0 0.0
    %v2070 = vand.u32 %v1962, 4294901760
    %2071 = vmatpush1.msra.mxu0 %v2070
    %2072 = vmatprep.subr.mxu0 0.0
    %v2073 = vand.u32 %v1963, 4294901760
    %2074 = vmatpush1.msra.mxu0 %v2073
    %2075 = vmatprep.subr.mxu0 0.0
    %v2076 = vand.u32 %v1964, 4294901760
    %2077 = vmatpush1.msra.mxu0 %v2076
    %2078 = vmatprep.subr.mxu0 0.0
    %v2079 = vand.u32 %v1965, 4294901760
    %2080 = vmatpush1.msra.mxu0 %v2079
    %2081 = vmatprep.subr.mxu0 0.0
    %v2082 = vand.u32 %v1966, 4294901760
    %2083 = vmatpush1.msra.mxu0 %v2082
    %v2084 = vand.u32 %v1933, 4294901760
    %v2085 = vsub.f32 %v1933, %v2084
    %v2086 = vand.u32 %v2085, 4294901760
    %v2087 = vsub.f32 %v2085, %v2086
    %v2088 = vand.u32 %v2087, 4294901760
    %2089 = vmatprep.mubr.f32.mxu0 %v2088
    %v2090 = vand.u32 %v1931, 4294901760
    %v2091 = vsub.f32 %v1931, %v2090
    %v2092 = vand.u32 %v2091, 4294901760
    %v2093 = vsub.f32 %v2091, %v2092
    %v2094 = vand.u32 %v2093, 4294901760
    %2095 = vmatmul.mubr.f32.gmra.mrb[0].mxu0 %v2094
    %v2096 = vpop.f32.mrb[0].mxu0
    %v2097 = vadd.f32 %v1980, %v2096
    %v2098 = vpop.f32.mrb[0].mxu0
    %v2099 = vand.u32 %v1934, 4294901760
    %v2100 = vsub.f32 %v1934, %v2099
    %v2101 = vand.u32 %v2100, 4294901760
    %v2102 = vsub.f32 %v2100, %v2101
    %v2103 = vand.u32 %v2102, 4294901760
    %2104 = vmatprep.mubr.f32.mxu0 %v2103
    %v2105 = vand.u32 %v1932, 4294901760
    %v2106 = vsub.f32 %v1932, %v2105
    %v2107 = vand.u32 %v2106, 4294901760
    %v2108 = vsub.f32 %v2106, %v2107
    %v2109 = vand.u32 %v2108, 4294901760
    %2110 = vmatmul.mubr.f32.gmra.mrb[0].mxu0 %v2109
    %v2111 = vpop.f32.mrb[0].mxu0
    %v2112 = vadd.f32 %v1980, %v2111
    %v2113 = vpop.f32.mrb[0].mxu0
    %2114 = vdwg.mxu0
    %2115 = vmatprep.subr.mxu0 0.0
    %v2116 = vand.u32 %v1935, 4294901760
    %v2117 = vsub.f32 %v1935, %v2116
    %v2118 = vand.u32 %v2117, 4294901760
    %v2119 = vsub.f32 %v2117, %v2118
    %v2120 = vand.u32 %v2119, 4294901760
    %2121 = vmatpush1.msra.mxu0 %v2120
    %2122 = vmatprep.subr.mxu0 0.0
    %v2123 = vand.u32 %v1936, 4294901760
    %v2124 = vsub.f32 %v1936, %v2123
    %v2125 = vand.u32 %v2124, 4294901760
    %v2126 = vsub.f32 %v2124, %v2125
    %v2127 = vand.u32 %v2126, 4294901760
    %2128 = vmatpush1.msra.mxu0 %v2127
    %2129 = vmatprep.subr.mxu0 0.0
    %v2130 = vand.u32 %v1937, 4294901760
    %v2131 = vsub.f32 %v1937, %v2130
    %v2132 = vand.u32 %v2131, 4294901760
    %v2133 = vsub.f32 %v2131, %v2132
    %v2134 = vand.u32 %v2133, 4294901760
    %2135 = vmatpush1.msra.mxu0 %v2134
    %2136 = vmatprep.subr.mxu0 0.0
    %v2137 = vand.u32 %v1938, 4294901760
    %v2138 = vsub.f32 %v1938, %v2137
    %v2139 = vand.u32 %v2138, 4294901760
    %v2140 = vsub.f32 %v2138, %v2139
    %v2141 = vand.u32 %v2140, 4294901760
    %2142 = vmatpush1.msra.mxu0 %v2141
    %2143 = vmatprep.subr.mxu0 0.0
    %v2144 = vand.u32 %v1939, 4294901760
    %v2145 = vsub.f32 %v1939, %v2144
    %v2146 = vand.u32 %v2145, 4294901760
    %v2147 = vsub.f32 %v2145, %v2146
    %v2148 = vand.u32 %v2147, 4294901760
    %2149 = vmatpush1.msra.mxu0 %v2148
    %2150 = vmatprep.subr.mxu0 0.0
    %v2151 = vand.u32 %v1940, 4294901760
    %v2152 = vsub.f32 %v1940, %v2151
    %v2153 = vand.u32 %v2152, 4294901760
    %v2154 = vsub.f32 %v2152, %v2153
    %v2155 = vand.u32 %v2154, 4294901760
    %2156 = vmatpush1.msra.mxu0 %v2155
    %2157 = vmatprep.subr.mxu0 0.0
    %v2158 = vand.u32 %v1941, 4294901760
    %v2159 = vsub.f32 %v1941, %v2158
    %v2160 = vand.u32 %v2159, 4294901760
    %v2161 = vsub.f32 %v2159, %v2160
    %v2162 = vand.u32 %v2161, 4294901760
    %2163 = vmatpush1.msra.mxu0 %v2162
    %2164 = vmatprep.subr.mxu0 0.0
    %v2165 = vand.u32 %v1942, 4294901760
    %v2166 = vsub.f32 %v1942, %v2165
    %v2167 = vand.u32 %v2166, 4294901760
    %v2168 = vsub.f32 %v2166, %v2167
    %v2169 = vand.u32 %v2168, 4294901760
    %2170 = vmatpush1.msra.mxu0 %v2169
    %2171 = vmatprep.subr.mxu0 0.0
    %v2172 = vand.u32 %v1943, 4294901760
    %v2173 = vsub.f32 %v1943, %v2172
    %v2174 = vand.u32 %v2173, 4294901760
    %v2175 = vsub.f32 %v2173, %v2174
    %v2176 = vand.u32 %v2175, 4294901760
    %2177 = vmatpush1.msra.mxu0 %v2176
    %2178 = vmatprep.subr.mxu0 0.0
    %v2179 = vand.u32 %v1944, 4294901760
    %v2180 = vsub.f32 %v1944, %v2179
    %v2181 = vand.u32 %v2180, 4294901760
    %v2182 = vsub.f32 %v2180, %v2181
    %v2183 = vand.u32 %v2182, 4294901760
    %2184 = vmatpush1.msra.mxu0 %v2183
    %2185 = vmatprep.subr.mxu0 0.0
    %v2186 = vand.u32 %v1945, 4294901760
    %v2187 = vsub.f32 %v1945, %v2186
    %v2188 = vand.u32 %v2187, 4294901760
    %v2189 = vsub.f32 %v2187, %v2188
    %v2190 = vand.u32 %v2189, 4294901760
    %2191 = vmatpush1.msra.mxu0 %v2190
    %2192 = vmatprep.subr.mxu0 0.0
    %v2193 = vand.u32 %v1946, 4294901760
    %v2194 = vsub.f32 %v1946, %v2193
    %v2195 = vand.u32 %v2194, 4294901760
    %v2196 = vsub.f32 %v2194, %v2195
    %v2197 = vand.u32 %v2196, 4294901760
    %2198 = vmatpush1.msra.mxu0 %v2197
    %2199 = vmatprep.subr.mxu0 0.0
    %v2200 = vand.u32 %v1947, 4294901760
    %v2201 = vsub.f32 %v1947, %v2200
    %v2202 = vand.u32 %v2201, 4294901760
    %v2203 = vsub.f32 %v2201, %v2202
    %v2204 = vand.u32 %v2203, 4294901760
    %2205 = vmatpush1.msra.mxu0 %v2204
    %2206 = vmatprep.subr.mxu0 0.0
    %v2207 = vand.u32 %v1948, 4294901760
    %v2208 = vsub.f32 %v1948, %v2207
    %v2209 = vand.u32 %v2208, 4294901760
    %v2210 = vsub.f32 %v2208, %v2209
    %v2211 = vand.u32 %v2210, 4294901760
    %2212 = vmatpush1.msra.mxu0 %v2211
    %2213 = vmatprep.subr.mxu0 0.0
    %v2214 = vand.u32 %v1949, 4294901760
    %v2215 = vsub.f32 %v1949, %v2214
    %v2216 = vand.u32 %v2215, 4294901760
    %v2217 = vsub.f32 %v2215, %v2216
    %v2218 = vand.u32 %v2217, 4294901760
    %2219 = vmatpush1.msra.mxu0 %v2218
    %2220 = vmatprep.subr.mxu0 0.0
    %v2221 = vand.u32 %v1950, 4294901760
    %v2222 = vsub.f32 %v1950, %v2221
    %v2223 = vand.u32 %v2222, 4294901760
    %v2224 = vsub.f32 %v2222, %v2223
    %v2225 = vand.u32 %v2224, 4294901760
    %2226 = vmatpush1.msra.mxu0 %v2225
    %2227 = vmatprep.subr.mxu0 0.0
    %v2228 = vand.u32 %v1951, 4294901760
    %v2229 = vsub.f32 %v1951, %v2228
    %v2230 = vand.u32 %v2229, 4294901760
    %v2231 = vsub.f32 %v2229, %v2230
    %v2232 = vand.u32 %v2231, 4294901760
    %2233 = vmatpush1.msra.mxu0 %v2232
    %2234 = vmatprep.subr.mxu0 0.0
    %v2235 = vand.u32 %v1952, 4294901760
    %v2236 = vsub.f32 %v1952, %v2235
    %v2237 = vand.u32 %v2236, 4294901760
    %v2238 = vsub.f32 %v2236, %v2237
    %v2239 = vand.u32 %v2238, 4294901760
    %2240 = vmatpush1.msra.mxu0 %v2239
    %2241 = vmatprep.subr.mxu0 0.0
    %v2242 = vand.u32 %v1953, 4294901760
    %v2243 = vsub.f32 %v1953, %v2242
    %v2244 = vand.u32 %v2243, 4294901760
    %v2245 = vsub.f32 %v2243, %v2244
    %v2246 = vand.u32 %v2245, 4294901760
    %2247 = vmatpush1.msra.mxu0 %v2246
    %2248 = vmatprep.subr.mxu0 0.0
    %v2249 = vand.u32 %v1954, 4294901760
    %v2250 = vsub.f32 %v1954, %v2249
    %v2251 = vand.u32 %v2250, 4294901760
    %v2252 = vsub.f32 %v2250, %v2251
    %v2253 = vand.u32 %v2252, 4294901760
    %2254 = vmatpush1.msra.mxu0 %v2253
    %2255 = vmatprep.subr.mxu0 0.0
    %v2256 = vand.u32 %v1955, 4294901760
    %v2257 = vsub.f32 %v1955, %v2256
    %v2258 = vand.u32 %v2257, 4294901760
    %v2259 = vsub.f32 %v2257, %v2258
    %v2260 = vand.u32 %v2259, 4294901760
    %2261 = vmatpush1.msra.mxu0 %v2260
    %2262 = vmatprep.subr.mxu0 0.0
    %v2263 = vand.u32 %v1956, 4294901760
    %v2264 = vsub.f32 %v1956, %v2263
    %v2265 = vand.u32 %v2264, 4294901760
    %v2266 = vsub.f32 %v2264, %v2265
    %v2267 = vand.u32 %v2266, 4294901760
    %2268 = vmatpush1.msra.mxu0 %v2267
    %2269 = vmatprep.subr.mxu0 0.0
    %v2270 = vand.u32 %v1957, 4294901760
    %v2271 = vsub.f32 %v1957, %v2270
    %v2272 = vand.u32 %v2271, 4294901760
    %v2273 = vsub.f32 %v2271, %v2272
    %v2274 = vand.u32 %v2273, 4294901760
    %2275 = vmatpush1.msra.mxu0 %v2274
    %2276 = vmatprep.subr.mxu0 0.0
    %v2277 = vand.u32 %v1958, 4294901760
    %v2278 = vsub.f32 %v1958, %v2277
    %v2279 = vand.u32 %v2278, 4294901760
    %v2280 = vsub.f32 %v2278, %v2279
    %v2281 = vand.u32 %v2280, 4294901760
    %2282 = vmatpush1.msra.mxu0 %v2281
    %2283 = vmatprep.subr.mxu0 0.0
    %v2284 = vand.u32 %v1959, 4294901760
    %v2285 = vsub.f32 %v1959, %v2284
    %v2286 = vand.u32 %v2285, 4294901760
    %v2287 = vsub.f32 %v2285, %v2286
    %v2288 = vand.u32 %v2287, 4294901760
    %2289 = vmatpush1.msra.mxu0 %v2288
    %2290 = vmatprep.subr.mxu0 0.0
    %v2291 = vand.u32 %v1960, 4294901760
    %v2292 = vsub.f32 %v1960, %v2291
    %v2293 = vand.u32 %v2292, 4294901760
    %v2294 = vsub.f32 %v2292, %v2293
    %v2295 = vand.u32 %v2294, 4294901760
    %2296 = vmatpush1.msra.mxu0 %v2295
    %2297 = vmatprep.subr.mxu0 0.0
    %v2298 = vand.u32 %v1961, 4294901760
    %v2299 = vsub.f32 %v1961, %v2298
    %v2300 = vand.u32 %v2299, 4294901760
    %v2301 = vsub.f32 %v2299, %v2300
    %v2302 = vand.u32 %v2301, 4294901760
    %2303 = vmatpush1.msra.mxu0 %v2302
    %2304 = vmatprep.subr.mxu0 0.0
    %v2305 = vand.u32 %v1962, 4294901760
    %v2306 = vsub.f32 %v1962, %v2305
    %v2307 = vand.u32 %v2306, 4294901760
    %v2308 = vsub.f32 %v2306, %v2307
    %v2309 = vand.u32 %v2308, 4294901760
    %2310 = vmatpush1.msra.mxu0 %v2309
    %2311 = vmatprep.subr.mxu0 0.0
    %v2312 = vand.u32 %v1963, 4294901760
    %v2313 = vsub.f32 %v1963, %v2312
    %v2314 = vand.u32 %v2313, 4294901760
    %v2315 = vsub.f32 %v2313, %v2314
    %v2316 = vand.u32 %v2315, 4294901760
    %2317 = vmatpush1.msra.mxu0 %v2316
    %2318 = vmatprep.subr.mxu0 0.0
    %v2319 = vand.u32 %v1964, 4294901760
    %v2320 = vsub.f32 %v1964, %v2319
    %v2321 = vand.u32 %v2320, 4294901760
    %v2322 = vsub.f32 %v2320, %v2321
    %v2323 = vand.u32 %v2322, 4294901760
    %2324 = vmatpush1.msra.mxu0 %v2323
    %2325 = vmatprep.subr.mxu0 0.0
    %v2326 = vand.u32 %v1965, 4294901760
    %v2327 = vsub.f32 %v1965, %v2326
    %v2328 = vand.u32 %v2327, 4294901760
    %v2329 = vsub.f32 %v2327, %v2328
    %v2330 = vand.u32 %v2329, 4294901760
    %2331 = vmatpush1.msra.mxu0 %v2330
    %2332 = vmatprep.subr.mxu0 0.0
    %v2333 = vand.u32 %v1966, 4294901760
    %v2334 = vsub.f32 %v1966, %v2333
    %v2335 = vand.u32 %v2334, 4294901760
    %v2336 = vsub.f32 %v2334, %v2335
    %v2337 = vand.u32 %v2336, 4294901760
    %2338 = vmatpush1.msra.mxu0 %v2337
    %v2339 = vand.u32 %v1933, 4294901760
    %2340 = vmatprep.mubr.f32.mxu0 %v2339
    %v2341 = vand.u32 %v1931, 4294901760
    %2342 = vmatmul.mubr.f32.gmra.mrb[0].mxu0 %v2341
    %v2343 = vpop.f32.mrb[0].mxu0
    %v2344 = vadd.f32 %v2097, %v2343
    %v2345 = vpop.f32.mrb[0].mxu0
    %v2346 = vand.u32 %v1934, 4294901760
    %2347 = vmatprep.mubr.f32.mxu0 %v2346
    %v2348 = vand.u32 %v1932, 4294901760
    %2349 = vmatmul.mubr.f32.gmra.mrb[0].mxu0 %v2348
    %v2350 = vpop.f32.mrb[0].mxu0
    %v2351 = vadd.f32 %v2112, %v2350
    %v2352 = vpop.f32.mrb[0].mxu0
    %2353 = vdwg.mxu0
    %2354 = vmatprep.subr.mxu0 0.0
    %v2355 = vand.u32 %v1935, 4294901760
    %v2356 = vsub.f32 %v1935, %v2355
    %2357 = vmatpush1.msra.mxu0 %v2356
    %2358 = vmatprep.subr.mxu0 0.0
    %v2359 = vand.u32 %v1936, 4294901760
    %v2360 = vsub.f32 %v1936, %v2359
    %2361 = vmatpush1.msra.mxu0 %v2360
    %2362 = vmatprep.subr.mxu0 0.0
    %v2363 = vand.u32 %v1937, 4294901760
    %v2364 = vsub.f32 %v1937, %v2363
    %2365 = vmatpush1.msra.mxu0 %v2364
    %2366 = vmatprep.subr.mxu0 0.0
    %v2367 = vand.u32 %v1938, 4294901760
    %v2368 = vsub.f32 %v1938, %v2367
    %2369 = vmatpush1.msra.mxu0 %v2368
    %2370 = vmatprep.subr.mxu0 0.0
    %v2371 = vand.u32 %v1939, 4294901760
    %v2372 = vsub.f32 %v1939, %v2371
    %2373 = vmatpush1.msra.mxu0 %v2372
    %2374 = vmatprep.subr.mxu0 0.0
    %v2375 = vand.u32 %v1940, 4294901760
    %v2376 = vsub.f32 %v1940, %v2375
    %2377 = vmatpush1.msra.mxu0 %v2376
    %2378 = vmatprep.subr.mxu0 0.0
    %v2379 = vand.u32 %v1941, 4294901760
    %v2380 = vsub.f32 %v1941, %v2379
    %2381 = vmatpush1.msra.mxu0 %v2380
    %2382 = vmatprep.subr.mxu0 0.0
    %v2383 = vand.u32 %v1942, 4294901760
    %v2384 = vsub.f32 %v1942, %v2383
    %2385 = vmatpush1.msra.mxu0 %v2384
    %2386 = vmatprep.subr.mxu0 0.0
    %v2387 = vand.u32 %v1943, 4294901760
    %v2388 = vsub.f32 %v1943, %v2387
    %2389 = vmatpush1.msra.mxu0 %v2388
    %2390 = vmatprep.subr.mxu0 0.0
    %v2391 = vand.u32 %v1944, 4294901760
    %v2392 = vsub.f32 %v1944, %v2391
    %2393 = vmatpush1.msra.mxu0 %v2392
    %2394 = vmatprep.subr.mxu0 0.0
    %v2395 = vand.u32 %v1945, 4294901760
    %v2396 = vsub.f32 %v1945, %v2395
    %2397 = vmatpush1.msra.mxu0 %v2396
    %2398 = vmatprep.subr.mxu0 0.0
    %v2399 = vand.u32 %v1946, 4294901760
    %v2400 = vsub.f32 %v1946, %v2399
    %2401 = vmatpush1.msra.mxu0 %v2400
    %2402 = vmatprep.subr.mxu0 0.0
    %v2403 = vand.u32 %v1947, 4294901760
    %v2404 = vsub.f32 %v1947, %v2403
    %2405 = vmatpush1.msra.mxu0 %v2404
    %2406 = vmatprep.subr.mxu0 0.0
    %v2407 = vand.u32 %v1948, 4294901760
    %v2408 = vsub.f32 %v1948, %v2407
    %2409 = vmatpush1.msra.mxu0 %v2408
    %2410 = vmatprep.subr.mxu0 0.0
    %v2411 = vand.u32 %v1949, 4294901760
    %v2412 = vsub.f32 %v1949, %v2411
    %2413 = vmatpush1.msra.mxu0 %v2412
    %2414 = vmatprep.subr.mxu0 0.0
    %v2415 = vand.u32 %v1950, 4294901760
    %v2416 = vsub.f32 %v1950, %v2415
    %2417 = vmatpush1.msra.mxu0 %v2416
    %2418 = vmatprep.subr.mxu0 0.0
    %v2419 = vand.u32 %v1951, 4294901760
    %v2420 = vsub.f32 %v1951, %v2419
    %2421 = vmatpush1.msra.mxu0 %v2420
    %2422 = vmatprep.subr.mxu0 0.0
    %v2423 = vand.u32 %v1952, 4294901760
    %v2424 = vsub.f32 %v1952, %v2423
    %2425 = vmatpush1.msra.mxu0 %v2424
    %2426 = vmatprep.subr.mxu0 0.0
    %v2427 = vand.u32 %v1953, 4294901760
    %v2428 = vsub.f32 %v1953, %v2427
    %2429 = vmatpush1.msra.mxu0 %v2428
    %2430 = vmatprep.subr.mxu0 0.0
    %v2431 = vand.u32 %v1954, 4294901760
    %v2432 = vsub.f32 %v1954, %v2431
    %2433 = vmatpush1.msra.mxu0 %v2432
    %2434 = vmatprep.subr.mxu0 0.0
    %v2435 = vand.u32 %v1955, 4294901760
    %v2436 = vsub.f32 %v1955, %v2435
    %2437 = vmatpush1.msra.mxu0 %v2436
    %2438 = vmatprep.subr.mxu0 0.0
    %v2439 = vand.u32 %v1956, 4294901760
    %v2440 = vsub.f32 %v1956, %v2439
    %2441 = vmatpush1.msra.mxu0 %v2440
    %2442 = vmatprep.subr.mxu0 0.0
    %v2443 = vand.u32 %v1957, 4294901760
    %v2444 = vsub.f32 %v1957, %v2443
    %2445 = vmatpush1.msra.mxu0 %v2444
    %2446 = vmatprep.subr.mxu0 0.0
    %v2447 = vand.u32 %v1958, 4294901760
    %v2448 = vsub.f32 %v1958, %v2447
    %2449 = vmatpush1.msra.mxu0 %v2448
    %2450 = vmatprep.subr.mxu0 0.0
    %v2451 = vand.u32 %v1959, 4294901760
    %v2452 = vsub.f32 %v1959, %v2451
    %2453 = vmatpush1.msra.mxu0 %v2452
    %2454 = vmatprep.subr.mxu0 0.0
    %v2455 = vand.u32 %v1960, 4294901760
    %v2456 = vsub.f32 %v1960, %v2455
    %2457 = vmatpush1.msra.mxu0 %v2456
    %2458 = vmatprep.subr.mxu0 0.0
    %v2459 = vand.u32 %v1961, 4294901760
    %v2460 = vsub.f32 %v1961, %v2459
    %2461 = vmatpush1.msra.mxu0 %v2460
    %2462 = vmatprep.subr.mxu0 0.0
    %v2463 = vand.u32 %v1962, 4294901760
    %v2464 = vsub.f32 %v1962, %v2463
    %2465 = vmatpush1.msra.mxu0 %v2464
    %2466 = vmatprep.subr.mxu0 0.0
    %v2467 = vand.u32 %v1963, 4294901760
    %v2468 = vsub.f32 %v1963, %v2467
    %2469 = vmatpush1.msra.mxu0 %v2468
    %2470 = vmatprep.subr.mxu0 0.0
    %v2471 = vand.u32 %v1964, 4294901760
    %v2472 = vsub.f32 %v1964, %v2471
    %2473 = vmatpush1.msra.mxu0 %v2472
    %2474 = vmatprep.subr.mxu0 0.0
    %v2475 = vand.u32 %v1965, 4294901760
    %v2476 = vsub.f32 %v1965, %v2475
    %2477 = vmatpush1.msra.mxu0 %v2476
    %2478 = vmatprep.subr.mxu0 0.0
    %v2479 = vand.u32 %v1966, 4294901760
    %v2480 = vsub.f32 %v1966, %v2479
    %2481 = vmatpush1.msra.mxu0 %v2480
    %v2482 = vand.u32 %v1933, 4294901760
    %v2483 = vsub.f32 %v1933, %v2482
    %2484 = vmatprep.mubr.f32.mxu0 %v2483
    %v2485 = vand.u32 %v1931, 4294901760
    %v2486 = vsub.f32 %v1931, %v2485
    %2487 = vmatmul.mubr.f32.gmra.mrb[0].mxu0 %v2486
    %v2488 = vpop.f32.mrb[0].mxu0
    %v2489 = vadd.f32 %v2344, %v2488
    %v2490 = vpop.f32.mrb[0].mxu0
    %v2491 = vand.u32 %v1934, 4294901760
    %v2492 = vsub.f32 %v1934, %v2491
    %2493 = vmatprep.mubr.f32.mxu0 %v2492
    %v2494 = vand.u32 %v1932, 4294901760
    %v2495 = vsub.f32 %v1932, %v2494
    %2496 = vmatmul.mubr.f32.gmra.mrb[0].mxu0 %v2495
    %v2497 = vpop.f32.mrb[0].mxu0
    %v2498 = vadd.f32 %v2351, %v2497
    %v2499 = vpop.f32.mrb[0].mxu0
    %2500 = vdwg.mxu0
    %2501 = vmatprep.subr.mxu0 0.0
    %v2502 = vand.u32 %v1935, 4294901760
    %2503 = vmatpush1.msra.mxu0 %v2502
    %2504 = vmatprep.subr.mxu0 0.0
    %v2505 = vand.u32 %v1936, 4294901760
    %2506 = vmatpush1.msra.mxu0 %v2505
    %2507 = vmatprep.subr.mxu0 0.0
    %v2508 = vand.u32 %v1937, 4294901760
    %2509 = vmatpush1.msra.mxu0 %v2508
    %2510 = vmatprep.subr.mxu0 0.0
    %v2511 = vand.u32 %v1938, 4294901760
    %2512 = vmatpush1.msra.mxu0 %v2511
    %2513 = vmatprep.subr.mxu0 0.0
    %v2514 = vand.u32 %v1939, 4294901760
    %2515 = vmatpush1.msra.mxu0 %v2514
    %2516 = vmatprep.subr.mxu0 0.0
    %v2517 = vand.u32 %v1940, 4294901760
    %2518 = vmatpush1.msra.mxu0 %v2517
    %2519 = vmatprep.subr.mxu0 0.0
    %v2520 = vand.u32 %v1941, 4294901760
    %2521 = vmatpush1.msra.mxu0 %v2520
    %2522 = vmatprep.subr.mxu0 0.0
    %v2523 = vand.u32 %v1942, 4294901760
    %2524 = vmatpush1.msra.mxu0 %v2523
    %2525 = vmatprep.subr.mxu0 0.0
    %v2526 = vand.u32 %v1943, 4294901760
    %2527 = vmatpush1.msra.mxu0 %v2526
    %2528 = vmatprep.subr.mxu0 0.0
    %v2529 = vand.u32 %v1944, 4294901760
    %2530 = vmatpush1.msra.mxu0 %v2529
    %2531 = vmatprep.subr.mxu0 0.0
    %v2532 = vand.u32 %v1945, 4294901760
    %2533 = vmatpush1.msra.mxu0 %v2532
    %2534 = vmatprep.subr.mxu0 0.0
    %v2535 = vand.u32 %v1946, 4294901760
    %2536 = vmatpush1.msra.mxu0 %v2535
    %2537 = vmatprep.subr.mxu0 0.0
    %v2538 = vand.u32 %v1947, 4294901760
    %2539 = vmatpush1.msra.mxu0 %v2538
    %2540 = vmatprep.subr.mxu0 0.0
    %v2541 = vand.u32 %v1948, 4294901760
    %2542 = vmatpush1.msra.mxu0 %v2541
    %2543 = vmatprep.subr.mxu0 0.0
    %v2544 = vand.u32 %v1949, 4294901760
    %2545 = vmatpush1.msra.mxu0 %v2544
    %2546 = vmatprep.subr.mxu0 0.0
    %v2547 = vand.u32 %v1950, 4294901760
    %2548 = vmatpush1.msra.mxu0 %v2547
    %2549 = vmatprep.subr.mxu0 0.0
    %v2550 = vand.u32 %v1951, 4294901760
    %2551 = vmatpush1.msra.mxu0 %v2550
    %2552 = vmatprep.subr.mxu0 0.0
    %v2553 = vand.u32 %v1952, 4294901760
    %2554 = vmatpush1.msra.mxu0 %v2553
    %2555 = vmatprep.subr.mxu0 0.0
    %v2556 = vand.u32 %v1953, 4294901760
    %2557 = vmatpush1.msra.mxu0 %v2556
    %2558 = vmatprep.subr.mxu0 0.0
    %v2559 = vand.u32 %v1954, 4294901760
    %2560 = vmatpush1.msra.mxu0 %v2559
    %2561 = vmatprep.subr.mxu0 0.0
    %v2562 = vand.u32 %v1955, 4294901760
    %2563 = vmatpush1.msra.mxu0 %v2562
    %2564 = vmatprep.subr.mxu0 0.0
    %v2565 = vand.u32 %v1956, 4294901760
    %2566 = vmatpush1.msra.mxu0 %v2565
    %2567 = vmatprep.subr.mxu0 0.0
    %v2568 = vand.u32 %v1957, 4294901760
    %2569 = vmatpush1.msra.mxu0 %v2568
    %2570 = vmatprep.subr.mxu0 0.0
    %v2571 = vand.u32 %v1958, 4294901760
    %2572 = vmatpush1.msra.mxu0 %v2571
    %2573 = vmatprep.subr.mxu0 0.0
    %v2574 = vand.u32 %v1959, 4294901760
    %2575 = vmatpush1.msra.mxu0 %v2574
    %2576 = vmatprep.subr.mxu0 0.0
    %v2577 = vand.u32 %v1960, 4294901760
    %2578 = vmatpush1.msra.mxu0 %v2577
    %2579 = vmatprep.subr.mxu0 0.0
    %v2580 = vand.u32 %v1961, 4294901760
    %2581 = vmatpush1.msra.mxu0 %v2580
    %2582 = vmatprep.subr.mxu0 0.0
    %v2583 = vand.u32 %v1962, 4294901760
    %2584 = vmatpush1.msra.mxu0 %v2583
    %2585 = vmatprep.subr.mxu0 0.0
    %v2586 = vand.u32 %v1963, 4294901760
    %2587 = vmatpush1.msra.mxu0 %v2586
    %2588 = vmatprep.subr.mxu0 0.0
    %v2589 = vand.u32 %v1964, 4294901760
    %2590 = vmatpush1.msra.mxu0 %v2589
    %2591 = vmatprep.subr.mxu0 0.0
    %v2592 = vand.u32 %v1965, 4294901760
    %2593 = vmatpush1.msra.mxu0 %v2592
    %2594 = vmatprep.subr.mxu0 0.0
    %v2595 = vand.u32 %v1966, 4294901760
    %2596 = vmatpush1.msra.mxu0 %v2595
    %v2597 = vand.u32 %v1933, 4294901760
    %v2598 = vsub.f32 %v1933, %v2597
    %v2599 = vand.u32 %v2598, 4294901760
    %2600 = vmatprep.mubr.f32.mxu0 %v2599
    %v2601 = vand.u32 %v1931, 4294901760
    %v2602 = vsub.f32 %v1931, %v2601
    %v2603 = vand.u32 %v2602, 4294901760
    %2604 = vmatmul.mubr.f32.gmra.mrb[0].mxu0 %v2603
    %v2605 = vpop.f32.mrb[0].mxu0
    %v2606 = vadd.f32 %v2489, %v2605
    %v2607 = vpop.f32.mrb[0].mxu0
    %v2608 = vand.u32 %v1934, 4294901760
    %v2609 = vsub.f32 %v1934, %v2608
    %v2610 = vand.u32 %v2609, 4294901760
    %2611 = vmatprep.mubr.f32.mxu0 %v2610
    %v2612 = vand.u32 %v1932, 4294901760
    %v2613 = vsub.f32 %v1932, %v2612
    %v2614 = vand.u32 %v2613, 4294901760
    %2615 = vmatmul.mubr.f32.gmra.mrb[0].mxu0 %v2614
    %v2616 = vpop.f32.mrb[0].mxu0
    %v2617 = vadd.f32 %v2498, %v2616
    %v2618 = vpop.f32.mrb[0].mxu0
    %2619 = vdwg.mxu0
    %2620 = vmatprep.subr.mxu0 0.0
    %v2621 = vand.u32 %v1935, 4294901760
    %v2622 = vsub.f32 %v1935, %v2621
    %v2623 = vand.u32 %v2622, 4294901760
    %2624 = vmatpush1.msra.mxu0 %v2623
    %2625 = vmatprep.subr.mxu0 0.0
    %v2626 = vand.u32 %v1936, 4294901760
    %v2627 = vsub.f32 %v1936, %v2626
    %v2628 = vand.u32 %v2627, 4294901760
    %2629 = vmatpush1.msra.mxu0 %v2628
    %2630 = vmatprep.subr.mxu0 0.0
    %v2631 = vand.u32 %v1937, 4294901760
    %v2632 = vsub.f32 %v1937, %v2631
    %v2633 = vand.u32 %v2632, 4294901760
    %2634 = vmatpush1.msra.mxu0 %v2633
    %2635 = vmatprep.subr.mxu0 0.0
    %v2636 = vand.u32 %v1938, 4294901760
    %v2637 = vsub.f32 %v1938, %v2636
    %v2638 = vand.u32 %v2637, 4294901760
    %2639 = vmatpush1.msra.mxu0 %v2638
    %2640 = vmatprep.subr.mxu0 0.0
    %v2641 = vand.u32 %v1939, 4294901760
    %v2642 = vsub.f32 %v1939, %v2641
    %v2643 = vand.u32 %v2642, 4294901760
    %2644 = vmatpush1.msra.mxu0 %v2643
    %2645 = vmatprep.subr.mxu0 0.0
    %v2646 = vand.u32 %v1940, 4294901760
    %v2647 = vsub.f32 %v1940, %v2646
    %v2648 = vand.u32 %v2647, 4294901760
    %2649 = vmatpush1.msra.mxu0 %v2648
    %2650 = vmatprep.subr.mxu0 0.0
    %v2651 = vand.u32 %v1941, 4294901760
    %v2652 = vsub.f32 %v1941, %v2651
    %v2653 = vand.u32 %v2652, 4294901760
    %2654 = vmatpush1.msra.mxu0 %v2653
    %2655 = vmatprep.subr.mxu0 0.0
    %v2656 = vand.u32 %v1942, 4294901760
    %v2657 = vsub.f32 %v1942, %v2656
    %v2658 = vand.u32 %v2657, 4294901760
    %2659 = vmatpush1.msra.mxu0 %v2658
    %2660 = vmatprep.subr.mxu0 0.0
    %v2661 = vand.u32 %v1943, 4294901760
    %v2662 = vsub.f32 %v1943, %v2661
    %v2663 = vand.u32 %v2662, 4294901760
    %2664 = vmatpush1.msra.mxu0 %v2663
    %2665 = vmatprep.subr.mxu0 0.0
    %v2666 = vand.u32 %v1944, 4294901760
    %v2667 = vsub.f32 %v1944, %v2666
    %v2668 = vand.u32 %v2667, 4294901760
    %2669 = vmatpush1.msra.mxu0 %v2668
    %2670 = vmatprep.subr.mxu0 0.0
    %v2671 = vand.u32 %v1945, 4294901760
    %v2672 = vsub.f32 %v1945, %v2671
    %v2673 = vand.u32 %v2672, 4294901760
    %2674 = vmatpush1.msra.mxu0 %v2673
    %2675 = vmatprep.subr.mxu0 0.0
    %v2676 = vand.u32 %v1946, 4294901760
    %v2677 = vsub.f32 %v1946, %v2676
    %v2678 = vand.u32 %v2677, 4294901760
    %2679 = vmatpush1.msra.mxu0 %v2678
    %2680 = vmatprep.subr.mxu0 0.0
    %v2681 = vand.u32 %v1947, 4294901760
    %v2682 = vsub.f32 %v1947, %v2681
    %v2683 = vand.u32 %v2682, 4294901760
    %2684 = vmatpush1.msra.mxu0 %v2683
    %2685 = vmatprep.subr.mxu0 0.0
    %v2686 = vand.u32 %v1948, 4294901760
    %v2687 = vsub.f32 %v1948, %v2686
    %v2688 = vand.u32 %v2687, 4294901760
    %2689 = vmatpush1.msra.mxu0 %v2688
    %2690 = vmatprep.subr.mxu0 0.0
    %v2691 = vand.u32 %v1949, 4294901760
    %v2692 = vsub.f32 %v1949, %v2691
    %v2693 = vand.u32 %v2692, 4294901760
    %2694 = vmatpush1.msra.mxu0 %v2693
    %2695 = vmatprep.subr.mxu0 0.0
    %v2696 = vand.u32 %v1950, 4294901760
    %v2697 = vsub.f32 %v1950, %v2696
    %v2698 = vand.u32 %v2697, 4294901760
    %2699 = vmatpush1.msra.mxu0 %v2698
    %2700 = vmatprep.subr.mxu0 0.0
    %v2701 = vand.u32 %v1951, 4294901760
    %v2702 = vsub.f32 %v1951, %v2701
    %v2703 = vand.u32 %v2702, 4294901760
    %2704 = vmatpush1.msra.mxu0 %v2703
    %2705 = vmatprep.subr.mxu0 0.0
    %v2706 = vand.u32 %v1952, 4294901760
    %v2707 = vsub.f32 %v1952, %v2706
    %v2708 = vand.u32 %v2707, 4294901760
    %2709 = vmatpush1.msra.mxu0 %v2708
    %2710 = vmatprep.subr.mxu0 0.0
    %v2711 = vand.u32 %v1953, 4294901760
    %v2712 = vsub.f32 %v1953, %v2711
    %v2713 = vand.u32 %v2712, 4294901760
    %2714 = vmatpush1.msra.mxu0 %v2713
    %2715 = vmatprep.subr.mxu0 0.0
    %v2716 = vand.u32 %v1954, 4294901760
    %v2717 = vsub.f32 %v1954, %v2716
    %v2718 = vand.u32 %v2717, 4294901760
    %2719 = vmatpush1.msra.mxu0 %v2718
    %2720 = vmatprep.subr.mxu0 0.0
    %v2721 = vand.u32 %v1955, 4294901760
    %v2722 = vsub.f32 %v1955, %v2721
    %v2723 = vand.u32 %v2722, 4294901760
    %2724 = vmatpush1.msra.mxu0 %v2723
    %2725 = vmatprep.subr.mxu0 0.0
    %v2726 = vand.u32 %v1956, 4294901760
    %v2727 = vsub.f32 %v1956, %v2726
    %v2728 = vand.u32 %v2727, 4294901760
    %2729 = vmatpush1.msra.mxu0 %v2728
    %2730 = vmatprep.subr.mxu0 0.0
    %v2731 = vand.u32 %v1957, 4294901760
    %v2732 = vsub.f32 %v1957, %v2731
    %v2733 = vand.u32 %v2732, 4294901760
    %2734 = vmatpush1.msra.mxu0 %v2733
    %2735 = vmatprep.subr.mxu0 0.0
    %v2736 = vand.u32 %v1958, 4294901760
    %v2737 = vsub.f32 %v1958, %v2736
    %v2738 = vand.u32 %v2737, 4294901760
    %2739 = vmatpush1.msra.mxu0 %v2738
    %2740 = vmatprep.subr.mxu0 0.0
    %v2741 = vand.u32 %v1959, 4294901760
    %v2742 = vsub.f32 %v1959, %v2741
    %v2743 = vand.u32 %v2742, 4294901760
    %2744 = vmatpush1.msra.mxu0 %v2743
    %2745 = vmatprep.subr.mxu0 0.0
    %v2746 = vand.u32 %v1960, 4294901760
    %v2747 = vsub.f32 %v1960, %v2746
    %v2748 = vand.u32 %v2747, 4294901760
    %2749 = vmatpush1.msra.mxu0 %v2748
    %2750 = vmatprep.subr.mxu0 0.0
    %v2751 = vand.u32 %v1961, 4294901760
    %v2752 = vsub.f32 %v1961, %v2751
    %v2753 = vand.u32 %v2752, 4294901760
    %2754 = vmatpush1.msra.mxu0 %v2753
    %2755 = vmatprep.subr.mxu0 0.0
    %v2756 = vand.u32 %v1962, 4294901760
    %v2757 = vsub.f32 %v1962, %v2756
    %v2758 = vand.u32 %v2757, 4294901760
    %2759 = vmatpush1.msra.mxu0 %v2758
    %2760 = vmatprep.subr.mxu0 0.0
    %v2761 = vand.u32 %v1963, 4294901760
    %v2762 = vsub.f32 %v1963, %v2761
    %v2763 = vand.u32 %v2762, 4294901760
    %2764 = vmatpush1.msra.mxu0 %v2763
    %2765 = vmatprep.subr.mxu0 0.0
    %v2766 = vand.u32 %v1964, 4294901760
    %v2767 = vsub.f32 %v1964, %v2766
    %v2768 = vand.u32 %v2767, 4294901760
    %2769 = vmatpush1.msra.mxu0 %v2768
    %2770 = vmatprep.subr.mxu0 0.0
    %v2771 = vand.u32 %v1965, 4294901760
    %v2772 = vsub.f32 %v1965, %v2771
    %v2773 = vand.u32 %v2772, 4294901760
    %2774 = vmatpush1.msra.mxu0 %v2773
    %2775 = vmatprep.subr.mxu0 0.0
    %v2776 = vand.u32 %v1966, 4294901760
    %v2777 = vsub.f32 %v1966, %v2776
    %v2778 = vand.u32 %v2777, 4294901760
    %2779 = vmatpush1.msra.mxu0 %v2778
    %v2780 = vand.u32 %v1933, 4294901760
    %2781 = vmatprep.mubr.f32.mxu0 %v2780
    %v2782 = vand.u32 %v1931, 4294901760
    %2783 = vmatmul.mubr.f32.gmra.mrb[0].mxu0 %v2782
    %v2784 = vpop.f32.mrb[0].mxu0
    %v2785 = vadd.f32 %v2606, %v2784
    %v2786 = vpop.f32.mrb[0].mxu0
    %v2787 = vand.u32 %v1934, 4294901760
    %2788 = vmatprep.mubr.f32.mxu0 %v2787
    %v2789 = vand.u32 %v1932, 4294901760
    %2790 = vmatmul.mubr.f32.gmra.mrb[0].mxu0 %v2789
    %v2791 = vpop.f32.mrb[0].mxu0
    %v2792 = vadd.f32 %v2617, %v2791
    %v2793 = vpop.f32.mrb[0].mxu0
    %2794 = vdwg.mxu0
    %2795 = vmatprep.subr.mxu0 0.0
    %v2796 = vand.u32 %v1935, 4294901760
    %2797 = vmatpush1.msra.mxu0 %v2796
    %2798 = vmatprep.subr.mxu0 0.0
    %v2799 = vand.u32 %v1936, 4294901760
    %2800 = vmatpush1.msra.mxu0 %v2799
    %2801 = vmatprep.subr.mxu0 0.0
    %v2802 = vand.u32 %v1937, 4294901760
    %2803 = vmatpush1.msra.mxu0 %v2802
    %2804 = vmatprep.subr.mxu0 0.0
    %v2805 = vand.u32 %v1938, 4294901760
    %2806 = vmatpush1.msra.mxu0 %v2805
    %2807 = vmatprep.subr.mxu0 0.0
    %v2808 = vand.u32 %v1939, 4294901760
    %2809 = vmatpush1.msra.mxu0 %v2808
    %2810 = vmatprep.subr.mxu0 0.0
    %v2811 = vand.u32 %v1940, 4294901760
    %2812 = vmatpush1.msra.mxu0 %v2811
    %2813 = vmatprep.subr.mxu0 0.0
    %v2814 = vand.u32 %v1941, 4294901760
    %2815 = vmatpush1.msra.mxu0 %v2814
    %2816 = vmatprep.subr.mxu0 0.0
    %v2817 = vand.u32 %v1942, 4294901760
    %2818 = vmatpush1.msra.mxu0 %v2817
    %2819 = vmatprep.subr.mxu0 0.0
    %v2820 = vand.u32 %v1943, 4294901760
    %2821 = vmatpush1.msra.mxu0 %v2820
    %2822 = vmatprep.subr.mxu0 0.0
    %v2823 = vand.u32 %v1944, 4294901760
    %2824 = vmatpush1.msra.mxu0 %v2823
    %2825 = vmatprep.subr.mxu0 0.0
    %v2826 = vand.u32 %v1945, 4294901760
    %2827 = vmatpush1.msra.mxu0 %v2826
    %2828 = vmatprep.subr.mxu0 0.0
    %v2829 = vand.u32 %v1946, 4294901760
    %2830 = vmatpush1.msra.mxu0 %v2829
    %2831 = vmatprep.subr.mxu0 0.0
    %v2832 = vand.u32 %v1947, 4294901760
    %2833 = vmatpush1.msra.mxu0 %v2832
    %2834 = vmatprep.subr.mxu0 0.0
    %v2835 = vand.u32 %v1948, 4294901760
    %2836 = vmatpush1.msra.mxu0 %v2835
    %2837 = vmatprep.subr.mxu0 0.0
    %v2838 = vand.u32 %v1949, 4294901760
    %2839 = vmatpush1.msra.mxu0 %v2838
    %2840 = vmatprep.subr.mxu0 0.0
    %v2841 = vand.u32 %v1950, 4294901760
    %2842 = vmatpush1.msra.mxu0 %v2841
    %2843 = vmatprep.subr.mxu0 0.0
    %v2844 = vand.u32 %v1951, 4294901760
    %2845 = vmatpush1.msra.mxu0 %v2844
    %2846 = vmatprep.subr.mxu0 0.0
    %v2847 = vand.u32 %v1952, 4294901760
    %2848 = vmatpush1.msra.mxu0 %v2847
    %2849 = vmatprep.subr.mxu0 0.0
    %v2850 = vand.u32 %v1953, 4294901760
    %2851 = vmatpush1.msra.mxu0 %v2850
    %2852 = vmatprep.subr.mxu0 0.0
    %v2853 = vand.u32 %v1954, 4294901760
    %2854 = vmatpush1.msra.mxu0 %v2853
    %2855 = vmatprep.subr.mxu0 0.0
    %v2856 = vand.u32 %v1955, 4294901760
    %2857 = vmatpush1.msra.mxu0 %v2856
    %2858 = vmatprep.subr.mxu0 0.0
    %v2859 = vand.u32 %v1956, 4294901760
    %2860 = vmatpush1.msra.mxu0 %v2859
    %2861 = vmatprep.subr.mxu0 0.0
    %v2862 = vand.u32 %v1957, 4294901760
    %2863 = vmatpush1.msra.mxu0 %v2862
    %2864 = vmatprep.subr.mxu0 0.0
    %v2865 = vand.u32 %v1958, 4294901760
    %2866 = vmatpush1.msra.mxu0 %v2865
    %2867 = vmatprep.subr.mxu0 0.0
    %v2868 = vand.u32 %v1959, 4294901760
    %2869 = vmatpush1.msra.mxu0 %v2868
    %2870 = vmatprep.subr.mxu0 0.0
    %v2871 = vand.u32 %v1960, 4294901760
    %2872 = vmatpush1.msra.mxu0 %v2871
    %2873 = vmatprep.subr.mxu0 0.0
    %v2874 = vand.u32 %v1961, 4294901760
    %2875 = vmatpush1.msra.mxu0 %v2874
    %2876 = vmatprep.subr.mxu0 0.0
    %v2877 = vand.u32 %v1962, 4294901760
    %2878 = vmatpush1.msra.mxu0 %v2877
    %2879 = vmatprep.subr.mxu0 0.0
    %v2880 = vand.u32 %v1963, 4294901760
    %2881 = vmatpush1.msra.mxu0 %v2880
    %2882 = vmatprep.subr.mxu0 0.0
    %v2883 = vand.u32 %v1964, 4294901760
    %2884 = vmatpush1.msra.mxu0 %v2883
    %2885 = vmatprep.subr.mxu0 0.0
    %v2886 = vand.u32 %v1965, 4294901760
    %2887 = vmatpush1.msra.mxu0 %v2886
    %2888 = vmatprep.subr.mxu0 0.0
    %v2889 = vand.u32 %v1966, 4294901760
    %2890 = vmatpush1.msra.mxu0 %v2889
    %v2891 = vand.u32 %v1933, 4294901760
    %2892 = vmatprep.mubr.f32.mxu0 %v2891
    %v2893 = vand.u32 %v1931, 4294901760
    %2894 = vmatmul.mubr.f32.gmra.mrb[0].mxu0 %v2893
    %v2895 = vpop.f32.mrb[0].mxu0
    %v2896 = vadd.f32 %v2785, %v2895
    %v2897 = vpop.f32.mrb[0].mxu0
    %v2898 = vand.u32 %v1934, 4294901760
    %2899 = vmatprep.mubr.f32.mxu0 %v2898
    %v2900 = vand.u32 %v1932, 4294901760
    %2901 = vmatmul.mubr.f32.gmra.mrb[0].mxu0 %v2900
    %v2902 = vpop.f32.mrb[0].mxu0
    %v2903 = vadd.f32 %v2792, %v2902
    %v2904 = vpop.f32.mrb[0].mxu0
    %2905 = vdwg.mxu0
    %2906 = vmatprep.subr.mxu0 0.0
    %v2907 = vand.u32 %v1967, 4294901760
    %2908 = vmatpush1.msra.mxu0 %v2907
    %2909 = vmatprep.subr.mxu0 0.0
    %v2910 = vand.u32 %v1968, 4294901760
    %2911 = vmatpush1.msra.mxu0 %v2910
    %2912 = vmatprep.subr.mxu0 0.0
    %v2913 = vand.u32 %v1969, 4294901760
    %2914 = vmatpush1.msra.mxu0 %v2913
    %2915 = vmatprep.subr.mxu0 0.0
    %v2916 = vand.u32 %v1970, 4294901760
    %2917 = vmatpush1.msra.mxu0 %v2916
    %2918 = vmatprep.subr.mxu0 0.0
    %v2919 = vand.u32 %v1971, 4294901760
    %2920 = vmatpush1.msra.mxu0 %v2919
    %2921 = vmatprep.subr.mxu0 0.0
    %v2922 = vand.u32 %v1972, 4294901760
    %2923 = vmatpush1.msra.mxu0 %v2922
    %2924 = vmatprep.subr.mxu0 0.0
    %v2925 = vand.u32 %v1973, 4294901760
    %2926 = vmatpush1.msra.mxu0 %v2925
    %2927 = vmatprep.subr.mxu0 0.0
    %v2928 = vand.u32 %v1974, 4294901760
    %2929 = vmatpush1.msra.mxu0 %v2928
    %2930 = vmatprep.subr.mxu0 0.0
    %2931 = vmatpush1.msra.mxu0 0.0
    %2932 = vmatprep.subr.mxu0 0.0
    %2933 = vmatpush1.msra.mxu0 0.0
    %2934 = vmatprep.subr.mxu0 0.0
    %2935 = vmatpush1.msra.mxu0 0.0
    %2936 = vmatprep.subr.mxu0 0.0
    %2937 = vmatpush1.msra.mxu0 0.0
    %2938 = vmatprep.subr.mxu0 0.0
    %2939 = vmatpush1.msra.mxu0 0.0
    %2940 = vmatprep.subr.mxu0 0.0
    %2941 = vmatpush1.msra.mxu0 0.0
    %2942 = vmatprep.subr.mxu0 0.0
    %2943 = vmatpush1.msra.mxu0 0.0
    %2944 = vmatprep.subr.mxu0 0.0
    %2945 = vmatpush1.msra.mxu0 0.0
    %2946 = vmatprep.subr.mxu0 0.0
    %2947 = vmatpush1.msra.mxu0 0.0
    %2948 = vmatprep.subr.mxu0 0.0
    %2949 = vmatpush1.msra.mxu0 0.0
    %2950 = vmatprep.subr.mxu0 0.0
    %2951 = vmatpush1.msra.mxu0 0.0
    %2952 = vmatprep.subr.mxu0 0.0
    %2953 = vmatpush1.msra.mxu0 0.0
    %2954 = vmatprep.subr.mxu0 0.0
    %2955 = vmatpush1.msra.mxu0 0.0
    %2956 = vmatprep.subr.mxu0 0.0
    %2957 = vmatpush1.msra.mxu0 0.0
    %2958 = vmatprep.subr.mxu0 0.0
    %2959 = vmatpush1.msra.mxu0 0.0
    %2960 = vmatprep.subr.mxu0 0.0
    %2961 = vmatpush1.msra.mxu0 0.0
    %2962 = vmatprep.subr.mxu0 0.0
    %2963 = vmatpush1.msra.mxu0 0.0
    %2964 = vmatprep.subr.mxu0 0.0
    %2965 = vmatpush1.msra.mxu0 0.0
    %2966 = vmatprep.subr.mxu0 0.0
    %2967 = vmatpush1.msra.mxu0 0.0
    %2968 = vmatprep.subr.mxu0 0.0
    %2969 = vmatpush1.msra.mxu0 0.0
    %2970 = vmatprep.subr.mxu0 0.0
    %2971 = vmatpush1.msra.mxu0 0.0
    %2972 = vmatprep.subr.mxu0 0.0
    %2973 = vmatpush1.msra.mxu0 0.0
    %2974 = vmatprep.subr.mxu0 0.0
    %2975 = vmatpush1.msra.mxu0 0.0
    %2976 = vmatprep.subr.mxu0 0.0
    %2977 = vmatpush1.msra.mxu0 0.0
    %2978 = vmatprep.mubr.f32.mxu0 0.0
    %v2979 = vand.u32 %v1983, 4294901760
    %v2980 = vsub.f32 %v1983, %v2979
    %v2981 = vand.u32 %v2980, 4294901760
    %v2982 = vsub.f32 %v2980, %v2981
    %v2983 = vand.u32 %v2982, 4294901760
    %2984 = vmatmul.mubr.f32.gmra.mrb[0].mxu0 %v2983
    %v2985 = vpop.f32.mrb[0].mxu0
    %v2986 = vadd.f32 %v2896, %v2985
    %v2987 = vpop.f32.mrb[0].mxu0
    %2988 = vmatprep.mubr.f32.mxu0 0.0
    %v2989 = vand.u32 %v1986, 4294901760
    %v2990 = vsub.f32 %v1986, %v2989
    %v2991 = vand.u32 %v2990, 4294901760
    %v2992 = vsub.f32 %v2990, %v2991
    %v2993 = vand.u32 %v2992, 4294901760
    %2994 = vmatmul.mubr.f32.gmra.mrb[0].mxu0 %v2993
    %v2995 = vpop.f32.mrb[0].mxu0
    %v2996 = vadd.f32 %v2903, %v2995
    %v2997 = vpop.f32.mrb[0].mxu0
    %2998 = vdwg.mxu0
    %2999 = vmatprep.subr.mxu0 0.0
    %v3000 = vand.u32 %v1967, 4294901760
    %v3001 = vsub.f32 %v1967, %v3000
    %v3002 = vand.u32 %v3001, 4294901760
    %v3003 = vsub.f32 %v3001, %v3002
    %v3004 = vand.u32 %v3003, 4294901760
    %3005 = vmatpush1.msra.mxu0 %v3004
    %3006 = vmatprep.subr.mxu0 0.0
    %v3007 = vand.u32 %v1968, 4294901760
    %v3008 = vsub.f32 %v1968, %v3007
    %v3009 = vand.u32 %v3008, 4294901760
    %v3010 = vsub.f32 %v3008, %v3009
    %v3011 = vand.u32 %v3010, 4294901760
    %3012 = vmatpush1.msra.mxu0 %v3011
    %3013 = vmatprep.subr.mxu0 0.0
    %v3014 = vand.u32 %v1969, 4294901760
    %v3015 = vsub.f32 %v1969, %v3014
    %v3016 = vand.u32 %v3015, 4294901760
    %v3017 = vsub.f32 %v3015, %v3016
    %v3018 = vand.u32 %v3017, 4294901760
    %3019 = vmatpush1.msra.mxu0 %v3018
    %3020 = vmatprep.subr.mxu0 0.0
    %v3021 = vand.u32 %v1970, 4294901760
    %v3022 = vsub.f32 %v1970, %v3021
    %v3023 = vand.u32 %v3022, 4294901760
    %v3024 = vsub.f32 %v3022, %v3023
    %v3025 = vand.u32 %v3024, 4294901760
    %3026 = vmatpush1.msra.mxu0 %v3025
    %3027 = vmatprep.subr.mxu0 0.0
    %v3028 = vand.u32 %v1971, 4294901760
    %v3029 = vsub.f32 %v1971, %v3028
    %v3030 = vand.u32 %v3029, 4294901760
    %v3031 = vsub.f32 %v3029, %v3030
    %v3032 = vand.u32 %v3031, 4294901760
    %3033 = vmatpush1.msra.mxu0 %v3032
    %3034 = vmatprep.subr.mxu0 0.0
    %v3035 = vand.u32 %v1972, 4294901760
    %v3036 = vsub.f32 %v1972, %v3035
    %v3037 = vand.u32 %v3036, 4294901760
    %v3038 = vsub.f32 %v3036, %v3037
    %v3039 = vand.u32 %v3038, 4294901760
    %3040 = vmatpush1.msra.mxu0 %v3039
    %3041 = vmatprep.subr.mxu0 0.0
    %v3042 = vand.u32 %v1973, 4294901760
    %v3043 = vsub.f32 %v1973, %v3042
    %v3044 = vand.u32 %v3043, 4294901760
    %v3045 = vsub.f32 %v3043, %v3044
    %v3046 = vand.u32 %v3045, 4294901760
    %3047 = vmatpush1.msra.mxu0 %v3046
    %3048 = vmatprep.subr.mxu0 0.0
    %v3049 = vand.u32 %v1974, 4294901760
    %v3050 = vsub.f32 %v1974, %v3049
    %v3051 = vand.u32 %v3050, 4294901760
    %v3052 = vsub.f32 %v3050, %v3051
    %v3053 = vand.u32 %v3052, 4294901760
    %3054 = vmatpush1.msra.mxu0 %v3053
    %3055 = vmatprep.subr.mxu0 0.0
    %3056 = vmatpush1.msra.mxu0 0.0
    %3057 = vmatprep.subr.mxu0 0.0
    %3058 = vmatpush1.msra.mxu0 0.0
    %3059 = vmatprep.subr.mxu0 0.0
    %3060 = vmatpush1.msra.mxu0 0.0
    %3061 = vmatprep.subr.mxu0 0.0
    %3062 = vmatpush1.msra.mxu0 0.0
    %3063 = vmatprep.subr.mxu0 0.0
    %3064 = vmatpush1.msra.mxu0 0.0
    %3065 = vmatprep.subr.mxu0 0.0
    %3066 = vmatpush1.msra.mxu0 0.0
    %3067 = vmatprep.subr.mxu0 0.0
    %3068 = vmatpush1.msra.mxu0 0.0
    %3069 = vmatprep.subr.mxu0 0.0
    %3070 = vmatpush1.msra.mxu0 0.0
    %3071 = vmatprep.subr.mxu0 0.0
    %3072 = vmatpush1.msra.mxu0 0.0
    %3073 = vmatprep.subr.mxu0 0.0
    %3074 = vmatpush1.msra.mxu0 0.0
    %3075 = vmatprep.subr.mxu0 0.0
    %3076 = vmatpush1.msra.mxu0 0.0
    %3077 = vmatprep.subr.mxu0 0.0
    %3078 = vmatpush1.msra.mxu0 0.0
    %3079 = vmatprep.subr.mxu0 0.0
    %3080 = vmatpush1.msra.mxu0 0.0
    %3081 = vmatprep.subr.mxu0 0.0
    %3082 = vmatpush1.msra.mxu0 0.0
    %3083 = vmatprep.subr.mxu0 0.0
    %3084 = vmatpush1.msra.mxu0 0.0
    %3085 = vmatprep.subr.mxu0 0.0
    %3086 = vmatpush1.msra.mxu0 0.0
    %3087 = vmatprep.subr.mxu0 0.0
    %3088 = vmatpush1.msra.mxu0 0.0
    %3089 = vmatprep.subr.mxu0 0.0
    %3090 = vmatpush1.msra.mxu0 0.0
    %3091 = vmatprep.subr.mxu0 0.0
    %3092 = vmatpush1.msra.mxu0 0.0
    %3093 = vmatprep.subr.mxu0 0.0
    %3094 = vmatpush1.msra.mxu0 0.0
    %3095 = vmatprep.subr.mxu0 0.0
    %3096 = vmatpush1.msra.mxu0 0.0
    %3097 = vmatprep.subr.mxu0 0.0
    %3098 = vmatpush1.msra.mxu0 0.0
    %3099 = vmatprep.subr.mxu0 0.0
    %3100 = vmatpush1.msra.mxu0 0.0
    %3101 = vmatprep.subr.mxu0 0.0
    %3102 = vmatpush1.msra.mxu0 0.0
    %3103 = vmatprep.mubr.f32.mxu0 0.0
    %v3104 = vand.u32 %v1983, 4294901760
    %3105 = vmatmul.mubr.f32.gmra.mrb[0].mxu0 %v3104
    %v3106 = vpop.f32.mrb[0].mxu0
    %v3107 = vadd.f32 %v2986, %v3106
    %v3108 = vpop.f32.mrb[0].mxu0
    %3109 = vmatprep.mubr.f32.mxu0 0.0
    %v3110 = vand.u32 %v1986, 4294901760
    %3111 = vmatmul.mubr.f32.gmra.mrb[0].mxu0 %v3110
    %v3112 = vpop.f32.mrb[0].mxu0
    %v3113 = vadd.f32 %v2996, %v3112
    %v3114 = vpop.f32.mrb[0].mxu0
    %3115 = vdwg.mxu0
    %3116 = vmatprep.subr.mxu0 0.0
    %v3117 = vand.u32 %v1967, 4294901760
    %v3118 = vsub.f32 %v1967, %v3117
    %3119 = vmatpush1.msra.mxu0 %v3118
    %3120 = vmatprep.subr.mxu0 0.0
    %v3121 = vand.u32 %v1968, 4294901760
    %v3122 = vsub.f32 %v1968, %v3121
    %3123 = vmatpush1.msra.mxu0 %v3122
    %3124 = vmatprep.subr.mxu0 0.0
    %v3125 = vand.u32 %v1969, 4294901760
    %v3126 = vsub.f32 %v1969, %v3125
    %3127 = vmatpush1.msra.mxu0 %v3126
    %3128 = vmatprep.subr.mxu0 0.0
    %v3129 = vand.u32 %v1970, 4294901760
    %v3130 = vsub.f32 %v1970, %v3129
    %3131 = vmatpush1.msra.mxu0 %v3130
    %3132 = vmatprep.subr.mxu0 0.0
    %v3133 = vand.u32 %v1971, 4294901760
    %v3134 = vsub.f32 %v1971, %v3133
    %3135 = vmatpush1.msra.mxu0 %v3134
    %3136 = vmatprep.subr.mxu0 0.0
    %v3137 = vand.u32 %v1972, 4294901760
    %v3138 = vsub.f32 %v1972, %v3137
    %3139 = vmatpush1.msra.mxu0 %v3138
    %3140 = vmatprep.subr.mxu0 0.0
    %v3141 = vand.u32 %v1973, 4294901760
    %v3142 = vsub.f32 %v1973, %v3141
    %3143 = vmatpush1.msra.mxu0 %v3142
    %3144 = vmatprep.subr.mxu0 0.0
    %v3145 = vand.u32 %v1974, 4294901760
    %v3146 = vsub.f32 %v1974, %v3145
    %3147 = vmatpush1.msra.mxu0 %v3146
    %3148 = vmatprep.subr.mxu0 0.0
    %3149 = vmatpush1.msra.mxu0 0.0
    %3150 = vmatprep.subr.mxu0 0.0
    %3151 = vmatpush1.msra.mxu0 0.0
    %3152 = vmatprep.subr.mxu0 0.0
    %3153 = vmatpush1.msra.mxu0 0.0
    %3154 = vmatprep.subr.mxu0 0.0
    %3155 = vmatpush1.msra.mxu0 0.0
    %3156 = vmatprep.subr.mxu0 0.0
    %3157 = vmatpush1.msra.mxu0 0.0
    %3158 = vmatprep.subr.mxu0 0.0
    %3159 = vmatpush1.msra.mxu0 0.0
    %3160 = vmatprep.subr.mxu0 0.0
    %3161 = vmatpush1.msra.mxu0 0.0
    %3162 = vmatprep.subr.mxu0 0.0
    %3163 = vmatpush1.msra.mxu0 0.0
    %3164 = vmatprep.subr.mxu0 0.0
    %3165 = vmatpush1.msra.mxu0 0.0
    %3166 = vmatprep.subr.mxu0 0.0
    %3167 = vmatpush1.msra.mxu0 0.0
    %3168 = vmatprep.subr.mxu0 0.0
    %3169 = vmatpush1.msra.mxu0 0.0
    %3170 = vmatprep.subr.mxu0 0.0
    %3171 = vmatpush1.msra.mxu0 0.0
    %3172 = vmatprep.subr.mxu0 0.0
    %3173 = vmatpush1.msra.mxu0 0.0
    %3174 = vmatprep.subr.mxu0 0.0
    %3175 = vmatpush1.msra.mxu0 0.0
    %3176 = vmatprep.subr.mxu0 0.0
    %3177 = vmatpush1.msra.mxu0 0.0
    %3178 = vmatprep.subr.mxu0 0.0
    %3179 = vmatpush1.msra.mxu0 0.0
    %3180 = vmatprep.subr.mxu0 0.0
    %3181 = vmatpush1.msra.mxu0 0.0
    %3182 = vmatprep.subr.mxu0 0.0
    %3183 = vmatpush1.msra.mxu0 0.0
    %3184 = vmatprep.subr.mxu0 0.0
    %3185 = vmatpush1.msra.mxu0 0.0
    %3186 = vmatprep.subr.mxu0 0.0
    %3187 = vmatpush1.msra.mxu0 0.0
    %3188 = vmatprep.subr.mxu0 0.0
    %3189 = vmatpush1.msra.mxu0 0.0
    %3190 = vmatprep.subr.mxu0 0.0
    %3191 = vmatpush1.msra.mxu0 0.0
    %3192 = vmatprep.subr.mxu0 0.0
    %3193 = vmatpush1.msra.mxu0 0.0
    %3194 = vmatprep.subr.mxu0 0.0
    %3195 = vmatpush1.msra.mxu0 0.0
    %3196 = vmatprep.mubr.f32.mxu0 0.0
    %v3197 = vand.u32 %v1983, 4294901760
    %v3198 = vsub.f32 %v1983, %v3197
    %3199 = vmatmul.mubr.f32.gmra.mrb[0].mxu0 %v3198
    %v3200 = vpop.f32.mrb[0].mxu0
    %v3201 = vadd.f32 %v3107, %v3200
    %v3202 = vpop.f32.mrb[0].mxu0
    %3203 = vmatprep.mubr.f32.mxu0 0.0
    %v3204 = vand.u32 %v1986, 4294901760
    %v3205 = vsub.f32 %v1986, %v3204
    %3206 = vmatmul.mubr.f32.gmra.mrb[0].mxu0 %v3205
    %v3207 = vpop.f32.mrb[0].mxu0
    %v3208 = vadd.f32 %v3113, %v3207
    %v3209 = vpop.f32.mrb[0].mxu0
    %3210 = vdwg.mxu0
    %3211 = vmatprep.subr.mxu0 0.0
    %v3212 = vand.u32 %v1967, 4294901760
    %3213 = vmatpush1.msra.mxu0 %v3212
    %3214 = vmatprep.subr.mxu0 0.0
    %v3215 = vand.u32 %v1968, 4294901760
    %3216 = vmatpush1.msra.mxu0 %v3215
    %3217 = vmatprep.subr.mxu0 0.0
    %v3218 = vand.u32 %v1969, 4294901760
    %3219 = vmatpush1.msra.mxu0 %v3218
    %3220 = vmatprep.subr.mxu0 0.0
    %v3221 = vand.u32 %v1970, 4294901760
    %3222 = vmatpush1.msra.mxu0 %v3221
    %3223 = vmatprep.subr.mxu0 0.0
    %v3224 = vand.u32 %v1971, 4294901760
    %3225 = vmatpush1.msra.mxu0 %v3224
    %3226 = vmatprep.subr.mxu0 0.0
    %v3227 = vand.u32 %v1972, 4294901760
    %3228 = vmatpush1.msra.mxu0 %v3227
    %3229 = vmatprep.subr.mxu0 0.0
    %v3230 = vand.u32 %v1973, 4294901760
    %3231 = vmatpush1.msra.mxu0 %v3230
    %3232 = vmatprep.subr.mxu0 0.0
    %v3233 = vand.u32 %v1974, 4294901760
    %3234 = vmatpush1.msra.mxu0 %v3233
    %3235 = vmatprep.subr.mxu0 0.0
    %3236 = vmatpush1.msra.mxu0 0.0
    %3237 = vmatprep.subr.mxu0 0.0
    %3238 = vmatpush1.msra.mxu0 0.0
    %3239 = vmatprep.subr.mxu0 0.0
    %3240 = vmatpush1.msra.mxu0 0.0
    %3241 = vmatprep.subr.mxu0 0.0
    %3242 = vmatpush1.msra.mxu0 0.0
    %3243 = vmatprep.subr.mxu0 0.0
    %3244 = vmatpush1.msra.mxu0 0.0
    %3245 = vmatprep.subr.mxu0 0.0
    %3246 = vmatpush1.msra.mxu0 0.0
    %3247 = vmatprep.subr.mxu0 0.0
    %3248 = vmatpush1.msra.mxu0 0.0
    %3249 = vmatprep.subr.mxu0 0.0
    %3250 = vmatpush1.msra.mxu0 0.0
    %3251 = vmatprep.subr.mxu0 0.0
    %3252 = vmatpush1.msra.mxu0 0.0
    %3253 = vmatprep.subr.mxu0 0.0
    %3254 = vmatpush1.msra.mxu0 0.0
    %3255 = vmatprep.subr.mxu0 0.0
    %3256 = vmatpush1.msra.mxu0 0.0
    %3257 = vmatprep.subr.mxu0 0.0
    %3258 = vmatpush1.msra.mxu0 0.0
    %3259 = vmatprep.subr.mxu0 0.0
    %3260 = vmatpush1.msra.mxu0 0.0
    %3261 = vmatprep.subr.mxu0 0.0
    %3262 = vmatpush1.msra.mxu0 0.0
    %3263 = vmatprep.subr.mxu0 0.0
    %3264 = vmatpush1.msra.mxu0 0.0
    %3265 = vmatprep.subr.mxu0 0.0
    %3266 = vmatpush1.msra.mxu0 0.0
    %3267 = vmatprep.subr.mxu0 0.0
    %3268 = vmatpush1.msra.mxu0 0.0
    %3269 = vmatprep.subr.mxu0 0.0
    %3270 = vmatpush1.msra.mxu0 0.0
    %3271 = vmatprep.subr.mxu0 0.0
    %3272 = vmatpush1.msra.mxu0 0.0
    %3273 = vmatprep.subr.mxu0 0.0
    %3274 = vmatpush1.msra.mxu0 0.0
    %3275 = vmatprep.subr.mxu0 0.0
    %3276 = vmatpush1.msra.mxu0 0.0
    %3277 = vmatprep.subr.mxu0 0.0
    %3278 = vmatpush1.msra.mxu0 0.0
    %3279 = vmatprep.subr.mxu0 0.0
    %3280 = vmatpush1.msra.mxu0 0.0
    %3281 = vmatprep.subr.mxu0 0.0
    %3282 = vmatpush1.msra.mxu0 0.0
    %3283 = vmatprep.mubr.f32.mxu0 0.0
    %v3284 = vand.u32 %v1983, 4294901760
    %v3285 = vsub.f32 %v1983, %v3284
    %v3286 = vand.u32 %v3285, 4294901760
    %3287 = vmatmul.mubr.f32.gmra.mrb[0].mxu0 %v3286
    %v3288 = vpop.f32.mrb[0].mxu0
    %v3289 = vadd.f32 %v3201, %v3288
    %v3290 = vpop.f32.mrb[0].mxu0
    %3291 = vmatprep.mubr.f32.mxu0 0.0
    %v3292 = vand.u32 %v1986, 4294901760
    %v3293 = vsub.f32 %v1986, %v3292
    %v3294 = vand.u32 %v3293, 4294901760
    %3295 = vmatmul.mubr.f32.gmra.mrb[0].mxu0 %v3294
    %v3296 = vpop.f32.mrb[0].mxu0
    %v3297 = vadd.f32 %v3208, %v3296
    %v3298 = vpop.f32.mrb[0].mxu0
    %3299 = vdwg.mxu0
    %3300 = vmatprep.subr.mxu0 0.0
    %v3301 = vand.u32 %v1967, 4294901760
    %v3302 = vsub.f32 %v1967, %v3301
    %v3303 = vand.u32 %v3302, 4294901760
    %3304 = vmatpush1.msra.mxu0 %v3303
    %3305 = vmatprep.subr.mxu0 0.0
    %v3306 = vand.u32 %v1968, 4294901760
    %v3307 = vsub.f32 %v1968, %v3306
    %v3308 = vand.u32 %v3307, 4294901760
    %3309 = vmatpush1.msra.mxu0 %v3308
    %3310 = vmatprep.subr.mxu0 0.0
    %v3311 = vand.u32 %v1969, 4294901760
    %v3312 = vsub.f32 %v1969, %v3311
    %v3313 = vand.u32 %v3312, 4294901760
    %3314 = vmatpush1.msra.mxu0 %v3313
    %3315 = vmatprep.subr.mxu0 0.0
    %v3316 = vand.u32 %v1970, 4294901760
    %v3317 = vsub.f32 %v1970, %v3316
    %v3318 = vand.u32 %v3317, 4294901760
    %3319 = vmatpush1.msra.mxu0 %v3318
    %3320 = vmatprep.subr.mxu0 0.0
    %v3321 = vand.u32 %v1971, 4294901760
    %v3322 = vsub.f32 %v1971, %v3321
    %v3323 = vand.u32 %v3322, 4294901760
    %3324 = vmatpush1.msra.mxu0 %v3323
    %3325 = vmatprep.subr.mxu0 0.0
    %v3326 = vand.u32 %v1972, 4294901760
    %v3327 = vsub.f32 %v1972, %v3326
    %v3328 = vand.u32 %v3327, 4294901760
    %3329 = vmatpush1.msra.mxu0 %v3328
    %3330 = vmatprep.subr.mxu0 0.0
    %v3331 = vand.u32 %v1973, 4294901760
    %v3332 = vsub.f32 %v1973, %v3331
    %v3333 = vand.u32 %v3332, 4294901760
    %3334 = vmatpush1.msra.mxu0 %v3333
    %3335 = vmatprep.subr.mxu0 0.0
    %v3336 = vand.u32 %v1974, 4294901760
    %v3337 = vsub.f32 %v1974, %v3336
    %v3338 = vand.u32 %v3337, 4294901760
    %3339 = vmatpush1.msra.mxu0 %v3338
    %3340 = vmatprep.subr.mxu0 0.0
    %3341 = vmatpush1.msra.mxu0 0.0
    %3342 = vmatprep.subr.mxu0 0.0
    %3343 = vmatpush1.msra.mxu0 0.0
    %3344 = vmatprep.subr.mxu0 0.0
    %3345 = vmatpush1.msra.mxu0 0.0
    %3346 = vmatprep.subr.mxu0 0.0
    %3347 = vmatpush1.msra.mxu0 0.0
    %3348 = vmatprep.subr.mxu0 0.0
    %3349 = vmatpush1.msra.mxu0 0.0
    %3350 = vmatprep.subr.mxu0 0.0
    %3351 = vmatpush1.msra.mxu0 0.0
    %3352 = vmatprep.subr.mxu0 0.0
    %3353 = vmatpush1.msra.mxu0 0.0
    %3354 = vmatprep.subr.mxu0 0.0
    %3355 = vmatpush1.msra.mxu0 0.0
    %3356 = vmatprep.subr.mxu0 0.0
    %3357 = vmatpush1.msra.mxu0 0.0
    %3358 = vmatprep.subr.mxu0 0.0
    %3359 = vmatpush1.msra.mxu0 0.0
    %3360 = vmatprep.subr.mxu0 0.0
    %3361 = vmatpush1.msra.mxu0 0.0
    %3362 = vmatprep.subr.mxu0 0.0
    %3363 = vmatpush1.msra.mxu0 0.0
    %3364 = vmatprep.subr.mxu0 0.0
    %3365 = vmatpush1.msra.mxu0 0.0
    %3366 = vmatprep.subr.mxu0 0.0
    %3367 = vmatpush1.msra.mxu0 0.0
    %3368 = vmatprep.subr.mxu0 0.0
    %3369 = vmatpush1.msra.mxu0 0.0
    %3370 = vmatprep.subr.mxu0 0.0
    %3371 = vmatpush1.msra.mxu0 0.0
    %3372 = vmatprep.subr.mxu0 0.0
    %3373 = vmatpush1.msra.mxu0 0.0
    %3374 = vmatprep.subr.mxu0 0.0
    %3375 = vmatpush1.msra.mxu0 0.0
    %3376 = vmatprep.subr.mxu0 0.0
    %3377 = vmatpush1.msra.mxu0 0.0
    %3378 = vmatprep.subr.mxu0 0.0
    %3379 = vmatpush1.msra.mxu0 0.0
    %3380 = vmatprep.subr.mxu0 0.0
    %3381 = vmatpush1.msra.mxu0 0.0
    %3382 = vmatprep.subr.mxu0 0.0
    %3383 = vmatpush1.msra.mxu0 0.0
    %3384 = vmatprep.subr.mxu0 0.0
    %3385 = vmatpush1.msra.mxu0 0.0
    %3386 = vmatprep.subr.mxu0 0.0
    %3387 = vmatpush1.msra.mxu0 0.0
    %3388 = vmatprep.mubr.f32.mxu0 0.0
    %v3389 = vand.u32 %v1983, 4294901760
    %3390 = vmatmul.mubr.f32.gmra.mrb[0].mxu0 %v3389
    %v3391 = vpop.f32.mrb[0].mxu0
    %v3392 = vadd.f32 %v3289, %v3391
    %v3393 = vpop.f32.mrb[0].mxu0
    %3394 = vmatprep.mubr.f32.mxu0 0.0
    %v3395 = vand.u32 %v1986, 4294901760
    %3396 = vmatmul.mubr.f32.gmra.mrb[0].mxu0 %v3395
    %v3397 = vpop.f32.mrb[0].mxu0
    %v3398 = vadd.f32 %v3297, %v3397
    %v3399 = vpop.f32.mrb[0].mxu0
    %3400 = vdwg.mxu0
    %3401 = vmatprep.subr.mxu0 0.0
    %v3402 = vand.u32 %v1967, 4294901760
    %3403 = vmatpush1.msra.mxu0 %v3402
    %3404 = vmatprep.subr.mxu0 0.0
    %v3405 = vand.u32 %v1968, 4294901760
    %3406 = vmatpush1.msra.mxu0 %v3405
    %3407 = vmatprep.subr.mxu0 0.0
    %v3408 = vand.u32 %v1969, 4294901760
    %3409 = vmatpush1.msra.mxu0 %v3408
    %3410 = vmatprep.subr.mxu0 0.0
    %v3411 = vand.u32 %v1970, 4294901760
    %3412 = vmatpush1.msra.mxu0 %v3411
    %3413 = vmatprep.subr.mxu0 0.0
    %v3414 = vand.u32 %v1971, 4294901760
    %3415 = vmatpush1.msra.mxu0 %v3414
    %3416 = vmatprep.subr.mxu0 0.0
    %v3417 = vand.u32 %v1972, 4294901760
    %3418 = vmatpush1.msra.mxu0 %v3417
    %3419 = vmatprep.subr.mxu0 0.0
    %v3420 = vand.u32 %v1973, 4294901760
    %3421 = vmatpush1.msra.mxu0 %v3420
    %3422 = vmatprep.subr.mxu0 0.0
    %v3423 = vand.u32 %v1974, 4294901760
    %3424 = vmatpush1.msra.mxu0 %v3423
    %3425 = vmatprep.subr.mxu0 0.0
    %3426 = vmatpush1.msra.mxu0 0.0
    %3427 = vmatprep.subr.mxu0 0.0
    %3428 = vmatpush1.msra.mxu0 0.0
    %3429 = vmatprep.subr.mxu0 0.0
    %3430 = vmatpush1.msra.mxu0 0.0
    %3431 = vmatprep.subr.mxu0 0.0
    %3432 = vmatpush1.msra.mxu0 0.0
    %3433 = vmatprep.subr.mxu0 0.0
    %3434 = vmatpush1.msra.mxu0 0.0
    %3435 = vmatprep.subr.mxu0 0.0
    %3436 = vmatpush1.msra.mxu0 0.0
    %3437 = vmatprep.subr.mxu0 0.0
    %3438 = vmatpush1.msra.mxu0 0.0
    %3439 = vmatprep.subr.mxu0 0.0
    %3440 = vmatpush1.msra.mxu0 0.0
    %3441 = vmatprep.subr.mxu0 0.0
    %3442 = vmatpush1.msra.mxu0 0.0
    %3443 = vmatprep.subr.mxu0 0.0
    %3444 = vmatpush1.msra.mxu0 0.0
    %3445 = vmatprep.subr.mxu0 0.0
    %3446 = vmatpush1.msra.mxu0 0.0
    %3447 = vmatprep.subr.mxu0 0.0
    %3448 = vmatpush1.msra.mxu0 0.0
    %3449 = vmatprep.subr.mxu0 0.0
    %3450 = vmatpush1.msra.mxu0 0.0
    %3451 = vmatprep.subr.mxu0 0.0
    %3452 = vmatpush1.msra.mxu0 0.0
    %3453 = vmatprep.subr.mxu0 0.0
    %3454 = vmatpush1.msra.mxu0 0.0
    %3455 = vmatprep.subr.mxu0 0.0
    %3456 = vmatpush1.msra.mxu0 0.0
    %3457 = vmatprep.subr.mxu0 0.0
    %3458 = vmatpush1.msra.mxu0 0.0
    %3459 = vmatprep.subr.mxu0 0.0
    %3460 = vmatpush1.msra.mxu0 0.0
    %3461 = vmatprep.subr.mxu0 0.0
    %3462 = vmatpush1.msra.mxu0 0.0
    %3463 = vmatprep.subr.mxu0 0.0
    %3464 = vmatpush1.msra.mxu0 0.0
    %3465 = vmatprep.subr.mxu0 0.0
    %3466 = vmatpush1.msra.mxu0 0.0
    %3467 = vmatprep.subr.mxu0 0.0
    %3468 = vmatpush1.msra.mxu0 0.0
    %3469 = vmatprep.subr.mxu0 0.0
    %3470 = vmatpush1.msra.mxu0 0.0
    %3471 = vmatprep.subr.mxu0 0.0
    %3472 = vmatpush1.msra.mxu0 0.0
    %3473 = vmatprep.mubr.f32.mxu0 0.0
    %v3474 = vand.u32 %v1983, 4294901760
    %3475 = vmatmul.mubr.f32.gmra.mrb[0].mxu0 %v3474
    %v3476 = vpop.f32.mrb[0].mxu0
    %v3477 = vadd.f32 %v3392, %v3476
    %v3478 = vpop.f32.mrb[0].mxu0
    %3479 = vmatprep.mubr.f32.mxu0 0.0
    %v3480 = vand.u32 %v1986, 4294901760
    %3481 = vmatmul.mubr.f32.gmra.mrb[0].mxu0 %v3480
    %v3482 = vpop.f32.mrb[0].mxu0
    %v3483 = vadd.f32 %v3398, %v3482
    %v3484 = vpop.f32.mrb[0].mxu0
    %3485 = vdwg.mxu0
    %v3486 = vmax.f32 %v3477, 0.0
    %v3487 = vmax.f32 %v3483, 0.0
    %3490 = vrot.lane.b32.xlu0 %v3486, 64
    %v3491 = vpop.permute.xlu0 %3490
    %3492 = vrot.lane.b32.xlu0 %v3487, 64
    %v3493 = vpop.permute.xlu0 %3492
    %v3496 = vmax.f32 %v3486, %v3491
    %v3497 = vmax.f32 %v3487, %v3493
    %3498 = vst.msk [vmem:[#allocation5] sm:$0xff] %vm42, %v3496
    %3499 = vst.msk [vmem:[#allocation5 + $0x8] sm:$0xff] %vm42, %v3497
    %v3500 = vld [vmem:[#allocation5] sm:$0x1]
    %v3501 = vld [vmem:[#allocation5 + $0x8] sm:$0x1]
    %v3502 = vld [vmem:[#allocation5 + $0x1] sm:$0x1]
    %v3503 = vld [vmem:[#allocation5 + $0x9] sm:$0x1]
    %v3504 = vmax.f32 %v3500, %v3502
    %v3505 = vmax.f32 %v3501, %v3503
    %v3506 = vld [vmem:[#allocation5 + $0x2] sm:$0x1]
    %v3507 = vld [vmem:[#allocation5 + $0xa] sm:$0x1]
    %v3508 = vld [vmem:[#allocation5 + $0x3] sm:$0x1]
    %v3509 = vld [vmem:[#allocation5 + $0xb] sm:$0x1]
    %v3510 = vmax.f32 %v3506, %v3508
    %v3511 = vmax.f32 %v3507, %v3509
    %v3512 = vld [vmem:[#allocation5 + $0x4] sm:$0x1]
    %v3513 = vld [vmem:[#allocation5 + $0xc] sm:$0x1]
    %v3514 = vld [vmem:[#allocation5 + $0x5] sm:$0x1]
    %v3515 = vld [vmem:[#allocation5 + $0xd] sm:$0x1]
    %v3516 = vmax.f32 %v3512, %v3514
    %v3517 = vmax.f32 %v3513, %v3515
    %v3518 = vld [vmem:[#allocation5 + $0x6] sm:$0x1]
    %v3519 = vld [vmem:[#allocation5 + $0xe] sm:$0x1]
    %v3520 = vld [vmem:[#allocation5 + $0x7] sm:$0x1]
    %v3521 = vld [vmem:[#allocation5 + $0xf] sm:$0x1]
    %v3522 = vmax.f32 %v3518, %v3520
    %v3523 = vmax.f32 %v3519, %v3521
    %v3526 = vrot.slane %v3505, 7
    %vm3527 = vcmask 1041409
    %v3528 = vsel %vm3527, %v3526, %v3504
    %v3532 = vrot.slane %v3511, 7
    %v3533 = vsel %vm3527, %v3532, %v3510
    %3534 = vrot.lane.b32.xlu0 %v3533, 64
    %v3535 = vpop.permute.xlu0 %3534
    %v3539 = vrot.slane %v3517, 7
    %v3540 = vsel %vm3527, %v3539, %v3516
    %v3544 = vrot.slane %v3523, 7
    %v3545 = vsel %vm3527, %v3544, %v3522
    %3546 = vrot.lane.b32.xlu0 %v3545, 64
    %v3547 = vpop.permute.xlu0 %3546
    %v3549 = vsel %vm42, %v3528, %v3535
    %v3550 = vsel %vm42, %v3540, %v3547
    %v3551 = vld [vmem:[%s5] sm:$0xff]
    %v3552 = vld [vmem:[%s5 + $0x8] sm:$0xff]
    %v3553 = vld [vmem:[%s5 + $0x10] sm:$0xff]
    %v3554 = vld [vmem:[%s5 + $0x18] sm:$0xff]
    %v3555 = vld [vmem:[%s5 + $0x20] sm:$0xff]
    %v3556 = vld [vmem:[%s5 + $0x28] sm:$0xff]
    %v3557 = vld [vmem:[%s5 + $0x30] sm:$0xff]
    %v3558 = vld [vmem:[%s5 + $0x38] sm:$0xff]
    %v3559 = vld [vmem:[%s5 + $0x40] sm:$0xff]
    %v3560 = vld [vmem:[%s5 + $0x48] sm:$0xff]
    %v3561 = vld [vmem:[%s5 + $0x50] sm:$0xff]
    %v3562 = vld [vmem:[%s5 + $0x58] sm:$0xff]
    %v3563 = vld [vmem:[%s5 + $0x60] sm:$0xff]
    %v3564 = vld [vmem:[%s5 + $0x68] sm:$0xff]
    %v3565 = vld [vmem:[%s5 + $0x70] sm:$0xff]
    %v3566 = vld [vmem:[%s5 + $0x78] sm:$0xff]
    %v3567 = vld [vmem:[%s5 + $0x80] sm:$0xff]
    %v3568 = vld [vmem:[%s5 + $0x88] sm:$0xff]
    %v3569 = vld [vmem:[%s5 + $0x90] sm:$0xff]
    %v3570 = vld [vmem:[%s5 + $0x98] sm:$0xff]
    %v3571 = vld [vmem:[%s5 + $0xa0] sm:$0xff]
    %v3572 = vld [vmem:[%s5 + $0xa8] sm:$0xff]
    %v3573 = vld [vmem:[%s5 + $0xb0] sm:$0xff]
    %v3574 = vld [vmem:[%s5 + $0xb8] sm:$0xff]
    %v3575 = vld [vmem:[%s5 + $0xc0] sm:$0xff]
    %v3576 = vld [vmem:[%s5 + $0xc8] sm:$0xff]
    %v3577 = vld [vmem:[%s5 + $0xd0] sm:$0xff]
    %v3578 = vld [vmem:[%s5 + $0xd8] sm:$0xff]
    %v3579 = vld [vmem:[%s5 + $0xe0] sm:$0xff]
    %v3580 = vld [vmem:[%s5 + $0xe8] sm:$0xff]
    %v3581 = vld [vmem:[%s5 + $0xf0] sm:$0xff]
    %v3582 = vld [vmem:[%s5 + $0xf8] sm:$0xff]
    %v3583 = vld [vmem:[%s6] sm:$0x1]
    %v3585 = vlaneseq
    %v3586 = vshrl.u32 %v3585, 7
    %v3587 = vsub.s32 0, %v3586
    %v3588 = vrot.slane %v3583, %v3587
    %3590 = vmatprep.subr.mxu0 0.0
    %v3591 = vand.u32 %v3551, 4294901760
    %3592 = vmatpush1.msra.mxu0 %v3591
    %3593 = vmatprep.subr.mxu0 0.0
    %v3594 = vand.u32 %v3552, 4294901760
    %3595 = vmatpush1.msra.mxu0 %v3594
    %3596 = vmatprep.subr.mxu0 0.0
    %v3597 = vand.u32 %v3553, 4294901760
    %3598 = vmatpush1.msra.mxu0 %v3597
    %3599 = vmatprep.subr.mxu0 0.0
    %v3600 = vand.u32 %v3554, 4294901760
    %3601 = vmatpush1.msra.mxu0 %v3600
    %3602 = vmatprep.subr.mxu0 0.0
    %v3603 = vand.u32 %v3555, 4294901760
    %3604 = vmatpush1.msra.mxu0 %v3603
    %3605 = vmatprep.subr.mxu0 0.0
    %v3606 = vand.u32 %v3556, 4294901760
    %3607 = vmatpush1.msra.mxu0 %v3606
    %3608 = vmatprep.subr.mxu0 0.0
    %v3609 = vand.u32 %v3557, 4294901760
    %3610 = vmatpush1.msra.mxu0 %v3609
    %3611 = vmatprep.subr.mxu0 0.0
    %v3612 = vand.u32 %v3558, 4294901760
    %3613 = vmatpush1.msra.mxu0 %v3612
    %3614 = vmatprep.subr.mxu0 0.0
    %v3615 = vand.u32 %v3559, 4294901760
    %3616 = vmatpush1.msra.mxu0 %v3615
    %3617 = vmatprep.subr.mxu0 0.0
    %v3618 = vand.u32 %v3560, 4294901760
    %3619 = vmatpush1.msra.mxu0 %v3618
    %3620 = vmatprep.subr.mxu0 0.0
    %v3621 = vand.u32 %v3561, 4294901760
    %3622 = vmatpush1.msra.mxu0 %v3621
    %3623 = vmatprep.subr.mxu0 0.0
    %v3624 = vand.u32 %v3562, 4294901760
    %3625 = vmatpush1.msra.mxu0 %v3624
    %3626 = vmatprep.subr.mxu0 0.0
    %v3627 = vand.u32 %v3563, 4294901760
    %3628 = vmatpush1.msra.mxu0 %v3627
    %3629 = vmatprep.subr.mxu0 0.0
    %v3630 = vand.u32 %v3564, 4294901760
    %3631 = vmatpush1.msra.mxu0 %v3630
    %3632 = vmatprep.subr.mxu0 0.0
    %v3633 = vand.u32 %v3565, 4294901760
    %3634 = vmatpush1.msra.mxu0 %v3633
    %3635 = vmatprep.subr.mxu0 0.0
    %v3636 = vand.u32 %v3566, 4294901760
    %3637 = vmatpush1.msra.mxu0 %v3636
    %3638 = vmatprep.subr.mxu0 0.0
    %v3639 = vand.u32 %v3567, 4294901760
    %3640 = vmatpush1.msra.mxu0 %v3639
    %3641 = vmatprep.subr.mxu0 0.0
    %v3642 = vand.u32 %v3568, 4294901760
    %3643 = vmatpush1.msra.mxu0 %v3642
    %3644 = vmatprep.subr.mxu0 0.0
    %v3645 = vand.u32 %v3569, 4294901760
    %3646 = vmatpush1.msra.mxu0 %v3645
    %3647 = vmatprep.subr.mxu0 0.0
    %v3648 = vand.u32 %v3570, 4294901760
    %3649 = vmatpush1.msra.mxu0 %v3648
    %3650 = vmatprep.subr.mxu0 0.0
    %v3651 = vand.u32 %v3571, 4294901760
    %3652 = vmatpush1.msra.mxu0 %v3651
    %3653 = vmatprep.subr.mxu0 0.0
    %v3654 = vand.u32 %v3572, 4294901760
    %3655 = vmatpush1.msra.mxu0 %v3654
    %3656 = vmatprep.subr.mxu0 0.0
    %v3657 = vand.u32 %v3573, 4294901760
    %3658 = vmatpush1.msra.mxu0 %v3657
    %3659 = vmatprep.subr.mxu0 0.0
    %v3660 = vand.u32 %v3574, 4294901760
    %3661 = vmatpush1.msra.mxu0 %v3660
    %3662 = vmatprep.subr.mxu0 0.0
    %v3663 = vand.u32 %v3575, 4294901760
    %3664 = vmatpush1.msra.mxu0 %v3663
    %3665 = vmatprep.subr.mxu0 0.0
    %v3666 = vand.u32 %v3576, 4294901760
    %3667 = vmatpush1.msra.mxu0 %v3666
    %3668 = vmatprep.subr.mxu0 0.0
    %v3669 = vand.u32 %v3577, 4294901760
    %3670 = vmatpush1.msra.mxu0 %v3669
    %3671 = vmatprep.subr.mxu0 0.0
    %v3672 = vand.u32 %v3578, 4294901760
    %3673 = vmatpush1.msra.mxu0 %v3672
    %3674 = vmatprep.subr.mxu0 0.0
    %v3675 = vand.u32 %v3579, 4294901760
    %3676 = vmatpush1.msra.mxu0 %v3675
    %3677 = vmatprep.subr.mxu0 0.0
    %v3678 = vand.u32 %v3580, 4294901760
    %3679 = vmatpush1.msra.mxu0 %v3678
    %3680 = vmatprep.subr.mxu0 0.0
    %v3681 = vand.u32 %v3581, 4294901760
    %3682 = vmatpush1.msra.mxu0 %v3681
    %3683 = vmatprep.subr.mxu0 0.0
    %v3684 = vand.u32 %v3582, 4294901760
    %3685 = vmatpush1.msra.mxu0 %v3684
    %v3686 = vand.u32 %v3550, 4294901760
    %v3687 = vsub.f32 %v3550, %v3686
    %v3688 = vand.u32 %v3687, 4294901760
    %v3689 = vsub.f32 %v3687, %v3688
    %v3690 = vand.u32 %v3689, 4294901760
    %3691 = vmatprep.mubr.f32.mxu0 %v3690
    %v3692 = vand.u32 %v3549, 4294901760
    %v3693 = vsub.f32 %v3549, %v3692
    %v3694 = vand.u32 %v3693, 4294901760
    %v3695 = vsub.f32 %v3693, %v3694
    %v3696 = vand.u32 %v3695, 4294901760
    %3697 = vmatmul.mubr.f32.gmra.mrb[0].mxu0 %v3696
    %v3698 = vpop.f32.mrb[0].mxu0
    %v3699 = vadd.f32 %v3588, %v3698
    %v3700 = vpop.f32.mrb[0].mxu0
    %3701 = vdwg.mxu0
    %3702 = vmatprep.subr.mxu0 0.0
    %v3703 = vand.u32 %v3551, 4294901760
    %v3704 = vsub.f32 %v3551, %v3703
    %v3705 = vand.u32 %v3704, 4294901760
    %v3706 = vsub.f32 %v3704, %v3705
    %v3707 = vand.u32 %v3706, 4294901760
    %3708 = vmatpush1.msra.mxu0 %v3707
    %3709 = vmatprep.subr.mxu0 0.0
    %v3710 = vand.u32 %v3552, 4294901760
    %v3711 = vsub.f32 %v3552, %v3710
    %v3712 = vand.u32 %v3711, 4294901760
    %v3713 = vsub.f32 %v3711, %v3712
    %v3714 = vand.u32 %v3713, 4294901760
    %3715 = vmatpush1.msra.mxu0 %v3714
    %3716 = vmatprep.subr.mxu0 0.0
    %v3717 = vand.u32 %v3553, 4294901760
    %v3718 = vsub.f32 %v3553, %v3717
    %v3719 = vand.u32 %v3718, 4294901760
    %v3720 = vsub.f32 %v3718, %v3719
    %v3721 = vand.u32 %v3720, 4294901760
    %3722 = vmatpush1.msra.mxu0 %v3721
    %3723 = vmatprep.subr.mxu0 0.0
    %v3724 = vand.u32 %v3554, 4294901760
    %v3725 = vsub.f32 %v3554, %v3724
    %v3726 = vand.u32 %v3725, 4294901760
    %v3727 = vsub.f32 %v3725, %v3726
    %v3728 = vand.u32 %v3727, 4294901760
    %3729 = vmatpush1.msra.mxu0 %v3728
    %3730 = vmatprep.subr.mxu0 0.0
    %v3731 = vand.u32 %v3555, 4294901760
    %v3732 = vsub.f32 %v3555, %v3731
    %v3733 = vand.u32 %v3732, 4294901760
    %v3734 = vsub.f32 %v3732, %v3733
    %v3735 = vand.u32 %v3734, 4294901760
    %3736 = vmatpush1.msra.mxu0 %v3735
    %3737 = vmatprep.subr.mxu0 0.0
    %v3738 = vand.u32 %v3556, 4294901760
    %v3739 = vsub.f32 %v3556, %v3738
    %v3740 = vand.u32 %v3739, 4294901760
    %v3741 = vsub.f32 %v3739, %v3740
    %v3742 = vand.u32 %v3741, 4294901760
    %3743 = vmatpush1.msra.mxu0 %v3742
    %3744 = vmatprep.subr.mxu0 0.0
    %v3745 = vand.u32 %v3557, 4294901760
    %v3746 = vsub.f32 %v3557, %v3745
    %v3747 = vand.u32 %v3746, 4294901760
    %v3748 = vsub.f32 %v3746, %v3747
    %v3749 = vand.u32 %v3748, 4294901760
    %3750 = vmatpush1.msra.mxu0 %v3749
    %3751 = vmatprep.subr.mxu0 0.0
    %v3752 = vand.u32 %v3558, 4294901760
    %v3753 = vsub.f32 %v3558, %v3752
    %v3754 = vand.u32 %v3753, 4294901760
    %v3755 = vsub.f32 %v3753, %v3754
    %v3756 = vand.u32 %v3755, 4294901760
    %3757 = vmatpush1.msra.mxu0 %v3756
    %3758 = vmatprep.subr.mxu0 0.0
    %v3759 = vand.u32 %v3559, 4294901760
    %v3760 = vsub.f32 %v3559, %v3759
    %v3761 = vand.u32 %v3760, 4294901760
    %v3762 = vsub.f32 %v3760, %v3761
    %v3763 = vand.u32 %v3762, 4294901760
    %3764 = vmatpush1.msra.mxu0 %v3763
    %3765 = vmatprep.subr.mxu0 0.0
    %v3766 = vand.u32 %v3560, 4294901760
    %v3767 = vsub.f32 %v3560, %v3766
    %v3768 = vand.u32 %v3767, 4294901760
    %v3769 = vsub.f32 %v3767, %v3768
    %v3770 = vand.u32 %v3769, 4294901760
    %3771 = vmatpush1.msra.mxu0 %v3770
    %3772 = vmatprep.subr.mxu0 0.0
    %v3773 = vand.u32 %v3561, 4294901760
    %v3774 = vsub.f32 %v3561, %v3773
    %v3775 = vand.u32 %v3774, 4294901760
    %v3776 = vsub.f32 %v3774, %v3775
    %v3777 = vand.u32 %v3776, 4294901760
    %3778 = vmatpush1.msra.mxu0 %v3777
    %3779 = vmatprep.subr.mxu0 0.0
    %v3780 = vand.u32 %v3562, 4294901760
    %v3781 = vsub.f32 %v3562, %v3780
    %v3782 = vand.u32 %v3781, 4294901760
    %v3783 = vsub.f32 %v3781, %v3782
    %v3784 = vand.u32 %v3783, 4294901760
    %3785 = vmatpush1.msra.mxu0 %v3784
    %3786 = vmatprep.subr.mxu0 0.0
    %v3787 = vand.u32 %v3563, 4294901760
    %v3788 = vsub.f32 %v3563, %v3787
    %v3789 = vand.u32 %v3788, 4294901760
    %v3790 = vsub.f32 %v3788, %v3789
    %v3791 = vand.u32 %v3790, 4294901760
    %3792 = vmatpush1.msra.mxu0 %v3791
    %3793 = vmatprep.subr.mxu0 0.0
    %v3794 = vand.u32 %v3564, 4294901760
    %v3795 = vsub.f32 %v3564, %v3794
    %v3796 = vand.u32 %v3795, 4294901760
    %v3797 = vsub.f32 %v3795, %v3796
    %v3798 = vand.u32 %v3797, 4294901760
    %3799 = vmatpush1.msra.mxu0 %v3798
    %3800 = vmatprep.subr.mxu0 0.0
    %v3801 = vand.u32 %v3565, 4294901760
    %v3802 = vsub.f32 %v3565, %v3801
    %v3803 = vand.u32 %v3802, 4294901760
    %v3804 = vsub.f32 %v3802, %v3803
    %v3805 = vand.u32 %v3804, 4294901760
    %3806 = vmatpush1.msra.mxu0 %v3805
    %3807 = vmatprep.subr.mxu0 0.0
    %v3808 = vand.u32 %v3566, 4294901760
    %v3809 = vsub.f32 %v3566, %v3808
    %v3810 = vand.u32 %v3809, 4294901760
    %v3811 = vsub.f32 %v3809, %v3810
    %v3812 = vand.u32 %v3811, 4294901760
    %3813 = vmatpush1.msra.mxu0 %v3812
    %3814 = vmatprep.subr.mxu0 0.0
    %v3815 = vand.u32 %v3567, 4294901760
    %v3816 = vsub.f32 %v3567, %v3815
    %v3817 = vand.u32 %v3816, 4294901760
    %v3818 = vsub.f32 %v3816, %v3817
    %v3819 = vand.u32 %v3818, 4294901760
    %3820 = vmatpush1.msra.mxu0 %v3819
    %3821 = vmatprep.subr.mxu0 0.0
    %v3822 = vand.u32 %v3568, 4294901760
    %v3823 = vsub.f32 %v3568, %v3822
    %v3824 = vand.u32 %v3823, 4294901760
    %v3825 = vsub.f32 %v3823, %v3824
    %v3826 = vand.u32 %v3825, 4294901760
    %3827 = vmatpush1.msra.mxu0 %v3826
    %3828 = vmatprep.subr.mxu0 0.0
    %v3829 = vand.u32 %v3569, 4294901760
    %v3830 = vsub.f32 %v3569, %v3829
    %v3831 = vand.u32 %v3830, 4294901760
    %v3832 = vsub.f32 %v3830, %v3831
    %v3833 = vand.u32 %v3832, 4294901760
    %3834 = vmatpush1.msra.mxu0 %v3833
    %3835 = vmatprep.subr.mxu0 0.0
    %v3836 = vand.u32 %v3570, 4294901760
    %v3837 = vsub.f32 %v3570, %v3836
    %v3838 = vand.u32 %v3837, 4294901760
    %v3839 = vsub.f32 %v3837, %v3838
    %v3840 = vand.u32 %v3839, 4294901760
    %3841 = vmatpush1.msra.mxu0 %v3840
    %3842 = vmatprep.subr.mxu0 0.0
    %v3843 = vand.u32 %v3571, 4294901760
    %v3844 = vsub.f32 %v3571, %v3843
    %v3845 = vand.u32 %v3844, 4294901760
    %v3846 = vsub.f32 %v3844, %v3845
    %v3847 = vand.u32 %v3846, 4294901760
    %3848 = vmatpush1.msra.mxu0 %v3847
    %3849 = vmatprep.subr.mxu0 0.0
    %v3850 = vand.u32 %v3572, 4294901760
    %v3851 = vsub.f32 %v3572, %v3850
    %v3852 = vand.u32 %v3851, 4294901760
    %v3853 = vsub.f32 %v3851, %v3852
    %v3854 = vand.u32 %v3853, 4294901760
    %3855 = vmatpush1.msra.mxu0 %v3854
    %3856 = vmatprep.subr.mxu0 0.0
    %v3857 = vand.u32 %v3573, 4294901760
    %v3858 = vsub.f32 %v3573, %v3857
    %v3859 = vand.u32 %v3858, 4294901760
    %v3860 = vsub.f32 %v3858, %v3859
    %v3861 = vand.u32 %v3860, 4294901760
    %3862 = vmatpush1.msra.mxu0 %v3861
    %3863 = vmatprep.subr.mxu0 0.0
    %v3864 = vand.u32 %v3574, 4294901760
    %v3865 = vsub.f32 %v3574, %v3864
    %v3866 = vand.u32 %v3865, 4294901760
    %v3867 = vsub.f32 %v3865, %v3866
    %v3868 = vand.u32 %v3867, 4294901760
    %3869 = vmatpush1.msra.mxu0 %v3868
    %3870 = vmatprep.subr.mxu0 0.0
    %v3871 = vand.u32 %v3575, 4294901760
    %v3872 = vsub.f32 %v3575, %v3871
    %v3873 = vand.u32 %v3872, 4294901760
    %v3874 = vsub.f32 %v3872, %v3873
    %v3875 = vand.u32 %v3874, 4294901760
    %3876 = vmatpush1.msra.mxu0 %v3875
    %3877 = vmatprep.subr.mxu0 0.0
    %v3878 = vand.u32 %v3576, 4294901760
    %v3879 = vsub.f32 %v3576, %v3878
    %v3880 = vand.u32 %v3879, 4294901760
    %v3881 = vsub.f32 %v3879, %v3880
    %v3882 = vand.u32 %v3881, 4294901760
    %3883 = vmatpush1.msra.mxu0 %v3882
    %3884 = vmatprep.subr.mxu0 0.0
    %v3885 = vand.u32 %v3577, 4294901760
    %v3886 = vsub.f32 %v3577, %v3885
    %v3887 = vand.u32 %v3886, 4294901760
    %v3888 = vsub.f32 %v3886, %v3887
    %v3889 = vand.u32 %v3888, 4294901760
    %3890 = vmatpush1.msra.mxu0 %v3889
    %3891 = vmatprep.subr.mxu0 0.0
    %v3892 = vand.u32 %v3578, 4294901760
    %v3893 = vsub.f32 %v3578, %v3892
    %v3894 = vand.u32 %v3893, 4294901760
    %v3895 = vsub.f32 %v3893, %v3894
    %v3896 = vand.u32 %v3895, 4294901760
    %3897 = vmatpush1.msra.mxu0 %v3896
    %3898 = vmatprep.subr.mxu0 0.0
    %v3899 = vand.u32 %v3579, 4294901760
    %v3900 = vsub.f32 %v3579, %v3899
    %v3901 = vand.u32 %v3900, 4294901760
    %v3902 = vsub.f32 %v3900, %v3901
    %v3903 = vand.u32 %v3902, 4294901760
    %3904 = vmatpush1.msra.mxu0 %v3903
    %3905 = vmatprep.subr.mxu0 0.0
    %v3906 = vand.u32 %v3580, 4294901760
    %v3907 = vsub.f32 %v3580, %v3906
    %v3908 = vand.u32 %v3907, 4294901760
    %v3909 = vsub.f32 %v3907, %v3908
    %v3910 = vand.u32 %v3909, 4294901760
    %3911 = vmatpush1.msra.mxu0 %v3910
    %3912 = vmatprep.subr.mxu0 0.0
    %v3913 = vand.u32 %v3581, 4294901760
    %v3914 = vsub.f32 %v3581, %v3913
    %v3915 = vand.u32 %v3914, 4294901760
    %v3916 = vsub.f32 %v3914, %v3915
    %v3917 = vand.u32 %v3916, 4294901760
    %3918 = vmatpush1.msra.mxu0 %v3917
    %3919 = vmatprep.subr.mxu0 0.0
    %v3920 = vand.u32 %v3582, 4294901760
    %v3921 = vsub.f32 %v3582, %v3920
    %v3922 = vand.u32 %v3921, 4294901760
    %v3923 = vsub.f32 %v3921, %v3922
    %v3924 = vand.u32 %v3923, 4294901760
    %3925 = vmatpush1.msra.mxu0 %v3924
    %v3926 = vand.u32 %v3550, 4294901760
    %3927 = vmatprep.mubr.f32.mxu0 %v3926
    %v3928 = vand.u32 %v3549, 4294901760
    %3929 = vmatmul.mubr.f32.gmra.mrb[0].mxu0 %v3928
    %v3930 = vpop.f32.mrb[0].mxu0
    %v3931 = vadd.f32 %v3699, %v3930
    %v3932 = vpop.f32.mrb[0].mxu0
    %3933 = vdwg.mxu0
    %3934 = vmatprep.subr.mxu0 0.0
    %v3935 = vand.u32 %v3551, 4294901760
    %v3936 = vsub.f32 %v3551, %v3935
    %3937 = vmatpush1.msra.mxu0 %v3936
    %3938 = vmatprep.subr.mxu0 0.0
    %v3939 = vand.u32 %v3552, 4294901760
    %v3940 = vsub.f32 %v3552, %v3939
    %3941 = vmatpush1.msra.mxu0 %v3940
    %3942 = vmatprep.subr.mxu0 0.0
    %v3943 = vand.u32 %v3553, 4294901760
    %v3944 = vsub.f32 %v3553, %v3943
    %3945 = vmatpush1.msra.mxu0 %v3944
    %3946 = vmatprep.subr.mxu0 0.0
    %v3947 = vand.u32 %v3554, 4294901760
    %v3948 = vsub.f32 %v3554, %v3947
    %3949 = vmatpush1.msra.mxu0 %v3948
    %3950 = vmatprep.subr.mxu0 0.0
    %v3951 = vand.u32 %v3555, 4294901760
    %v3952 = vsub.f32 %v3555, %v3951
    %3953 = vmatpush1.msra.mxu0 %v3952
    %3954 = vmatprep.subr.mxu0 0.0
    %v3955 = vand.u32 %v3556, 4294901760
    %v3956 = vsub.f32 %v3556, %v3955
    %3957 = vmatpush1.msra.mxu0 %v3956
    %3958 = vmatprep.subr.mxu0 0.0
    %v3959 = vand.u32 %v3557, 4294901760
    %v3960 = vsub.f32 %v3557, %v3959
    %3961 = vmatpush1.msra.mxu0 %v3960
    %3962 = vmatprep.subr.mxu0 0.0
    %v3963 = vand.u32 %v3558, 4294901760
    %v3964 = vsub.f32 %v3558, %v3963
    %3965 = vmatpush1.msra.mxu0 %v3964
    %3966 = vmatprep.subr.mxu0 0.0
    %v3967 = vand.u32 %v3559, 4294901760
    %v3968 = vsub.f32 %v3559, %v3967
    %3969 = vmatpush1.msra.mxu0 %v3968
    %3970 = vmatprep.subr.mxu0 0.0
    %v3971 = vand.u32 %v3560, 4294901760
    %v3972 = vsub.f32 %v3560, %v3971
    %3973 = vmatpush1.msra.mxu0 %v3972
    %3974 = vmatprep.subr.mxu0 0.0
    %v3975 = vand.u32 %v3561, 4294901760
    %v3976 = vsub.f32 %v3561, %v3975
    %3977 = vmatpush1.msra.mxu0 %v3976
    %3978 = vmatprep.subr.mxu0 0.0
    %v3979 = vand.u32 %v3562, 4294901760
    %v3980 = vsub.f32 %v3562, %v3979
    %3981 = vmatpush1.msra.mxu0 %v3980
    %3982 = vmatprep.subr.mxu0 0.0
    %v3983 = vand.u32 %v3563, 4294901760
    %v3984 = vsub.f32 %v3563, %v3983
    %3985 = vmatpush1.msra.mxu0 %v3984
    %3986 = vmatprep.subr.mxu0 0.0
    %v3987 = vand.u32 %v3564, 4294901760
    %v3988 = vsub.f32 %v3564, %v3987
    %3989 = vmatpush1.msra.mxu0 %v3988
    %3990 = vmatprep.subr.mxu0 0.0
    %v3991 = vand.u32 %v3565, 4294901760
    %v3992 = vsub.f32 %v3565, %v3991
    %3993 = vmatpush1.msra.mxu0 %v3992
    %3994 = vmatprep.subr.mxu0 0.0
    %v3995 = vand.u32 %v3566, 4294901760
    %v3996 = vsub.f32 %v3566, %v3995
    %3997 = vmatpush1.msra.mxu0 %v3996
    %3998 = vmatprep.subr.mxu0 0.0
    %v3999 = vand.u32 %v3567, 4294901760
    %v4000 = vsub.f32 %v3567, %v3999
    %4001 = vmatpush1.msra.mxu0 %v4000
    %4002 = vmatprep.subr.mxu0 0.0
    %v4003 = vand.u32 %v3568, 4294901760
    %v4004 = vsub.f32 %v3568, %v4003
    %4005 = vmatpush1.msra.mxu0 %v4004
    %4006 = vmatprep.subr.mxu0 0.0
    %v4007 = vand.u32 %v3569, 4294901760
    %v4008 = vsub.f32 %v3569, %v4007
    %4009 = vmatpush1.msra.mxu0 %v4008
    %4010 = vmatprep.subr.mxu0 0.0
    %v4011 = vand.u32 %v3570, 4294901760
    %v4012 = vsub.f32 %v3570, %v4011
    %4013 = vmatpush1.msra.mxu0 %v4012
    %4014 = vmatprep.subr.mxu0 0.0
    %v4015 = vand.u32 %v3571, 4294901760
    %v4016 = vsub.f32 %v3571, %v4015
    %4017 = vmatpush1.msra.mxu0 %v4016
    %4018 = vmatprep.subr.mxu0 0.0
    %v4019 = vand.u32 %v3572, 4294901760
    %v4020 = vsub.f32 %v3572, %v4019
    %4021 = vmatpush1.msra.mxu0 %v4020
    %4022 = vmatprep.subr.mxu0 0.0
    %v4023 = vand.u32 %v3573, 4294901760
    %v4024 = vsub.f32 %v3573, %v4023
    %4025 = vmatpush1.msra.mxu0 %v4024
    %4026 = vmatprep.subr.mxu0 0.0
    %v4027 = vand.u32 %v3574, 4294901760
    %v4028 = vsub.f32 %v3574, %v4027
    %4029 = vmatpush1.msra.mxu0 %v4028
    %4030 = vmatprep.subr.mxu0 0.0
    %v4031 = vand.u32 %v3575, 4294901760
    %v4032 = vsub.f32 %v3575, %v4031
    %4033 = vmatpush1.msra.mxu0 %v4032
    %4034 = vmatprep.subr.mxu0 0.0
    %v4035 = vand.u32 %v3576, 4294901760
    %v4036 = vsub.f32 %v3576, %v4035
    %4037 = vmatpush1.msra.mxu0 %v4036
    %4038 = vmatprep.subr.mxu0 0.0
    %v4039 = vand.u32 %v3577, 4294901760
    %v4040 = vsub.f32 %v3577, %v4039
    %4041 = vmatpush1.msra.mxu0 %v4040
    %4042 = vmatprep.subr.mxu0 0.0
    %v4043 = vand.u32 %v3578, 4294901760
    %v4044 = vsub.f32 %v3578, %v4043
    %4045 = vmatpush1.msra.mxu0 %v4044
    %4046 = vmatprep.subr.mxu0 0.0
    %v4047 = vand.u32 %v3579, 4294901760
    %v4048 = vsub.f32 %v3579, %v4047
    %4049 = vmatpush1.msra.mxu0 %v4048
    %4050 = vmatprep.subr.mxu0 0.0
    %v4051 = vand.u32 %v3580, 4294901760
    %v4052 = vsub.f32 %v3580, %v4051
    %4053 = vmatpush1.msra.mxu0 %v4052
    %4054 = vmatprep.subr.mxu0 0.0
    %v4055 = vand.u32 %v3581, 4294901760
    %v4056 = vsub.f32 %v3581, %v4055
    %4057 = vmatpush1.msra.mxu0 %v4056
    %4058 = vmatprep.subr.mxu0 0.0
    %v4059 = vand.u32 %v3582, 4294901760
    %v4060 = vsub.f32 %v3582, %v4059
    %4061 = vmatpush1.msra.mxu0 %v4060
    %v4062 = vand.u32 %v3550, 4294901760
    %v4063 = vsub.f32 %v3550, %v4062
    %4064 = vmatprep.mubr.f32.mxu0 %v4063
    %v4065 = vand.u32 %v3549, 4294901760
    %v4066 = vsub.f32 %v3549, %v4065
    %4067 = vmatmul.mubr.f32.gmra.mrb[0].mxu0 %v4066
    %v4068 = vpop.f32.mrb[0].mxu0
    %v4069 = vadd.f32 %v3931, %v4068
    %v4070 = vpop.f32.mrb[0].mxu0
    %4071 = vdwg.mxu0
    %4072 = vmatprep.subr.mxu0 0.0
    %v4073 = vand.u32 %v3551, 4294901760
    %4074 = vmatpush1.msra.mxu0 %v4073
    %4075 = vmatprep.subr.mxu0 0.0
    %v4076 = vand.u32 %v3552, 4294901760
    %4077 = vmatpush1.msra.mxu0 %v4076
    %4078 = vmatprep.subr.mxu0 0.0
    %v4079 = vand.u32 %v3553, 4294901760
    %4080 = vmatpush1.msra.mxu0 %v4079
    %4081 = vmatprep.subr.mxu0 0.0
    %v4082 = vand.u32 %v3554, 4294901760
    %4083 = vmatpush1.msra.mxu0 %v4082
    %4084 = vmatprep.subr.mxu0 0.0
    %v4085 = vand.u32 %v3555, 4294901760
    %4086 = vmatpush1.msra.mxu0 %v4085
    %4087 = vmatprep.subr.mxu0 0.0
    %v4088 = vand.u32 %v3556, 4294901760
    %4089 = vmatpush1.msra.mxu0 %v4088
    %4090 = vmatprep.subr.mxu0 0.0
    %v4091 = vand.u32 %v3557, 4294901760
    %4092 = vmatpush1.msra.mxu0 %v4091
    %4093 = vmatprep.subr.mxu0 0.0
    %v4094 = vand.u32 %v3558, 4294901760
    %4095 = vmatpush1.msra.mxu0 %v4094
    %4096 = vmatprep.subr.mxu0 0.0
    %v4097 = vand.u32 %v3559, 4294901760
    %4098 = vmatpush1.msra.mxu0 %v4097
    %4099 = vmatprep.subr.mxu0 0.0
    %v4100 = vand.u32 %v3560, 4294901760
    %4101 = vmatpush1.msra.mxu0 %v4100
    %4102 = vmatprep.subr.mxu0 0.0
    %v4103 = vand.u32 %v3561, 4294901760
    %4104 = vmatpush1.msra.mxu0 %v4103
    %4105 = vmatprep.subr.mxu0 0.0
    %v4106 = vand.u32 %v3562, 4294901760
    %4107 = vmatpush1.msra.mxu0 %v4106
    %4108 = vmatprep.subr.mxu0 0.0
    %v4109 = vand.u32 %v3563, 4294901760
    %4110 = vmatpush1.msra.mxu0 %v4109
    %4111 = vmatprep.subr.mxu0 0.0
    %v4112 = vand.u32 %v3564, 4294901760
    %4113 = vmatpush1.msra.mxu0 %v4112
    %4114 = vmatprep.subr.mxu0 0.0
    %v4115 = vand.u32 %v3565, 4294901760
    %4116 = vmatpush1.msra.mxu0 %v4115
    %4117 = vmatprep.subr.mxu0 0.0
    %v4118 = vand.u32 %v3566, 4294901760
    %4119 = vmatpush1.msra.mxu0 %v4118
    %4120 = vmatprep.subr.mxu0 0.0
    %v4121 = vand.u32 %v3567, 4294901760
    %4122 = vmatpush1.msra.mxu0 %v4121
    %4123 = vmatprep.subr.mxu0 0.0
    %v4124 = vand.u32 %v3568, 4294901760
    %4125 = vmatpush1.msra.mxu0 %v4124
    %4126 = vmatprep.subr.mxu0 0.0
    %v4127 = vand.u32 %v3569, 4294901760
    %4128 = vmatpush1.msra.mxu0 %v4127
    %4129 = vmatprep.subr.mxu0 0.0
    %v4130 = vand.u32 %v3570, 4294901760
    %4131 = vmatpush1.msra.mxu0 %v4130
    %4132 = vmatprep.subr.mxu0 0.0
    %v4133 = vand.u32 %v3571, 4294901760
    %4134 = vmatpush1.msra.mxu0 %v4133
    %4135 = vmatprep.subr.mxu0 0.0
    %v4136 = vand.u32 %v3572, 4294901760
    %4137 = vmatpush1.msra.mxu0 %v4136
    %4138 = vmatprep.subr.mxu0 0.0
    %v4139 = vand.u32 %v3573, 4294901760
    %4140 = vmatpush1.msra.mxu0 %v4139
    %4141 = vmatprep.subr.mxu0 0.0
    %v4142 = vand.u32 %v3574, 4294901760
    %4143 = vmatpush1.msra.mxu0 %v4142
    %4144 = vmatprep.subr.mxu0 0.0
    %v4145 = vand.u32 %v3575, 4294901760
    %4146 = vmatpush1.msra.mxu0 %v4145
    %4147 = vmatprep.subr.mxu0 0.0
    %v4148 = vand.u32 %v3576, 4294901760
    %4149 = vmatpush1.msra.mxu0 %v4148
    %4150 = vmatprep.subr.mxu0 0.0
    %v4151 = vand.u32 %v3577, 4294901760
    %4152 = vmatpush1.msra.mxu0 %v4151
    %4153 = vmatprep.subr.mxu0 0.0
    %v4154 = vand.u32 %v3578, 4294901760
    %4155 = vmatpush1.msra.mxu0 %v4154
    %4156 = vmatprep.subr.mxu0 0.0
    %v4157 = vand.u32 %v3579, 4294901760
    %4158 = vmatpush1.msra.mxu0 %v4157
    %4159 = vmatprep.subr.mxu0 0.0
    %v4160 = vand.u32 %v3580, 4294901760
    %4161 = vmatpush1.msra.mxu0 %v4160
    %4162 = vmatprep.subr.mxu0 0.0
    %v4163 = vand.u32 %v3581, 4294901760
    %4164 = vmatpush1.msra.mxu0 %v4163
    %4165 = vmatprep.subr.mxu0 0.0
    %v4166 = vand.u32 %v3582, 4294901760
    %4167 = vmatpush1.msra.mxu0 %v4166
    %v4168 = vand.u32 %v3550, 4294901760
    %v4169 = vsub.f32 %v3550, %v4168
    %v4170 = vand.u32 %v4169, 4294901760
    %4171 = vmatprep.mubr.f32.mxu0 %v4170
    %v4172 = vand.u32 %v3549, 4294901760
    %v4173 = vsub.f32 %v3549, %v4172
    %v4174 = vand.u32 %v4173, 4294901760
    %4175 = vmatmul.mubr.f32.gmra.mrb[0].mxu0 %v4174
    %v4176 = vpop.f32.mrb[0].mxu0
    %v4177 = vadd.f32 %v4069, %v4176
    %v4178 = vpop.f32.mrb[0].mxu0
    %4179 = vdwg.mxu0
    %4180 = vmatprep.subr.mxu0 0.0
    %v4181 = vand.u32 %v3551, 4294901760
    %v4182 = vsub.f32 %v3551, %v4181
    %v4183 = vand.u32 %v4182, 4294901760
    %4184 = vmatpush1.msra.mxu0 %v4183
    %4185 = vmatprep.subr.mxu0 0.0
    %v4186 = vand.u32 %v3552, 4294901760
    %v4187 = vsub.f32 %v3552, %v4186
    %v4188 = vand.u32 %v4187, 4294901760
    %4189 = vmatpush1.msra.mxu0 %v4188
    %4190 = vmatprep.subr.mxu0 0.0
    %v4191 = vand.u32 %v3553, 4294901760
    %v4192 = vsub.f32 %v3553, %v4191
    %v4193 = vand.u32 %v4192, 4294901760
    %4194 = vmatpush1.msra.mxu0 %v4193
    %4195 = vmatprep.subr.mxu0 0.0
    %v4196 = vand.u32 %v3554, 4294901760
    %v4197 = vsub.f32 %v3554, %v4196
    %v4198 = vand.u32 %v4197, 4294901760
    %4199 = vmatpush1.msra.mxu0 %v4198
    %4200 = vmatprep.subr.mxu0 0.0
    %v4201 = vand.u32 %v3555, 4294901760
    %v4202 = vsub.f32 %v3555, %v4201
    %v4203 = vand.u32 %v4202, 4294901760
    %4204 = vmatpush1.msra.mxu0 %v4203
    %4205 = vmatprep.subr.mxu0 0.0
    %v4206 = vand.u32 %v3556, 4294901760
    %v4207 = vsub.f32 %v3556, %v4206
    %v4208 = vand.u32 %v4207, 4294901760
    %4209 = vmatpush1.msra.mxu0 %v4208
    %4210 = vmatprep.subr.mxu0 0.0
    %v4211 = vand.u32 %v3557, 4294901760
    %v4212 = vsub.f32 %v3557, %v4211
    %v4213 = vand.u32 %v4212, 4294901760
    %4214 = vmatpush1.msra.mxu0 %v4213
    %4215 = vmatprep.subr.mxu0 0.0
    %v4216 = vand.u32 %v3558, 4294901760
    %v4217 = vsub.f32 %v3558, %v4216
    %v4218 = vand.u32 %v4217, 4294901760
    %4219 = vmatpush1.msra.mxu0 %v4218
    %4220 = vmatprep.subr.mxu0 0.0
    %v4221 = vand.u32 %v3559, 4294901760
    %v4222 = vsub.f32 %v3559, %v4221
    %v4223 = vand.u32 %v4222, 4294901760
    %4224 = vmatpush1.msra.mxu0 %v4223
    %4225 = vmatprep.subr.mxu0 0.0
    %v4226 = vand.u32 %v3560, 4294901760
    %v4227 = vsub.f32 %v3560, %v4226
    %v4228 = vand.u32 %v4227, 4294901760
    %4229 = vmatpush1.msra.mxu0 %v4228
    %4230 = vmatprep.subr.mxu0 0.0
    %v4231 = vand.u32 %v3561, 4294901760
    %v4232 = vsub.f32 %v3561, %v4231
    %v4233 = vand.u32 %v4232, 4294901760
    %4234 = vmatpush1.msra.mxu0 %v4233
    %4235 = vmatprep.subr.mxu0 0.0
    %v4236 = vand.u32 %v3562, 4294901760
    %v4237 = vsub.f32 %v3562, %v4236
    %v4238 = vand.u32 %v4237, 4294901760
    %4239 = vmatpush1.msra.mxu0 %v4238
    %4240 = vmatprep.subr.mxu0 0.0
    %v4241 = vand.u32 %v3563, 4294901760
    %v4242 = vsub.f32 %v3563, %v4241
    %v4243 = vand.u32 %v4242, 4294901760
    %4244 = vmatpush1.msra.mxu0 %v4243
    %4245 = vmatprep.subr.mxu0 0.0
    %v4246 = vand.u32 %v3564, 4294901760
    %v4247 = vsub.f32 %v3564, %v4246
    %v4248 = vand.u32 %v4247, 4294901760
    %4249 = vmatpush1.msra.mxu0 %v4248
    %4250 = vmatprep.subr.mxu0 0.0
    %v4251 = vand.u32 %v3565, 4294901760
    %v4252 = vsub.f32 %v3565, %v4251
    %v4253 = vand.u32 %v4252, 4294901760
    %4254 = vmatpush1.msra.mxu0 %v4253
    %4255 = vmatprep.subr.mxu0 0.0
    %v4256 = vand.u32 %v3566, 4294901760
    %v4257 = vsub.f32 %v3566, %v4256
    %v4258 = vand.u32 %v4257, 4294901760
    %4259 = vmatpush1.msra.mxu0 %v4258
    %4260 = vmatprep.subr.mxu0 0.0
    %v4261 = vand.u32 %v3567, 4294901760
    %v4262 = vsub.f32 %v3567, %v4261
    %v4263 = vand.u32 %v4262, 4294901760
    %4264 = vmatpush1.msra.mxu0 %v4263
    %4265 = vmatprep.subr.mxu0 0.0
    %v4266 = vand.u32 %v3568, 4294901760
    %v4267 = vsub.f32 %v3568, %v4266
    %v4268 = vand.u32 %v4267, 4294901760
    %4269 = vmatpush1.msra.mxu0 %v4268
    %4270 = vmatprep.subr.mxu0 0.0
    %v4271 = vand.u32 %v3569, 4294901760
    %v4272 = vsub.f32 %v3569, %v4271
    %v4273 = vand.u32 %v4272, 4294901760
    %4274 = vmatpush1.msra.mxu0 %v4273
    %4275 = vmatprep.subr.mxu0 0.0
    %v4276 = vand.u32 %v3570, 4294901760
    %v4277 = vsub.f32 %v3570, %v4276
    %v4278 = vand.u32 %v4277, 4294901760
    %4279 = vmatpush1.msra.mxu0 %v4278
    %4280 = vmatprep.subr.mxu0 0.0
    %v4281 = vand.u32 %v3571, 4294901760
    %v4282 = vsub.f32 %v3571, %v4281
    %v4283 = vand.u32 %v4282, 4294901760
    %4284 = vmatpush1.msra.mxu0 %v4283
    %4285 = vmatprep.subr.mxu0 0.0
    %v4286 = vand.u32 %v3572, 4294901760
    %v4287 = vsub.f32 %v3572, %v4286
    %v4288 = vand.u32 %v4287, 4294901760
    %4289 = vmatpush1.msra.mxu0 %v4288
    %4290 = vmatprep.subr.mxu0 0.0
    %v4291 = vand.u32 %v3573, 4294901760
    %v4292 = vsub.f32 %v3573, %v4291
    %v4293 = vand.u32 %v4292, 4294901760
    %4294 = vmatpush1.msra.mxu0 %v4293
    %4295 = vmatprep.subr.mxu0 0.0
    %v4296 = vand.u32 %v3574, 4294901760
    %v4297 = vsub.f32 %v3574, %v4296
    %v4298 = vand.u32 %v4297, 4294901760
    %4299 = vmatpush1.msra.mxu0 %v4298
    %4300 = vmatprep.subr.mxu0 0.0
    %v4301 = vand.u32 %v3575, 4294901760
    %v4302 = vsub.f32 %v3575, %v4301
    %v4303 = vand.u32 %v4302, 4294901760
    %4304 = vmatpush1.msra.mxu0 %v4303
    %4305 = vmatprep.subr.mxu0 0.0
    %v4306 = vand.u32 %v3576, 4294901760
    %v4307 = vsub.f32 %v3576, %v4306
    %v4308 = vand.u32 %v4307, 4294901760
    %4309 = vmatpush1.msra.mxu0 %v4308
    %4310 = vmatprep.subr.mxu0 0.0
    %v4311 = vand.u32 %v3577, 4294901760
    %v4312 = vsub.f32 %v3577, %v4311
    %v4313 = vand.u32 %v4312, 4294901760
    %4314 = vmatpush1.msra.mxu0 %v4313
    %4315 = vmatprep.subr.mxu0 0.0
    %v4316 = vand.u32 %v3578, 4294901760
    %v4317 = vsub.f32 %v3578, %v4316
    %v4318 = vand.u32 %v4317, 4294901760
    %4319 = vmatpush1.msra.mxu0 %v4318
    %4320 = vmatprep.subr.mxu0 0.0
    %v4321 = vand.u32 %v3579, 4294901760
    %v4322 = vsub.f32 %v3579, %v4321
    %v4323 = vand.u32 %v4322, 4294901760
    %4324 = vmatpush1.msra.mxu0 %v4323
    %4325 = vmatprep.subr.mxu0 0.0
    %v4326 = vand.u32 %v3580, 4294901760
    %v4327 = vsub.f32 %v3580, %v4326
    %v4328 = vand.u32 %v4327, 4294901760
    %4329 = vmatpush1.msra.mxu0 %v4328
    %4330 = vmatprep.subr.mxu0 0.0
    %v4331 = vand.u32 %v3581, 4294901760
    %v4332 = vsub.f32 %v3581, %v4331
    %v4333 = vand.u32 %v4332, 4294901760
    %4334 = vmatpush1.msra.mxu0 %v4333
    %4335 = vmatprep.subr.mxu0 0.0
    %v4336 = vand.u32 %v3582, 4294901760
    %v4337 = vsub.f32 %v3582, %v4336
    %v4338 = vand.u32 %v4337, 4294901760
    %4339 = vmatpush1.msra.mxu0 %v4338
    %v4340 = vand.u32 %v3550, 4294901760
    %4341 = vmatprep.mubr.f32.mxu0 %v4340
    %v4342 = vand.u32 %v3549, 4294901760
    %4343 = vmatmul.mubr.f32.gmra.mrb[0].mxu0 %v4342
    %v4344 = vpop.f32.mrb[0].mxu0
    %v4345 = vadd.f32 %v4177, %v4344
    %v4346 = vpop.f32.mrb[0].mxu0
    %4347 = vdwg.mxu0
    %4348 = vmatprep.subr.mxu0 0.0
    %v4349 = vand.u32 %v3551, 4294901760
    %4350 = vmatpush1.msra.mxu0 %v4349
    %4351 = vmatprep.subr.mxu0 0.0
    %v4352 = vand.u32 %v3552, 4294901760
    %4353 = vmatpush1.msra.mxu0 %v4352
    %4354 = vmatprep.subr.mxu0 0.0
    %v4355 = vand.u32 %v3553, 4294901760
    %4356 = vmatpush1.msra.mxu0 %v4355
    %4357 = vmatprep.subr.mxu0 0.0
    %v4358 = vand.u32 %v3554, 4294901760
    %4359 = vmatpush1.msra.mxu0 %v4358
    %4360 = vmatprep.subr.mxu0 0.0
    %v4361 = vand.u32 %v3555, 4294901760
    %4362 = vmatpush1.msra.mxu0 %v4361
    %4363 = vmatprep.subr.mxu0 0.0
    %v4364 = vand.u32 %v3556, 4294901760
    %4365 = vmatpush1.msra.mxu0 %v4364
    %4366 = vmatprep.subr.mxu0 0.0
    %v4367 = vand.u32 %v3557, 4294901760
    %4368 = vmatpush1.msra.mxu0 %v4367
    %4369 = vmatprep.subr.mxu0 0.0
    %v4370 = vand.u32 %v3558, 4294901760
    %4371 = vmatpush1.msra.mxu0 %v4370
    %4372 = vmatprep.subr.mxu0 0.0
    %v4373 = vand.u32 %v3559, 4294901760
    %4374 = vmatpush1.msra.mxu0 %v4373
    %4375 = vmatprep.subr.mxu0 0.0
    %v4376 = vand.u32 %v3560, 4294901760
    %4377 = vmatpush1.msra.mxu0 %v4376
    %4378 = vmatprep.subr.mxu0 0.0
    %v4379 = vand.u32 %v3561, 4294901760
    %4380 = vmatpush1.msra.mxu0 %v4379
    %4381 = vmatprep.subr.mxu0 0.0
    %v4382 = vand.u32 %v3562, 4294901760
    %4383 = vmatpush1.msra.mxu0 %v4382
    %4384 = vmatprep.subr.mxu0 0.0
    %v4385 = vand.u32 %v3563, 4294901760
    %4386 = vmatpush1.msra.mxu0 %v4385
    %4387 = vmatprep.subr.mxu0 0.0
    %v4388 = vand.u32 %v3564, 4294901760
    %4389 = vmatpush1.msra.mxu0 %v4388
    %4390 = vmatprep.subr.mxu0 0.0
    %v4391 = vand.u32 %v3565, 4294901760
    %4392 = vmatpush1.msra.mxu0 %v4391
    %4393 = vmatprep.subr.mxu0 0.0
    %v4394 = vand.u32 %v3566, 4294901760
    %4395 = vmatpush1.msra.mxu0 %v4394
    %4396 = vmatprep.subr.mxu0 0.0
    %v4397 = vand.u32 %v3567, 4294901760
    %4398 = vmatpush1.msra.mxu0 %v4397
    %4399 = vmatprep.subr.mxu0 0.0
    %v4400 = vand.u32 %v3568, 4294901760
    %4401 = vmatpush1.msra.mxu0 %v4400
    %4402 = vmatprep.subr.mxu0 0.0
    %v4403 = vand.u32 %v3569, 4294901760
    %4404 = vmatpush1.msra.mxu0 %v4403
    %4405 = vmatprep.subr.mxu0 0.0
    %v4406 = vand.u32 %v3570, 4294901760
    %4407 = vmatpush1.msra.mxu0 %v4406
    %4408 = vmatprep.subr.mxu0 0.0
    %v4409 = vand.u32 %v3571, 4294901760
    %4410 = vmatpush1.msra.mxu0 %v4409
    %4411 = vmatprep.subr.mxu0 0.0
    %v4412 = vand.u32 %v3572, 4294901760
    %4413 = vmatpush1.msra.mxu0 %v4412
    %4414 = vmatprep.subr.mxu0 0.0
    %v4415 = vand.u32 %v3573, 4294901760
    %4416 = vmatpush1.msra.mxu0 %v4415
    %4417 = vmatprep.subr.mxu0 0.0
    %v4418 = vand.u32 %v3574, 4294901760
    %4419 = vmatpush1.msra.mxu0 %v4418
    %4420 = vmatprep.subr.mxu0 0.0
    %v4421 = vand.u32 %v3575, 4294901760
    %4422 = vmatpush1.msra.mxu0 %v4421
    %4423 = vmatprep.subr.mxu0 0.0
    %v4424 = vand.u32 %v3576, 4294901760
    %4425 = vmatpush1.msra.mxu0 %v4424
    %4426 = vmatprep.subr.mxu0 0.0
    %v4427 = vand.u32 %v3577, 4294901760
    %4428 = vmatpush1.msra.mxu0 %v4427
    %4429 = vmatprep.subr.mxu0 0.0
    %v4430 = vand.u32 %v3578, 4294901760
    %4431 = vmatpush1.msra.mxu0 %v4430
    %4432 = vmatprep.subr.mxu0 0.0
    %v4433 = vand.u32 %v3579, 4294901760
    %4434 = vmatpush1.msra.mxu0 %v4433
    %4435 = vmatprep.subr.mxu0 0.0
    %v4436 = vand.u32 %v3580, 4294901760
    %4437 = vmatpush1.msra.mxu0 %v4436
    %4438 = vmatprep.subr.mxu0 0.0
    %v4439 = vand.u32 %v3581, 4294901760
    %4440 = vmatpush1.msra.mxu0 %v4439
    %4441 = vmatprep.subr.mxu0 0.0
    %v4442 = vand.u32 %v3582, 4294901760
    %4443 = vmatpush1.msra.mxu0 %v4442
    %v4444 = vand.u32 %v3550, 4294901760
    %4445 = vmatprep.mubr.f32.mxu0 %v4444
    %v4446 = vand.u32 %v3549, 4294901760
    %4447 = vmatmul.mubr.f32.gmra.mrb[0].mxu0 %v4446
    %v4448 = vpop.f32.mrb[0].mxu0
    %v4449 = vadd.f32 %v4345, %v4448
    %v4450 = vpop.f32.mrb[0].mxu0
    %4451 = vdwg.mxu0
    %v4452 = vmax.f32 %v4449, 0.0
    %v4453 = vld [vmem:[%s7] sm:$0xff]
    %v4454 = vld [vmem:[%s7 + $0x8] sm:$0xff]
    %v4455 = vld [vmem:[%s7 + $0x10] sm:$0xff]
    %v4456 = vld [vmem:[%s7 + $0x18] sm:$0xff]
    %v4457 = vld [vmem:[%s7 + $0x20] sm:$0xff]
    %v4458 = vld [vmem:[%s7 + $0x28] sm:$0xff]
    %v4459 = vld [vmem:[%s7 + $0x30] sm:$0xff]
    %v4460 = vld [vmem:[%s7 + $0x38] sm:$0xff]
    %v4461 = vld [vmem:[%s8] sm:$0x1]
    %v4463 = vlaneseq
    %v4464 = vshrl.u32 %v4463, 7
    %v4465 = vsub.s32 0, %v4464
    %v4466 = vrot.slane %v4461, %v4465
    %v4469 = vsel %vm42, %v4452, 0
    %4471 = vmatprep.subr.mxu0 0.0
    %v4472 = vand.u32 %v4453, 4294901760
    %4473 = vmatpush1.msra.mxu0 %v4472
    %4474 = vmatprep.subr.mxu0 0.0
    %v4475 = vand.u32 %v4454, 4294901760
    %4476 = vmatpush1.msra.mxu0 %v4475
    %4477 = vmatprep.subr.mxu0 0.0
    %v4478 = vand.u32 %v4455, 4294901760
    %4479 = vmatpush1.msra.mxu0 %v4478
    %4480 = vmatprep.subr.mxu0 0.0
    %v4481 = vand.u32 %v4456, 4294901760
    %4482 = vmatpush1.msra.mxu0 %v4481
    %4483 = vmatprep.subr.mxu0 0.0
    %v4484 = vand.u32 %v4457, 4294901760
    %4485 = vmatpush1.msra.mxu0 %v4484
    %4486 = vmatprep.subr.mxu0 0.0
    %v4487 = vand.u32 %v4458, 4294901760
    %4488 = vmatpush1.msra.mxu0 %v4487
    %4489 = vmatprep.subr.mxu0 0.0
    %v4490 = vand.u32 %v4459, 4294901760
    %4491 = vmatpush1.msra.mxu0 %v4490
    %4492 = vmatprep.subr.mxu0 0.0
    %v4493 = vand.u32 %v4460, 4294901760
    %4494 = vmatpush1.msra.mxu0 %v4493
    %4495 = vmatprep.subr.mxu0 0.0
    %4496 = vmatpush1.msra.mxu0 0.0
    %4497 = vmatprep.subr.mxu0 0.0
    %4498 = vmatpush1.msra.mxu0 0.0
    %4499 = vmatprep.subr.mxu0 0.0
    %4500 = vmatpush1.msra.mxu0 0.0
    %4501 = vmatprep.subr.mxu0 0.0
    %4502 = vmatpush1.msra.mxu0 0.0
    %4503 = vmatprep.subr.mxu0 0.0
    %4504 = vmatpush1.msra.mxu0 0.0
    %4505 = vmatprep.subr.mxu0 0.0
    %4506 = vmatpush1.msra.mxu0 0.0
    %4507 = vmatprep.subr.mxu0 0.0
    %4508 = vmatpush1.msra.mxu0 0.0
    %4509 = vmatprep.subr.mxu0 0.0
    %4510 = vmatpush1.msra.mxu0 0.0
    %4511 = vmatprep.subr.mxu0 0.0
    %4512 = vmatpush1.msra.mxu0 0.0
    %4513 = vmatprep.subr.mxu0 0.0
    %4514 = vmatpush1.msra.mxu0 0.0
    %4515 = vmatprep.subr.mxu0 0.0
    %4516 = vmatpush1.msra.mxu0 0.0
    %4517 = vmatprep.subr.mxu0 0.0
    %4518 = vmatpush1.msra.mxu0 0.0
    %4519 = vmatprep.subr.mxu0 0.0
    %4520 = vmatpush1.msra.mxu0 0.0
    %4521 = vmatprep.subr.mxu0 0.0
    %4522 = vmatpush1.msra.mxu0 0.0
    %4523 = vmatprep.subr.mxu0 0.0
    %4524 = vmatpush1.msra.mxu0 0.0
    %4525 = vmatprep.subr.mxu0 0.0
    %4526 = vmatpush1.msra.mxu0 0.0
    %4527 = vmatprep.subr.mxu0 0.0
    %4528 = vmatpush1.msra.mxu0 0.0
    %4529 = vmatprep.subr.mxu0 0.0
    %4530 = vmatpush1.msra.mxu0 0.0
    %4531 = vmatprep.subr.mxu0 0.0
    %4532 = vmatpush1.msra.mxu0 0.0
    %4533 = vmatprep.subr.mxu0 0.0
    %4534 = vmatpush1.msra.mxu0 0.0
    %4535 = vmatprep.subr.mxu0 0.0
    %4536 = vmatpush1.msra.mxu0 0.0
    %4537 = vmatprep.subr.mxu0 0.0
    %4538 = vmatpush1.msra.mxu0 0.0
    %4539 = vmatprep.subr.mxu0 0.0
    %4540 = vmatpush1.msra.mxu0 0.0
    %4541 = vmatprep.subr.mxu0 0.0
    %4542 = vmatpush1.msra.mxu0 0.0
    %4543 = vmatprep.mubr.f32.mxu0 0.0
    %v4544 = vand.u32 %v4469, 4294901760
    %v4545 = vsub.f32 %v4469, %v4544
    %v4546 = vand.u32 %v4545, 4294901760
    %v4547 = vsub.f32 %v4545, %v4546
    %v4548 = vand.u32 %v4547, 4294901760
    %4549 = vmatmul.mubr.f32.gmra.mrb[0].mxu0 %v4548
    %v4550 = vpop.f32.mrb[0].mxu0
    %v4551 = vadd.f32 %v4466, %v4550
    %v4552 = vpop.f32.mrb[0].mxu0
    %4553 = vdwg.mxu0
    %4554 = vmatprep.subr.mxu0 0.0
    %v4555 = vand.u32 %v4453, 4294901760
    %v4556 = vsub.f32 %v4453, %v4555
    %v4557 = vand.u32 %v4556, 4294901760
    %v4558 = vsub.f32 %v4556, %v4557
    %v4559 = vand.u32 %v4558, 4294901760
    %4560 = vmatpush1.msra.mxu0 %v4559
    %4561 = vmatprep.subr.mxu0 0.0
    %v4562 = vand.u32 %v4454, 4294901760
    %v4563 = vsub.f32 %v4454, %v4562
    %v4564 = vand.u32 %v4563, 4294901760
    %v4565 = vsub.f32 %v4563, %v4564
    %v4566 = vand.u32 %v4565, 4294901760
    %4567 = vmatpush1.msra.mxu0 %v4566
    %4568 = vmatprep.subr.mxu0 0.0
    %v4569 = vand.u32 %v4455, 4294901760
    %v4570 = vsub.f32 %v4455, %v4569
    %v4571 = vand.u32 %v4570, 4294901760
    %v4572 = vsub.f32 %v4570, %v4571
    %v4573 = vand.u32 %v4572, 4294901760
    %4574 = vmatpush1.msra.mxu0 %v4573
    %4575 = vmatprep.subr.mxu0 0.0
    %v4576 = vand.u32 %v4456, 4294901760
    %v4577 = vsub.f32 %v4456, %v4576
    %v4578 = vand.u32 %v4577, 4294901760
    %v4579 = vsub.f32 %v4577, %v4578
    %v4580 = vand.u32 %v4579, 4294901760
    %4581 = vmatpush1.msra.mxu0 %v4580
    %4582 = vmatprep.subr.mxu0 0.0
    %v4583 = vand.u32 %v4457, 4294901760
    %v4584 = vsub.f32 %v4457, %v4583
    %v4585 = vand.u32 %v4584, 4294901760
    %v4586 = vsub.f32 %v4584, %v4585
    %v4587 = vand.u32 %v4586, 4294901760
    %4588 = vmatpush1.msra.mxu0 %v4587
    %4589 = vmatprep.subr.mxu0 0.0
    %v4590 = vand.u32 %v4458, 4294901760
    %v4591 = vsub.f32 %v4458, %v4590
    %v4592 = vand.u32 %v4591, 4294901760
    %v4593 = vsub.f32 %v4591, %v4592
    %v4594 = vand.u32 %v4593, 4294901760
    %4595 = vmatpush1.msra.mxu0 %v4594
    %4596 = vmatprep.subr.mxu0 0.0
    %v4597 = vand.u32 %v4459, 4294901760
    %v4598 = vsub.f32 %v4459, %v4597
    %v4599 = vand.u32 %v4598, 4294901760
    %v4600 = vsub.f32 %v4598, %v4599
    %v4601 = vand.u32 %v4600, 4294901760
    %4602 = vmatpush1.msra.mxu0 %v4601
    %4603 = vmatprep.subr.mxu0 0.0
    %v4604 = vand.u32 %v4460, 4294901760
    %v4605 = vsub.f32 %v4460, %v4604
    %v4606 = vand.u32 %v4605, 4294901760
    %v4607 = vsub.f32 %v4605, %v4606
    %v4608 = vand.u32 %v4607, 4294901760
    %4609 = vmatpush1.msra.mxu0 %v4608
    %4610 = vmatprep.subr.mxu0 0.0
    %4611 = vmatpush1.msra.mxu0 0.0
    %4612 = vmatprep.subr.mxu0 0.0
    %4613 = vmatpush1.msra.mxu0 0.0
    %4614 = vmatprep.subr.mxu0 0.0
    %4615 = vmatpush1.msra.mxu0 0.0
    %4616 = vmatprep.subr.mxu0 0.0
    %4617 = vmatpush1.msra.mxu0 0.0
    %4618 = vmatprep.subr.mxu0 0.0
    %4619 = vmatpush1.msra.mxu0 0.0
    %4620 = vmatprep.subr.mxu0 0.0
    %4621 = vmatpush1.msra.mxu0 0.0
    %4622 = vmatprep.subr.mxu0 0.0
    %4623 = vmatpush1.msra.mxu0 0.0
    %4624 = vmatprep.subr.mxu0 0.0
    %4625 = vmatpush1.msra.mxu0 0.0
    %4626 = vmatprep.subr.mxu0 0.0
    %4627 = vmatpush1.msra.mxu0 0.0
    %4628 = vmatprep.subr.mxu0 0.0
    %4629 = vmatpush1.msra.mxu0 0.0
    %4630 = vmatprep.subr.mxu0 0.0
    %4631 = vmatpush1.msra.mxu0 0.0
    %4632 = vmatprep.subr.mxu0 0.0
    %4633 = vmatpush1.msra.mxu0 0.0
    %4634 = vmatprep.subr.mxu0 0.0
    %4635 = vmatpush1.msra.mxu0 0.0
    %4636 = vmatprep.subr.mxu0 0.0
    %4637 = vmatpush1.msra.mxu0 0.0
    %4638 = vmatprep.subr.mxu0 0.0
    %4639 = vmatpush1.msra.mxu0 0.0
    %4640 = vmatprep.subr.mxu0 0.0
    %4641 = vmatpush1.msra.mxu0 0.0
    %4642 = vmatprep.subr.mxu0 0.0
    %4643 = vmatpush1.msra.mxu0 0.0
    %4644 = vmatprep.subr.mxu0 0.0
    %4645 = vmatpush1.msra.mxu0 0.0
    %4646 = vmatprep.subr.mxu0 0.0
    %4647 = vmatpush1.msra.mxu0 0.0
    %4648 = vmatprep.subr.mxu0 0.0
    %4649 = vmatpush1.msra.mxu0 0.0
    %4650 = vmatprep.subr.mxu0 0.0
    %4651 = vmatpush1.msra.mxu0 0.0
    %4652 = vmatprep.subr.mxu0 0.0
    %4653 = vmatpush1.msra.mxu0 0.0
    %4654 = vmatprep.subr.mxu0 0.0
    %4655 = vmatpush1.msra.mxu0 0.0
    %4656 = vmatprep.subr.mxu0 0.0
    %4657 = vmatpush1.msra.mxu0 0.0
    %4658 = vmatprep.mubr.f32.mxu0 0.0
    %v4659 = vand.u32 %v4469, 4294901760
    %4660 = vmatmul.mubr.f32.gmra.mrb[0].mxu0 %v4659
    %v4661 = vpop.f32.mrb[0].mxu0
    %v4662 = vadd.f32 %v4551, %v4661
    %v4663 = vpop.f32.mrb[0].mxu0
    %4664 = vdwg.mxu0
    %4665 = vmatprep.subr.mxu0 0.0
    %v4666 = vand.u32 %v4453, 4294901760
    %v4667 = vsub.f32 %v4453, %v4666
    %4668 = vmatpush1.msra.mxu0 %v4667
    %4669 = vmatprep.subr.mxu0 0.0
    %v4670 = vand.u32 %v4454, 4294901760
    %v4671 = vsub.f32 %v4454, %v4670
    %4672 = vmatpush1.msra.mxu0 %v4671
    %4673 = vmatprep.subr.mxu0 0.0
    %v4674 = vand.u32 %v4455, 4294901760
    %v4675 = vsub.f32 %v4455, %v4674
    %4676 = vmatpush1.msra.mxu0 %v4675
    %4677 = vmatprep.subr.mxu0 0.0
    %v4678 = vand.u32 %v4456, 4294901760
    %v4679 = vsub.f32 %v4456, %v4678
    %4680 = vmatpush1.msra.mxu0 %v4679
    %4681 = vmatprep.subr.mxu0 0.0
    %v4682 = vand.u32 %v4457, 4294901760
    %v4683 = vsub.f32 %v4457, %v4682
    %4684 = vmatpush1.msra.mxu0 %v4683
    %4685 = vmatprep.subr.mxu0 0.0
    %v4686 = vand.u32 %v4458, 4294901760
    %v4687 = vsub.f32 %v4458, %v4686
    %4688 = vmatpush1.msra.mxu0 %v4687
    %4689 = vmatprep.subr.mxu0 0.0
    %v4690 = vand.u32 %v4459, 4294901760
    %v4691 = vsub.f32 %v4459, %v4690
    %4692 = vmatpush1.msra.mxu0 %v4691
    %4693 = vmatprep.subr.mxu0 0.0
    %v4694 = vand.u32 %v4460, 4294901760
    %v4695 = vsub.f32 %v4460, %v4694
    %4696 = vmatpush1.msra.mxu0 %v4695
    %4697 = vmatprep.subr.mxu0 0.0
    %4698 = vmatpush1.msra.mxu0 0.0
    %4699 = vmatprep.subr.mxu0 0.0
    %4700 = vmatpush1.msra.mxu0 0.0
    %4701 = vmatprep.subr.mxu0 0.0
    %4702 = vmatpush1.msra.mxu0 0.0
    %4703 = vmatprep.subr.mxu0 0.0
    %4704 = vmatpush1.msra.mxu0 0.0
    %4705 = vmatprep.subr.mxu0 0.0
    %4706 = vmatpush1.msra.mxu0 0.0
    %4707 = vmatprep.subr.mxu0 0.0
    %4708 = vmatpush1.msra.mxu0 0.0
    %4709 = vmatprep.subr.mxu0 0.0
    %4710 = vmatpush1.msra.mxu0 0.0
    %4711 = vmatprep.subr.mxu0 0.0
    %4712 = vmatpush1.msra.mxu0 0.0
    %4713 = vmatprep.subr.mxu0 0.0
    %4714 = vmatpush1.msra.mxu0 0.0
    %4715 = vmatprep.subr.mxu0 0.0
    %4716 = vmatpush1.msra.mxu0 0.0
    %4717 = vmatprep.subr.mxu0 0.0
    %4718 = vmatpush1.msra.mxu0 0.0
    %4719 = vmatprep.subr.mxu0 0.0
    %4720 = vmatpush1.msra.mxu0 0.0
    %4721 = vmatprep.subr.mxu0 0.0
    %4722 = vmatpush1.msra.mxu0 0.0
    %4723 = vmatprep.subr.mxu0 0.0
    %4724 = vmatpush1.msra.mxu0 0.0
    %4725 = vmatprep.subr.mxu0 0.0
    %4726 = vmatpush1.msra.mxu0 0.0
    %4727 = vmatprep.subr.mxu0 0.0
    %4728 = vmatpush1.msra.mxu0 0.0
    %4729 = vmatprep.subr.mxu0 0.0
    %4730 = vmatpush1.msra.mxu0 0.0
    %4731 = vmatprep.subr.mxu0 0.0
    %4732 = vmatpush1.msra.mxu0 0.0
    %4733 = vmatprep.subr.mxu0 0.0
    %4734 = vmatpush1.msra.mxu0 0.0
    %4735 = vmatprep.subr.mxu0 0.0
    %4736 = vmatpush1.msra.mxu0 0.0
    %4737 = vmatprep.subr.mxu0 0.0
    %4738 = vmatpush1.msra.mxu0 0.0
    %4739 = vmatprep.subr.mxu0 0.0
    %4740 = vmatpush1.msra.mxu0 0.0
    %4741 = vmatprep.subr.mxu0 0.0
    %4742 = vmatpush1.msra.mxu0 0.0
    %4743 = vmatprep.subr.mxu0 0.0
    %4744 = vmatpush1.msra.mxu0 0.0
    %4745 = vmatprep.mubr.f32.mxu0 0.0
    %v4746 = vand.u32 %v4469, 4294901760
    %v4747 = vsub.f32 %v4469, %v4746
    %4748 = vmatmul.mubr.f32.gmra.mrb[0].mxu0 %v4747
    %v4749 = vpop.f32.mrb[0].mxu0
    %v4750 = vadd.f32 %v4662, %v4749
    %v4751 = vpop.f32.mrb[0].mxu0
    %4752 = vdwg.mxu0
    %4753 = vmatprep.subr.mxu0 0.0
    %v4754 = vand.u32 %v4453, 4294901760
    %4755 = vmatpush1.msra.mxu0 %v4754
    %4756 = vmatprep.subr.mxu0 0.0
    %v4757 = vand.u32 %v4454, 4294901760
    %4758 = vmatpush1.msra.mxu0 %v4757
    %4759 = vmatprep.subr.mxu0 0.0
    %v4760 = vand.u32 %v4455, 4294901760
    %4761 = vmatpush1.msra.mxu0 %v4760
    %4762 = vmatprep.subr.mxu0 0.0
    %v4763 = vand.u32 %v4456, 4294901760
    %4764 = vmatpush1.msra.mxu0 %v4763
    %4765 = vmatprep.subr.mxu0 0.0
    %v4766 = vand.u32 %v4457, 4294901760
    %4767 = vmatpush1.msra.mxu0 %v4766
    %4768 = vmatprep.subr.mxu0 0.0
    %v4769 = vand.u32 %v4458, 4294901760
    %4770 = vmatpush1.msra.mxu0 %v4769
    %4771 = vmatprep.subr.mxu0 0.0
    %v4772 = vand.u32 %v4459, 4294901760
    %4773 = vmatpush1.msra.mxu0 %v4772
    %4774 = vmatprep.subr.mxu0 0.0
    %v4775 = vand.u32 %v4460, 4294901760
    %4776 = vmatpush1.msra.mxu0 %v4775
    %4777 = vmatprep.subr.mxu0 0.0
    %4778 = vmatpush1.msra.mxu0 0.0
    %4779 = vmatprep.subr.mxu0 0.0
    %4780 = vmatpush1.msra.mxu0 0.0
    %4781 = vmatprep.subr.mxu0 0.0
    %4782 = vmatpush1.msra.mxu0 0.0
    %4783 = vmatprep.subr.mxu0 0.0
    %4784 = vmatpush1.msra.mxu0 0.0
    %4785 = vmatprep.subr.mxu0 0.0
    %4786 = vmatpush1.msra.mxu0 0.0
    %4787 = vmatprep.subr.mxu0 0.0
    %4788 = vmatpush1.msra.mxu0 0.0
    %4789 = vmatprep.subr.mxu0 0.0
    %4790 = vmatpush1.msra.mxu0 0.0
    %4791 = vmatprep.subr.mxu0 0.0
    %4792 = vmatpush1.msra.mxu0 0.0
    %4793 = vmatprep.subr.mxu0 0.0
    %4794 = vmatpush1.msra.mxu0 0.0
    %4795 = vmatprep.subr.mxu0 0.0
    %4796 = vmatpush1.msra.mxu0 0.0
    %4797 = vmatprep.subr.mxu0 0.0
    %4798 = vmatpush1.msra.mxu0 0.0
    %4799 = vmatprep.subr.mxu0 0.0
    %4800 = vmatpush1.msra.mxu0 0.0
    %4801 = vmatprep.subr.mxu0 0.0
    %4802 = vmatpush1.msra.mxu0 0.0
    %4803 = vmatprep.subr.mxu0 0.0
    %4804 = vmatpush1.msra.mxu0 0.0
    %4805 = vmatprep.subr.mxu0 0.0
    %4806 = vmatpush1.msra.mxu0 0.0
    %4807 = vmatprep.subr.mxu0 0.0
    %4808 = vmatpush1.msra.mxu0 0.0
    %4809 = vmatprep.subr.mxu0 0.0
    %4810 = vmatpush1.msra.mxu0 0.0
    %4811 = vmatprep.subr.mxu0 0.0
    %4812 = vmatpush1.msra.mxu0 0.0
    %4813 = vmatprep.subr.mxu0 0.0
    %4814 = vmatpush1.msra.mxu0 0.0
    %4815 = vmatprep.subr.mxu0 0.0
    %4816 = vmatpush1.msra.mxu0 0.0
    %4817 = vmatprep.subr.mxu0 0.0
    %4818 = vmatpush1.msra.mxu0 0.0
    %4819 = vmatprep.subr.mxu0 0.0
    %4820 = vmatpush1.msra.mxu0 0.0
    %4821 = vmatprep.subr.mxu0 0.0
    %4822 = vmatpush1.msra.mxu0 0.0
    %4823 = vmatprep.subr.mxu0 0.0
    %4824 = vmatpush1.msra.mxu0 0.0
    %4825 = vmatprep.mubr.f32.mxu0 0.0
    %v4826 = vand.u32 %v4469, 4294901760
    %v4827 = vsub.f32 %v4469, %v4826
    %v4828 = vand.u32 %v4827, 4294901760
    %4829 = vmatmul.mubr.f32.gmra.mrb[0].mxu0 %v4828
    %v4830 = vpop.f32.mrb[0].mxu0
    %v4831 = vadd.f32 %v4750, %v4830
    %v4832 = vpop.f32.mrb[0].mxu0
    %4833 = vdwg.mxu0
    %4834 = vmatprep.subr.mxu0 0.0
    %v4835 = vand.u32 %v4453, 4294901760
    %v4836 = vsub.f32 %v4453, %v4835
    %v4837 = vand.u32 %v4836, 4294901760
    %4838 = vmatpush1.msra.mxu0 %v4837
    %4839 = vmatprep.subr.mxu0 0.0
    %v4840 = vand.u32 %v4454, 4294901760
    %v4841 = vsub.f32 %v4454, %v4840
    %v4842 = vand.u32 %v4841, 4294901760
    %4843 = vmatpush1.msra.mxu0 %v4842
    %4844 = vmatprep.subr.mxu0 0.0
    %v4845 = vand.u32 %v4455, 4294901760
    %v4846 = vsub.f32 %v4455, %v4845
    %v4847 = vand.u32 %v4846, 4294901760
    %4848 = vmatpush1.msra.mxu0 %v4847
    %4849 = vmatprep.subr.mxu0 0.0
    %v4850 = vand.u32 %v4456, 4294901760
    %v4851 = vsub.f32 %v4456, %v4850
    %v4852 = vand.u32 %v4851, 4294901760
    %4853 = vmatpush1.msra.mxu0 %v4852
    %4854 = vmatprep.subr.mxu0 0.0
    %v4855 = vand.u32 %v4457, 4294901760
    %v4856 = vsub.f32 %v4457, %v4855
    %v4857 = vand.u32 %v4856, 4294901760
    %4858 = vmatpush1.msra.mxu0 %v4857
    %4859 = vmatprep.subr.mxu0 0.0
    %v4860 = vand.u32 %v4458, 4294901760
    %v4861 = vsub.f32 %v4458, %v4860
    %v4862 = vand.u32 %v4861, 4294901760
    %4863 = vmatpush1.msra.mxu0 %v4862
    %4864 = vmatprep.subr.mxu0 0.0
    %v4865 = vand.u32 %v4459, 4294901760
    %v4866 = vsub.f32 %v4459, %v4865
    %v4867 = vand.u32 %v4866, 4294901760
    %4868 = vmatpush1.msra.mxu0 %v4867
    %4869 = vmatprep.subr.mxu0 0.0
    %v4870 = vand.u32 %v4460, 4294901760
    %v4871 = vsub.f32 %v4460, %v4870
    %v4872 = vand.u32 %v4871, 4294901760
    %4873 = vmatpush1.msra.mxu0 %v4872
    %4874 = vmatprep.subr.mxu0 0.0
    %4875 = vmatpush1.msra.mxu0 0.0
    %4876 = vmatprep.subr.mxu0 0.0
    %4877 = vmatpush1.msra.mxu0 0.0
    %4878 = vmatprep.subr.mxu0 0.0
    %4879 = vmatpush1.msra.mxu0 0.0
    %4880 = vmatprep.subr.mxu0 0.0
    %4881 = vmatpush1.msra.mxu0 0.0
    %4882 = vmatprep.subr.mxu0 0.0
    %4883 = vmatpush1.msra.mxu0 0.0
    %4884 = vmatprep.subr.mxu0 0.0
    %4885 = vmatpush1.msra.mxu0 0.0
    %4886 = vmatprep.subr.mxu0 0.0
    %4887 = vmatpush1.msra.mxu0 0.0
    %4888 = vmatprep.subr.mxu0 0.0
    %4889 = vmatpush1.msra.mxu0 0.0
    %4890 = vmatprep.subr.mxu0 0.0
    %4891 = vmatpush1.msra.mxu0 0.0
    %4892 = vmatprep.subr.mxu0 0.0
    %4893 = vmatpush1.msra.mxu0 0.0
    %4894 = vmatprep.subr.mxu0 0.0
    %4895 = vmatpush1.msra.mxu0 0.0
    %4896 = vmatprep.subr.mxu0 0.0
    %4897 = vmatpush1.msra.mxu0 0.0
    %4898 = vmatprep.subr.mxu0 0.0
    %4899 = vmatpush1.msra.mxu0 0.0
    %4900 = vmatprep.subr.mxu0 0.0
    %4901 = vmatpush1.msra.mxu0 0.0
    %4902 = vmatprep.subr.mxu0 0.0
    %4903 = vmatpush1.msra.mxu0 0.0
    %4904 = vmatprep.subr.mxu0 0.0
    %4905 = vmatpush1.msra.mxu0 0.0
    %4906 = vmatprep.subr.mxu0 0.0
    %4907 = vmatpush1.msra.mxu0 0.0
    %4908 = vmatprep.subr.mxu0 0.0
    %4909 = vmatpush1.msra.mxu0 0.0
    %4910 = vmatprep.subr.mxu0 0.0
    %4911 = vmatpush1.msra.mxu0 0.0
    %4912 = vmatprep.subr.mxu0 0.0
    %4913 = vmatpush1.msra.mxu0 0.0
    %4914 = vmatprep.subr.mxu0 0.0
    %4915 = vmatpush1.msra.mxu0 0.0
    %4916 = vmatprep.subr.mxu0 0.0
    %4917 = vmatpush1.msra.mxu0 0.0
    %4918 = vmatprep.subr.mxu0 0.0
    %4919 = vmatpush1.msra.mxu0 0.0
    %4920 = vmatprep.subr.mxu0 0.0
    %4921 = vmatpush1.msra.mxu0 0.0
    %4922 = vmatprep.mubr.f32.mxu0 0.0
    %v4923 = vand.u32 %v4469, 4294901760
    %4924 = vmatmul.mubr.f32.gmra.mrb[0].mxu0 %v4923
    %v4925 = vpop.f32.mrb[0].mxu0
    %v4926 = vadd.f32 %v4831, %v4925
    %v4927 = vpop.f32.mrb[0].mxu0
    %4928 = vdwg.mxu0
    %4929 = vmatprep.subr.mxu0 0.0
    %v4930 = vand.u32 %v4453, 4294901760
    %4931 = vmatpush1.msra.mxu0 %v4930
    %4932 = vmatprep.subr.mxu0 0.0
    %v4933 = vand.u32 %v4454, 4294901760
    %4934 = vmatpush1.msra.mxu0 %v4933
    %4935 = vmatprep.subr.mxu0 0.0
    %v4936 = vand.u32 %v4455, 4294901760
    %4937 = vmatpush1.msra.mxu0 %v4936
    %4938 = vmatprep.subr.mxu0 0.0
    %v4939 = vand.u32 %v4456, 4294901760
    %4940 = vmatpush1.msra.mxu0 %v4939
    %4941 = vmatprep.subr.mxu0 0.0
    %v4942 = vand.u32 %v4457, 4294901760
    %4943 = vmatpush1.msra.mxu0 %v4942
    %4944 = vmatprep.subr.mxu0 0.0
    %v4945 = vand.u32 %v4458, 4294901760
    %4946 = vmatpush1.msra.mxu0 %v4945
    %4947 = vmatprep.subr.mxu0 0.0
    %v4948 = vand.u32 %v4459, 4294901760
    %4949 = vmatpush1.msra.mxu0 %v4948
    %4950 = vmatprep.subr.mxu0 0.0
    %v4951 = vand.u32 %v4460, 4294901760
    %4952 = vmatpush1.msra.mxu0 %v4951
    %4953 = vmatprep.subr.mxu0 0.0
    %4954 = vmatpush1.msra.mxu0 0.0
    %4955 = vmatprep.subr.mxu0 0.0
    %4956 = vmatpush1.msra.mxu0 0.0
    %4957 = vmatprep.subr.mxu0 0.0
    %4958 = vmatpush1.msra.mxu0 0.0
    %4959 = vmatprep.subr.mxu0 0.0
    %4960 = vmatpush1.msra.mxu0 0.0
    %4961 = vmatprep.subr.mxu0 0.0
    %4962 = vmatpush1.msra.mxu0 0.0
    %4963 = vmatprep.subr.mxu0 0.0
    %4964 = vmatpush1.msra.mxu0 0.0
    %4965 = vmatprep.subr.mxu0 0.0
    %4966 = vmatpush1.msra.mxu0 0.0
    %4967 = vmatprep.subr.mxu0 0.0
    %4968 = vmatpush1.msra.mxu0 0.0
    %4969 = vmatprep.subr.mxu0 0.0
    %4970 = vmatpush1.msra.mxu0 0.0
    %4971 = vmatprep.subr.mxu0 0.0
    %4972 = vmatpush1.msra.mxu0 0.0
    %4973 = vmatprep.subr.mxu0 0.0
    %4974 = vmatpush1.msra.mxu0 0.0
    %4975 = vmatprep.subr.mxu0 0.0
    %4976 = vmatpush1.msra.mxu0 0.0
    %4977 = vmatprep.subr.mxu0 0.0
    %4978 = vmatpush1.msra.mxu0 0.0
    %4979 = vmatprep.subr.mxu0 0.0
    %4980 = vmatpush1.msra.mxu0 0.0
    %4981 = vmatprep.subr.mxu0 0.0
    %4982 = vmatpush1.msra.mxu0 0.0
    %4983 = vmatprep.subr.mxu0 0.0
    %4984 = vmatpush1.msra.mxu0 0.0
    %4985 = vmatprep.subr.mxu0 0.0
    %4986 = vmatpush1.msra.mxu0 0.0
    %4987 = vmatprep.subr.mxu0 0.0
    %4988 = vmatpush1.msra.mxu0 0.0
    %4989 = vmatprep.subr.mxu0 0.0
    %4990 = vmatpush1.msra.mxu0 0.0
    %4991 = vmatprep.subr.mxu0 0.0
    %4992 = vmatpush1.msra.mxu0 0.0
    %4993 = vmatprep.subr.mxu0 0.0
    %4994 = vmatpush1.msra.mxu0 0.0
    %4995 = vmatprep.subr.mxu0 0.0
    %4996 = vmatpush1.msra.mxu0 0.0
    %4997 = vmatprep.subr.mxu0 0.0
    %4998 = vmatpush1.msra.mxu0 0.0
    %4999 = vmatprep.subr.mxu0 0.0
    %5000 = vmatpush1.msra.mxu0 0.0
    %5001 = vmatprep.mubr.f32.mxu0 0.0
    %v5002 = vand.u32 %v4469, 4294901760
    %5003 = vmatmul.mubr.f32.gmra.mrb[0].mxu0 %v5002
    %v5004 = vpop.f32.mrb[0].mxu0
    %v5005 = vadd.f32 %v4926, %v5004
    %v5006 = vpop.f32.mrb[0].mxu0
    %5007 = vdwg.mxu0
    %vm5008 = vcmask 74752
    %5009 = vst.msk [vmem:[#allocation6] sm:$0x3] %vm5008, %v5005
    // Predicated region
    $region38: #{cnn_forward.1} parent=1 // pred_check
      _
    $region39: #{cnn_forward.1} parent=1 // pred_check_branch
      %5011 = sbr.rel (0) target = $region41
    $region40: #{cnn_forward.1} parent=1 // pred_region
      %s5013 = ssub.s32 32, 32
      %5014 = vsyncadd [#allocation7], %s5013
      %s5016 = sshll.u32 [#allocation6], 4
      %s5017 = int_to_ptr.vmem [resolvable:$true] %s5016
      %5019 = dma.vmem_to_hbm [thread:$0]  %s5017, 32, %s9, [#allocation7]
    $region41: #{cnn_forward.1} parent=1 // pred_fallthru
      _
    // Predicated region
    $region42: #{cnn_forward.1} parent=1 // pred_check
      _
    $region43: #{cnn_forward.1} parent=1 // pred_check_branch
      %5021 = sbr.rel (0) target = $region45
    $region44: #{cnn_forward.1} parent=1 // pred_region
      %5022 = dma.done [#allocation7], 32
    $region45: #{cnn_forward.1} parent=1 // pred_fallthru
      _
    %5023 = vsyncpa [#allocation7], 1

</llo_original>
